<compile_context>
chip_gen: v5e
topology: v5e:2x2
jax: 0.10.0
libtpu: 0.0.40
codegen_flags: <defaults>
</compile_context>

<pallas_src>
import functools

import jax
import jax.numpy as jnp
from jax.experimental import pallas as pl
from jax.experimental.pallas import tpu as pltpu


def _round_up(x, m):
    return ((x + m - 1) // m) * m


# ----------------------------------------------------------------------------
# Fused DERNet kernel: conv1 -> pool(+pad) -> conv2 -> GAP -> fc/aux_fc.
# One grid step == one convnet (whole batch); activations never leave VMEM.
# ----------------------------------------------------------------------------
def _dernet_kernel(xcols_ref, pm_ref, w1_ref, b1_ref, w2_ref, b2_ref,
                   fcw_ref, fcb_ref, auxw_ref, auxb_ref,
                   feat_ref, logits_ref, aux_ref, cols2_scr,
                   *, N, H, W, C1, out_dim, W2P, FEAT_PAD):
    H2, W2 = H // 2, W // 2
    c = pl.program_id(0)

    # ---- conv1: ONE MXU dot, taps folded into K = 9*C (im2col from wrapper) --
    y1 = jnp.dot(xcols_ref[...], w1_ref[0], preferred_element_type=jnp.float32)
    y1 = jnp.maximum(y1 + b1_ref[0], 0.0)                 # (N*H*W, C1) f32
    y1 = y1.astype(jnp.bfloat16)

    # ---- 2x2 avg pool + conv2 zero-pad: ONE MXU dot with a constant block-
    # diagonal (over batch) pooling matrix that already contains the zero
    # border rows -> no scratch zeroing, no masked interior stores, no loop.
    pooled = jnp.dot(pm_ref[...], y1, preferred_element_type=jnp.float32)
    pooled = pooled.astype(jnp.bfloat16).reshape(N, H2 + 2, W2P, C1)

    # ---- conv2: build the (N*H2*W2, 9*C1) im2col in VMEM (tap-major columns,
    # matching w2's row order), then ONE MXU dot with K = 9*C1.
    for t, (dh, dw) in enumerate([(a, b) for a in range(3) for b in range(3)]):
        v = pooled[:, dh:dh + H2, dw:dw + W2, :].reshape(N * H2 * W2, C1)
        cols2_scr[:, t * C1:(t + 1) * C1] = v
    y2 = jnp.dot(cols2_scr[...], w2_ref[0], preferred_element_type=jnp.float32)
    y2 = jnp.maximum(y2 + b2_ref[0], 0.0)                 # (N*H2*W2, out_dim)

    # ---- global average pool fused on the conv2 output (no HBM round trip) --
    feats = jnp.mean(y2.reshape(N, H2 * W2, out_dim), axis=1)   # (N, out_dim)

    # ---- features output: lane-dense (padded to 128) per-convnet block; the
    # wrapper slices away the pad, which also yields torch.cat(dim=1) layout.
    feat_ref[:, :out_dim] = feats
    if FEAT_PAD > out_dim:
        feat_ref[:, out_dim:] = jnp.zeros((N, FEAT_PAD - out_dim), jnp.float32)

    # ---- fc head: accumulate this convnet's contribution to the logits in the
    # grid-resident output block (index map constant across the convnet axis).
    contrib = jnp.dot(feats, fcw_ref[0], preferred_element_type=jnp.float32)

    @pl.when(c == 0)
    def _():
        logits_ref[...] = contrib + fcb_ref[...]

    @pl.when(c != 0)
    def _():
        logits_ref[...] += contrib

    # ---- aux head: uses the NEWEST convnet's features; overwritten each step
    # so the final grid step (newest convnet) wins.
    aux_ref[...] = (jnp.dot(feats, auxw_ref[...],
                            preferred_element_type=jnp.float32) + auxb_ref[...])


# ----------------------------------------------------------------------------
# Constant pool(+pad) matrix, block-diagonal over the batch:
#   (N*(H2+2)*W2P, N*H*W) mapping conv1 output rows (n,h,w) to the zero-padded
#   2x2-average-pooled map (n, i, j) laid out with a sublane-friendly padded
#   width W2P (>= W2+2, multiple of 8).
# ----------------------------------------------------------------------------
def make_pool_pad_matrix(N, H, W, W2P):
    H2, W2 = H // 2, W // 2
    HP = H2 + 2
    r = jnp.arange(N * HP * W2P)
    rn = r // (HP * W2P)
    ri = (r // W2P) % HP
    rj = r % W2P
    col = jnp.arange(N * H * W)
    cn = col // (H * W)
    ch = (col // W) % H
    cw = col % W
    valid = (ri >= 1) & (ri <= H2) & (rj >= 1) & (rj <= W2)
    hit = ((cn[None, :] == rn[:, None])
           & ((ch[None, :] // 2) == (ri[:, None] - 1))
           & ((cw[None, :] // 2) == (rj[:, None] - 1))
           & valid[:, None])
    return hit.astype(jnp.float32) * 0.25


# ----------------------------------------------------------------------------
# Wrapper
# ----------------------------------------------------------------------------
def dernet_forward(x_nchw, convnet_params_list, fc_w, fc_b, aux_w, aux_b, out_dim):
    n_nets = len(convnet_params_list)
    N, C, H, W = x_nchw.shape
    C1 = convnet_params_list[0]['w1'].shape[1]
    H2, W2 = H // 2, W // 2
    W2P = max(_round_up(W2 + 2, 8), W2 + 2)

    nb_classes = fc_w.shape[1]
    aux_classes = aux_w.shape[1]
    NB_PAD = _round_up(nb_classes, 128)
    AUX_PAD = _round_up(aux_classes, 128)
    FEAT_PAD = _round_up(out_dim, 128)

    # Shared conv1 im2col hoisted out of the per-convnet loop (the input is the
    # same for every convnet): (N*H*W, 9*C), tap-major columns, bf16 for MXU.
    x_nhwc = jnp.transpose(x_nchw, (0, 2, 3, 1)).astype(jnp.float32)
    xp = jnp.pad(x_nhwc, ((0, 0), (1, 1), (1, 1), (0, 0)))
    x_cols = jnp.concatenate(
        [xp[:, dh:dh + H, dw:dw + W, :] for dh in range(3) for dw in range(3)],
        axis=-1).reshape(N * H * W, 9 * C).astype(jnp.bfloat16)

    # Constant pool(+pad) matrix (values are 0 / 0.25 -> exact in bf16).
    pm = make_pool_pad_matrix(N, H, W, W2P).astype(jnp.bfloat16)

    # Per-convnet weights stacked so one fused kernel (gridded over the convnet
    # axis) consumes them; rows are tap-major ([dh][dw][c]).
    w1_all = jnp.stack([p['w1'].astype(jnp.bfloat16) for p in convnet_params_list])
    b1_all = jnp.stack([p['b1'].reshape(1, C1).astype(jnp.float32)
                        for p in convnet_params_list])
    w2_all = jnp.stack([p['w2'].astype(jnp.bfloat16) for p in convnet_params_list])
    b2_all = jnp.stack([p['b2'].reshape(1, out_dim).astype(jnp.float32)
                        for p in convnet_params_list])

    # fc weight split per convnet block (logits accumulate over the grid axis);
    # class dims padded to 128 lanes, sliced back outside.
    fc_w_r = jnp.pad(fc_w.reshape(n_nets, out_dim, nb_classes).astype(jnp.float32),
                     ((0, 0), (0, 0), (0, NB_PAD - nb_classes)))
    fc_b_p = jnp.pad(fc_b.reshape(1, nb_classes).astype(jnp.float32),
                     ((0, 0), (0, NB_PAD - nb_classes)))
    aux_w_p = jnp.pad(aux_w.astype(jnp.float32),
                      ((0, 0), (0, AUX_PAD - aux_classes)))
    aux_b_p = jnp.pad(aux_b.reshape(1, aux_classes).astype(jnp.float32),
                      ((0, 0), (0, AUX_PAD - aux_classes)))

    feat_pad, logits_pad, aux_pad = pl.pallas_call(
        functools.partial(_dernet_kernel, N=N, H=H, W=W, C1=C1, out_dim=out_dim,
                          W2P=W2P, FEAT_PAD=FEAT_PAD),
        out_shape=(jax.ShapeDtypeStruct((N, n_nets * FEAT_PAD), jnp.float32),
                   jax.ShapeDtypeStruct((N, NB_PAD), jnp.float32),
                   jax.ShapeDtypeStruct((N, AUX_PAD), jnp.float32)),
        grid=(n_nets,),
        in_specs=[
            pl.BlockSpec((N * H * W, 9 * C), lambda c: (0, 0)),          # shared im2col
            pl.BlockSpec((N * (H2 + 2) * W2P, N * H * W), lambda c: (0, 0)),  # pool matrix
            pl.BlockSpec((1, 9 * C, C1), lambda c: (c, 0, 0)),           # per-convnet w1
            pl.BlockSpec((1, 1, C1), lambda c: (c, 0, 0)),               # per-convnet b1
            pl.BlockSpec((1, 9 * C1, out_dim), lambda c: (c, 0, 0)),     # per-convnet w2
            pl.BlockSpec((1, 1, out_dim), lambda c: (c, 0, 0)),          # per-convnet b2
            pl.BlockSpec((1, out_dim, NB_PAD), lambda c: (c, 0, 0)),     # fc_w block c
            pl.BlockSpec((1, NB_PAD), lambda c: (0, 0)),                 # fc_b
            pl.BlockSpec((out_dim, AUX_PAD), lambda c: (0, 0)),          # aux_w
            pl.BlockSpec((1, AUX_PAD), lambda c: (0, 0)),                # aux_b
        ],
        out_specs=(pl.BlockSpec((N, FEAT_PAD), lambda c: (0, c)),        # features (per-c block)
                   pl.BlockSpec((N, NB_PAD), lambda c: (0, 0)),          # logits (grid-resident)
                   pl.BlockSpec((N, AUX_PAD), lambda c: (0, 0))),        # aux (last convnet)
        scratch_shapes=[pltpu.VMEM((N * H2 * W2, 9 * C1), jnp.bfloat16)],
        compiler_params=pltpu.CompilerParams(
            # "arbitrary": the fc logits accumulate across the convnet axis.
            dimension_semantics=("arbitrary",),
            vmem_limit_bytes=32 * 1024 * 1024),
    )(x_cols, pm, w1_all, b1_all, w2_all, b2_all,
      fc_w_r, fc_b_p, aux_w_p, aux_b_p)

    # Slice the lane padding away; features come out already in concat(dim=1)
    # (convnet-major) order.
    features = feat_pad.reshape(N, n_nets, FEAT_PAD)[:, :, :out_dim]
    features = features.reshape(N, n_nets * out_dim)
    logits = logits_pad[:, :nb_classes]
    aux_logits = aux_pad[:, :aux_classes]
    return {'logits': logits, 'aux_logits': aux_logits, 'features': features}


# ----------------------------------------------------------------------------
# Pure-JAX f32 reference for correctness checking
# ----------------------------------------------------------------------------
def im2col_3x3(x_nhwc):
    N, H, W, C = x_nhwc.shape
    xp = jnp.pad(x_nhwc, ((0, 0), (1, 1), (1, 1), (0, 0)))
    patches = []
    for dh in range(3):
        for dw in range(3):
            patches.append(xp[:, dh:dh + H, dw:dw + W, :])
    return jnp.concatenate(patches, axis=-1)


def dernet_forward_ref(x_nchw, convnet_params_list, fc_w, fc_b, aux_w, aux_b, out_dim):
    def conv_ref(x_nhwc, w, b):
        N, H, W, C = x_nhwc.shape
        p = im2col_3x3(x_nhwc).reshape(N * H * W, 9 * C)
        y = jnp.maximum(p @ w + b, 0.0)
        return y.reshape(N, H, W, w.shape[1])

    def backbone(x_nchw, pr):
        x = jnp.transpose(x_nchw, (0, 2, 3, 1))
        x = conv_ref(x, pr['w1'], pr['b1'])
        N, H, W, C = x.shape
        x = x.reshape(N, H // 2, 2, W // 2, 2, C).mean(axis=(2, 4))
        x = conv_ref(x, pr['w2'], pr['b2'])
        return x.mean(axis=(1, 2))

    features = jnp.concatenate([backbone(x_nchw, p) for p in convnet_params_list], axis=1)
    logits = features @ fc_w + fc_b
    aux_logits = features[:, -out_dim:] @ aux_w + aux_b
    return {'logits': logits, 'aux_logits': aux_logits, 'features': features}


# ----------------------------------------------------------------------------
# Main
# ----------------------------------------------------------------------------
if __name__ == "__main__":
    key = jax.random.PRNGKey(0)

    # Small, DERNet-consistent shapes.
    N_BATCH, C_IN, HW = 2, 4, 16          # input x: (2, 4, 16, 16), NCHW
    C1 = 32                               # first conv width
    OUT_DIM = 32                          # backbone out_dim (per convnet)
    N_CONVNETS = 2                        # two incremental tasks so far
    TASK_SIZES = [5, 5]                   # -> nb_classes = 10
    NB_CLASSES = sum(TASK_SIZES)
    AUX_CLASSES = TASK_SIZES[-1] + 1      # new_task_size + 1
    FEATURE_DIM = OUT_DIM * N_CONVNETS

    keys = jax.random.split(key, 16)
    kit = iter(keys)

    def rnd(shape, k):
        return 0.05 * jax.random.normal(k, shape, dtype=jnp.float32)

    convnet_params_list = []
    for _ in range(N_CONVNETS):
        convnet_params_list.append({
            'w1': rnd((9 * C_IN, C1), next(kit)),
            'b1': rnd((C1,), next(kit)),
            'w2': rnd((9 * C1, OUT_DIM), next(kit)),
            'b2': rnd((OUT_DIM,), next(kit)),
        })

    # SimpleLinear weights stored as (in_dim, out_dim) for X @ W.
    fc_w = rnd((FEATURE_DIM, NB_CLASSES), next(kit))
    fc_b = rnd((NB_CLASSES,), next(kit))
    aux_w = rnd((OUT_DIM, AUX_CLASSES), next(kit))
    aux_b = rnd((AUX_CLASSES,), next(kit))

    x = jax.random.normal(next(kit), (N_BATCH, C_IN, HW, HW), dtype=jnp.float32)

    out = dernet_forward(x, convnet_params_list, fc_w, fc_b, aux_w, aux_b, OUT_DIM)
    out = jax.tree_util.tree_map(jax.block_until_ready, out)

    ref = dernet_forward_ref(x, convnet_params_list, fc_w, fc_b, aux_w, aux_b, OUT_DIM)

    assert out['features'].shape == (N_BATCH, FEATURE_DIM)
    assert out['logits'].shape == (N_BATCH, NB_CLASSES)
    assert out['aux_logits'].shape == (N_BATCH, AUX_CLASSES)
    # Tolerance loosened vs the f32 reference because the backbone MXU dots use
    # bf16 operands (f32 accumulation).
    for k in ('features', 'logits', 'aux_logits'):
        err = float(jnp.max(jnp.abs(out[k] - ref[k])))
        assert err < 2e-2, f"{k} mismatch: {err}"

    print("KERNEL_OK")
</pallas_src>

<mosaic_0001>
module attributes {stable_mosaic.version = 11 : i64} {
  func.func @_dernet_kernel(%arg0: i32, %arg1: memref<512x36xbf16, #tpu.memory_space<vmem>>, %arg2: memref<320x512xbf16, #tpu.memory_space<vmem>>, %arg3: memref<1x36x32xbf16, #tpu.memory_space<vmem>>, %arg4: memref<1x1x32xf32, #tpu.memory_space<vmem>>, %arg5: memref<1x288x32xbf16, #tpu.memory_space<vmem>>, %arg6: memref<1x1x32xf32, #tpu.memory_space<vmem>>, %arg7: memref<1x32x128xf32, #tpu.memory_space<vmem>>, %arg8: memref<1x128xf32, #tpu.memory_space<vmem>>, %arg9: memref<32x128xf32, #tpu.memory_space<vmem>>, %arg10: memref<1x128xf32, #tpu.memory_space<vmem>>, %arg11: memref<2x128xf32, #tpu.memory_space<vmem>>, %arg12: memref<2x128xf32, #tpu.memory_space<vmem>>, %arg13: memref<2x128xf32, #tpu.memory_space<vmem>>, %arg14: memref<128x288xbf16, #tpu.memory_space<vmem>>) attributes {dimension_semantics = [#tpu.dimension_semantics<arbitrary>], iteration_bounds = array<i64: 2>, scalar_prefetch = 0 : i64, scratch_operands = 1 : i64, tpu.core_type = #tpu.core_type<tc>, window_params = [{pipeline_mode = #tpu.pipeline_mode<synchronous>, transform_indices = @transform_0, window_bounds = array<i64: 512, 36>}, {pipeline_mode = #tpu.pipeline_mode<synchronous>, transform_indices = @transform_1, window_bounds = array<i64: 320, 512>}, {transform_indices = @transform_2, window_bounds = array<i64: 1, 36, 32>}, {transform_indices = @transform_3, window_bounds = array<i64: 1, 1, 32>}, {transform_indices = @transform_4, window_bounds = array<i64: 1, 288, 32>}, {transform_indices = @transform_5, window_bounds = array<i64: 1, 1, 32>}, {transform_indices = @transform_6, window_bounds = array<i64: 1, 32, 128>}, {pipeline_mode = #tpu.pipeline_mode<synchronous>, transform_indices = @transform_7, window_bounds = array<i64: 1, 128>}, {pipeline_mode = #tpu.pipeline_mode<synchronous>, transform_indices = @transform_8, window_bounds = array<i64: 32, 128>}, {pipeline_mode = #tpu.pipeline_mode<synchronous>, transform_indices = @transform_9, window_bounds = array<i64: 1, 128>}, {transform_indices = @transform_10, window_bounds = array<i64: 2, 128>}, {pipeline_mode = #tpu.pipeline_mode<synchronous>, transform_indices = @transform_11, window_bounds = array<i64: 2, 128>}, {pipeline_mode = #tpu.pipeline_mode<synchronous>, transform_indices = @transform_12, window_bounds = array<i64: 2, 128>}]} {
    %c0 = arith.constant 0 : index
    %c0_0 = arith.constant 0 : index
    %0 = vector.load %arg1[%c0, %c0_0] : memref<512x36xbf16, #tpu.memory_space<vmem>>, vector<512x36xbf16>
    %c0_1 = arith.constant 0 : index
    %c0_2 = arith.constant 0 : index
    %c0_3 = arith.constant 0 : index
    %1 = vector.load %arg3[%c0_1, %c0_2, %c0_3] : memref<1x36x32xbf16, #tpu.memory_space<vmem>>, vector<1x36x32xbf16>
    %2 = vector.shape_cast %1 : vector<1x36x32xbf16> to vector<36x32xbf16>
    %cst = arith.constant dense<0.000000e+00> : vector<512x32xf32>
    %3 = tpu.matmul %0, %2, %cst {dimension_numbers = #tpu.dot_dimension_numbers<[1], [0], [0], [1], [0, 0, 1, 1], [], []>} : vector<512x36xbf16>, vector<36x32xbf16>, vector<512x32xf32> -> vector<512x32xf32>
    %c0_4 = arith.constant 0 : index
    %c0_5 = arith.constant 0 : index
    %c0_6 = arith.constant 0 : index
    %4 = vector.load %arg4[%c0_4, %c0_5, %c0_6] : memref<1x1x32xf32, #tpu.memory_space<vmem>>, vector<1x1x32xf32>
    %5 = vector.shape_cast %4 : vector<1x1x32xf32> to vector<1x32xf32>
    %6 = vector.broadcast %5 : vector<1x32xf32> to vector<512x32xf32>
    %7 = arith.addf %3, %6 : vector<512x32xf32>
    %cst_7 = arith.constant 0.000000e+00 : f32
    %8 = vector.broadcast %cst_7 : f32 to vector<512x32xf32>
    %9 = arith.maximumf %7, %8 : vector<512x32xf32>
    %10 = arith.truncf %9 : vector<512x32xf32> to vector<512x32xbf16>
    %c0_8 = arith.constant 0 : index
    %c0_9 = arith.constant 0 : index
    %11 = vector.load %arg2[%c0_8, %c0_9] : memref<320x512xbf16, #tpu.memory_space<vmem>>, vector<320x512xbf16>
    %cst_10 = arith.constant dense<0.000000e+00> : vector<320x32xf32>
    %12 = tpu.matmul %11, %10, %cst_10 {dimension_numbers = #tpu.dot_dimension_numbers<[1], [0], [0], [1], [0, 0, 1, 1], [], []>} : vector<320x512xbf16>, vector<512x32xbf16>, vector<320x32xf32> -> vector<320x32xf32>
    %13 = arith.truncf %12 : vector<320x32xf32> to vector<320x32xbf16>
    %14 = vector.shape_cast %13 : vector<320x32xbf16> to vector<2x10x16x32xbf16>
    %15 = vector.extract_strided_slice %14 {offsets = [0, 0, 0, 0], sizes = [2, 8, 8, 32], strides = [1, 1, 1, 1]} : vector<2x10x16x32xbf16> to vector<2x8x8x32xbf16>
    %16 = vector.shape_cast %15 : vector<2x8x8x32xbf16> to vector<128x32xbf16>
    %c0_11 = arith.constant 0 : index
    %c0_12 = arith.constant 0 : index
    %17 = vector.load %arg14[%c0_11, %c0_12] : memref<128x288xbf16, #tpu.memory_space<vmem>>, vector<128x32xbf16>
    tpu.vector_store %arg14[%c0_11, %c0_12], %16 {strides = array<i32>} : memref<128x288xbf16, #tpu.memory_space<vmem>>, vector<128x32xbf16>,
    %18 = vector.extract_strided_slice %14 {offsets = [0, 0, 1, 0], sizes = [2, 8, 8, 32], strides = [1, 1, 1, 1]} : vector<2x10x16x32xbf16> to vector<2x8x8x32xbf16>
    %19 = vector.shape_cast %18 : vector<2x8x8x32xbf16> to vector<128x32xbf16>
    %c0_13 = arith.constant 0 : index
    %c32 = arith.constant 32 : index
    %20 = vector.load %arg14[%c0_13, %c32] : memref<128x288xbf16, #tpu.memory_space<vmem>>, vector<128x32xbf16>
    tpu.vector_store %arg14[%c0_13, %c32], %19 {strides = array<i32>} : memref<128x288xbf16, #tpu.memory_space<vmem>>, vector<128x32xbf16>,
    %21 = vector.extract_strided_slice %14 {offsets = [0, 0, 2, 0], sizes = [2, 8, 8, 32], strides = [1, 1, 1, 1]} : vector<2x10x16x32xbf16> to vector<2x8x8x32xbf16>
    %22 = vector.shape_cast %21 : vector<2x8x8x32xbf16> to vector<128x32xbf16>
    %c0_14 = arith.constant 0 : index
    %c64 = arith.constant 64 : index
    %23 = vector.load %arg14[%c0_14, %c64] : memref<128x288xbf16, #tpu.memory_space<vmem>>, vector<128x32xbf16>
    tpu.vector_store %arg14[%c0_14, %c64], %22 {strides = array<i32>} : memref<128x288xbf16, #tpu.memory_space<vmem>>, vector<128x32xbf16>,
    %24 = vector.extract_strided_slice %14 {offsets = [0, 1, 0, 0], sizes = [2, 8, 8, 32], strides = [1, 1, 1, 1]} : vector<2x10x16x32xbf16> to vector<2x8x8x32xbf16>
    %25 = vector.shape_cast %24 : vector<2x8x8x32xbf16> to vector<128x32xbf16>
    %c0_15 = arith.constant 0 : index
    %c96 = arith.constant 96 : index
    %26 = vector.load %arg14[%c0_15, %c96] : memref<128x288xbf16, #tpu.memory_space<vmem>>, vector<128x32xbf16>
    tpu.vector_store %arg14[%c0_15, %c96], %25 {strides = array<i32>} : memref<128x288xbf16, #tpu.memory_space<vmem>>, vector<128x32xbf16>,
    %27 = vector.extract_strided_slice %14 {offsets = [0, 1, 1, 0], sizes = [2, 8, 8, 32], strides = [1, 1, 1, 1]} : vector<2x10x16x32xbf16> to vector<2x8x8x32xbf16>
    %28 = vector.shape_cast %27 : vector<2x8x8x32xbf16> to vector<128x32xbf16>
    %c0_16 = arith.constant 0 : index
    %c128 = arith.constant 128 : index
    %29 = vector.load %arg14[%c0_16, %c128] : memref<128x288xbf16, #tpu.memory_space<vmem>>, vector<128x32xbf16>
    tpu.vector_store %arg14[%c0_16, %c128], %28 {strides = array<i32>} : memref<128x288xbf16, #tpu.memory_space<vmem>>, vector<128x32xbf16>,
    %30 = vector.extract_strided_slice %14 {offsets = [0, 1, 2, 0], sizes = [2, 8, 8, 32], strides = [1, 1, 1, 1]} : vector<2x10x16x32xbf16> to vector<2x8x8x32xbf16>
    %31 = vector.shape_cast %30 : vector<2x8x8x32xbf16> to vector<128x32xbf16>
    %c0_17 = arith.constant 0 : index
    %c160 = arith.constant 160 : index
    %32 = vector.load %arg14[%c0_17, %c160] : memref<128x288xbf16, #tpu.memory_space<vmem>>, vector<128x32xbf16>
    tpu.vector_store %arg14[%c0_17, %c160], %31 {strides = array<i32>} : memref<128x288xbf16, #tpu.memory_space<vmem>>, vector<128x32xbf16>,
    %33 = vector.extract_strided_slice %14 {offsets = [0, 2, 0, 0], sizes = [2, 8, 8, 32], strides = [1, 1, 1, 1]} : vector<2x10x16x32xbf16> to vector<2x8x8x32xbf16>
    %34 = vector.shape_cast %33 : vector<2x8x8x32xbf16> to vector<128x32xbf16>
    %c0_18 = arith.constant 0 : index
    %c192 = arith.constant 192 : index
    %35 = vector.load %arg14[%c0_18, %c192] : memref<128x288xbf16, #tpu.memory_space<vmem>>, vector<128x32xbf16>
    tpu.vector_store %arg14[%c0_18, %c192], %34 {strides = array<i32>} : memref<128x288xbf16, #tpu.memory_space<vmem>>, vector<128x32xbf16>,
    %36 = vector.extract_strided_slice %14 {offsets = [0, 2, 1, 0], sizes = [2, 8, 8, 32], strides = [1, 1, 1, 1]} : vector<2x10x16x32xbf16> to vector<2x8x8x32xbf16>
    %37 = vector.shape_cast %36 : vector<2x8x8x32xbf16> to vector<128x32xbf16>
    %c0_19 = arith.constant 0 : index
    %c224 = arith.constant 224 : index
    %38 = vector.load %arg14[%c0_19, %c224] : memref<128x288xbf16, #tpu.memory_space<vmem>>, vector<128x32xbf16>
    tpu.vector_store %arg14[%c0_19, %c224], %37 {strides = array<i32>} : memref<128x288xbf16, #tpu.memory_space<vmem>>, vector<128x32xbf16>,
    %39 = vector.extract_strided_slice %14 {offsets = [0, 2, 2, 0], sizes = [2, 8, 8, 32], strides = [1, 1, 1, 1]} : vector<2x10x16x32xbf16> to vector<2x8x8x32xbf16>
    %40 = vector.shape_cast %39 : vector<2x8x8x32xbf16> to vector<128x32xbf16>
    %c0_20 = arith.constant 0 : index
    %c256 = arith.constant 256 : index
    %41 = vector.load %arg14[%c0_20, %c256] : memref<128x288xbf16, #tpu.memory_space<vmem>>, vector<128x32xbf16>
    tpu.vector_store %arg14[%c0_20, %c256], %40 {strides = array<i32>} : memref<128x288xbf16, #tpu.memory_space<vmem>>, vector<128x32xbf16>,
    %c0_21 = arith.constant 0 : index
    %c0_22 = arith.constant 0 : index
    %42 = vector.load %arg14[%c0_21, %c0_22] : memref<128x288xbf16, #tpu.memory_space<vmem>>, vector<128x288xbf16>
    %c0_23 = arith.constant 0 : index
    %c0_24 = arith.constant 0 : index
    %c0_25 = arith.constant 0 : index
    %43 = vector.load %arg5[%c0_23, %c0_24, %c0_25] : memref<1x288x32xbf16, #tpu.memory_space<vmem>>, vector<1x288x32xbf16>
    %44 = vector.shape_cast %43 : vector<1x288x32xbf16> to vector<288x32xbf16>
    %cst_26 = arith.constant dense<0.000000e+00> : vector<128x32xf32>
    %45 = tpu.matmul %42, %44, %cst_26 {dimension_numbers = #tpu.dot_dimension_numbers<[1], [0], [0], [1], [0, 0, 1, 1], [], []>} : vector<128x288xbf16>, vector<288x32xbf16>, vector<128x32xf32> -> vector<128x32xf32>
    %c0_27 = arith.constant 0 : index
    %c0_28 = arith.constant 0 : index
    %c0_29 = arith.constant 0 : index
    %46 = vector.load %arg6[%c0_27, %c0_28, %c0_29] : memref<1x1x32xf32, #tpu.memory_space<vmem>>, vector<1x1x32xf32>
    %47 = vector.shape_cast %46 : vector<1x1x32xf32> to vector<1x32xf32>
    %48 = vector.broadcast %47 : vector<1x32xf32> to vector<128x32xf32>
    %49 = arith.addf %45, %48 : vector<128x32xf32>
    %cst_30 = arith.constant 0.000000e+00 : f32
    %50 = vector.broadcast %cst_30 : f32 to vector<128x32xf32>
    %51 = arith.maximumf %49, %50 : vector<128x32xf32>
    %52 = vector.shape_cast %51 : vector<128x32xf32> to vector<2x64x32xf32>
    %cst_31 = arith.constant dense<0.000000e+00> : vector<2x32xf32>
    %53 = vector.multi_reduction <add>, %52, %cst_31 [1] : vector<2x64x32xf32> to vector<2x32xf32>
    %cst_32 = arith.constant 6.400000e+01 : f32
    %54 = vector.broadcast %cst_32 : f32 to vector<2x32xf32>
    %55 = arith.divf %53, %54 : vector<2x32xf32>
    %c0_33 = arith.constant 0 : index
    %c0_34 = arith.constant 0 : index
    %56 = vector.load %arg11[%c0_33, %c0_34] : memref<2x128xf32, #tpu.memory_space<vmem>>, vector<2x32xf32>
    tpu.vector_store %arg11[%c0_33, %c0_34], %55 {strides = array<i32>} : memref<2x128xf32, #tpu.memory_space<vmem>>, vector<2x32xf32>,
    %cst_35 = arith.constant 0.000000e+00 : f32
    %57 = vector.broadcast %cst_35 : f32 to vector<2x96xf32>
    %c0_36 = arith.constant 0 : index
    %c32_37 = arith.constant 32 : index
    %58 = vector.load %arg11[%c0_36, %c32_37] : memref<2x128xf32, #tpu.memory_space<vmem>>, vector<2x96xf32>
    tpu.vector_store %arg11[%c0_36, %c32_37], %57 {strides = array<i32>} : memref<2x128xf32, #tpu.memory_space<vmem>>, vector<2x96xf32>,
    %c0_38 = arith.constant 0 : index
    %c0_39 = arith.constant 0 : index
    %c0_40 = arith.constant 0 : index
    %59 = vector.load %arg7[%c0_38, %c0_39, %c0_40] : memref<1x32x128xf32, #tpu.memory_space<vmem>>, vector<1x32x128xf32>
    %60 = vector.shape_cast %59 : vector<1x32x128xf32> to vector<32x128xf32>
    %cst_41 = arith.constant dense<0.000000e+00> : vector<2x128xf32>
    %61 = tpu.matmul %55, %60, %cst_41 {dimension_numbers = #tpu.dot_dimension_numbers<[1], [0], [0], [1], [0, 0, 1, 1], [], []>} : vector<2x32xf32>, vector<32x128xf32>, vector<2x128xf32> -> vector<2x128xf32>
    %c0_i32 = arith.constant 0 : i32
    %62 = arith.cmpi eq, %arg0, %c0_i32 : i32
    %63 = arith.extui %62 : i1 to i32
    %c0_i32_42 = arith.constant 0 : i32
    %64 = arith.cmpi ne, %63, %c0_i32_42 : i32
    scf.if %64 {
      %c0_52 = arith.constant 0 : index
      %c0_53 = arith.constant 0 : index
      %74 = vector.load %arg8[%c0_52, %c0_53] : memref<1x128xf32, #tpu.memory_space<vmem>>, vector<1x128xf32>
      %75 = vector.broadcast %74 : vector<1x128xf32> to vector<2x128xf32>
      %76 = arith.addf %61, %75 : vector<2x128xf32>
      %c0_54 = arith.constant 0 : index
      %c0_55 = arith.constant 0 : index
      %77 = vector.load %arg12[%c0_54, %c0_55] : memref<2x128xf32, #tpu.memory_space<vmem>>, vector<2x128xf32>
      tpu.vector_store %arg12[%c0_54, %c0_55], %76 {strides = array<i32>} : memref<2x128xf32, #tpu.memory_space<vmem>>, vector<2x128xf32>,
    } else {
    }
    %c0_i32_43 = arith.constant 0 : i32
    %65 = arith.cmpi ne, %arg0, %c0_i32_43 : i32
    %66 = arith.extui %65 : i1 to i32
    %c0_i32_44 = arith.constant 0 : i32
    %67 = arith.cmpi ne, %66, %c0_i32_44 : i32
    scf.if %67 {
      %c0_52 = arith.constant 0 : index
      %c0_53 = arith.constant 0 : index
      %74 = vector.load %arg12[%c0_52, %c0_53] : memref<2x128xf32, #tpu.memory_space<vmem>>, vector<2x128xf32>
      %75 = arith.addf %74, %61 : vector<2x128xf32>
      %c0_54 = arith.constant 0 : index
      %c0_55 = arith.constant 0 : index
      %76 = vector.load %arg12[%c0_54, %c0_55] : memref<2x128xf32, #tpu.memory_space<vmem>>, vector<2x128xf32>
      tpu.vector_store %arg12[%c0_54, %c0_55], %75 {strides = array<i32>} : memref<2x128xf32, #tpu.memory_space<vmem>>, vector<2x128xf32>,
    } else {
    }
    %c0_45 = arith.constant 0 : index
    %c0_46 = arith.constant 0 : index
    %68 = vector.load %arg9[%c0_45, %c0_46] : memref<32x128xf32, #tpu.memory_space<vmem>>, vector<32x128xf32>
    %cst_47 = arith.constant dense<0.000000e+00> : vector<2x128xf32>
    %69 = tpu.matmul %55, %68, %cst_47 {dimension_numbers = #tpu.dot_dimension_numbers<[1], [0], [0], [1], [0, 0, 1, 1], [], []>} : vector<2x32xf32>, vector<32x128xf32>, vector<2x128xf32> -> vector<2x128xf32>
    %c0_48 = arith.constant 0 : index
    %c0_49 = arith.constant 0 : index
    %70 = vector.load %arg10[%c0_48, %c0_49] : memref<1x128xf32, #tpu.memory_space<vmem>>, vector<1x128xf32>
    %71 = vector.broadcast %70 : vector<1x128xf32> to vector<2x128xf32>
    %72 = arith.addf %69, %71 : vector<2x128xf32>
    %c0_50 = arith.constant 0 : index
    %c0_51 = arith.constant 0 : index
    %73 = vector.load %arg13[%c0_50, %c0_51] : memref<2x128xf32, #tpu.memory_space<vmem>>, vector<2x128xf32>
    tpu.vector_store %arg13[%c0_50, %c0_51], %72 {strides = array<i32>} : memref<2x128xf32, #tpu.memory_space<vmem>>, vector<2x128xf32>,
    return
  }
  func.func @transform_0(%arg0: i32) -> (i32, i32) {
    %c0_i32 = arith.constant 0 : i32
    %c0_i32_0 = arith.constant 0 : i32
    %c0_i32_1 = arith.constant 0 : i32
    return %c0_i32, %c0_i32_0 : i32, i32
  }
  func.func @transform_1(%arg0: i32) -> (i32, i32) {
    %c0_i32 = arith.constant 0 : i32
    %c0_i32_0 = arith.constant 0 : i32
    %c0_i32_1 = arith.constant 0 : i32
    return %c0_i32, %c0_i32_0 : i32, i32
  }
  func.func @transform_2(%arg0: i32) -> (i32, i32, i32) {
    %c0_i32 = arith.constant 0 : i32
    %c0_i32_0 = arith.constant 0 : i32
    %c0_i32_1 = arith.constant 0 : i32
    return %arg0, %c0_i32, %c0_i32_0 : i32, i32, i32
  }
  func.func @transform_3(%arg0: i32) -> (i32, i32, i32) {
    %c0_i32 = arith.constant 0 : i32
    %c0_i32_0 = arith.constant 0 : i32
    %c0_i32_1 = arith.constant 0 : i32
    return %arg0, %c0_i32, %c0_i32_0 : i32, i32, i32
  }
  func.func @transform_4(%arg0: i32) -> (i32, i32, i32) {
    %c0_i32 = arith.constant 0 : i32
    %c0_i32_0 = arith.constant 0 : i32
    %c0_i32_1 = arith.constant 0 : i32
    return %arg0, %c0_i32, %c0_i32_0 : i32, i32, i32
  }
  func.func @transform_5(%arg0: i32) -> (i32, i32, i32) {
    %c0_i32 = arith.constant 0 : i32
    %c0_i32_0 = arith.constant 0 : i32
    %c0_i32_1 = arith.constant 0 : i32
    return %arg0, %c0_i32, %c0_i32_0 : i32, i32, i32
  }
  func.func @transform_6(%arg0: i32) -> (i32, i32, i32) {
    %c0_i32 = arith.constant 0 : i32
    %c0_i32_0 = arith.constant 0 : i32
    %c0_i32_1 = arith.constant 0 : i32
    return %arg0, %c0_i32, %c0_i32_0 : i32, i32, i32
  }
  func.func @transform_7(%arg0: i32) -> (i32, i32) {
    %c0_i32 = arith.constant 0 : i32
    %c0_i32_0 = arith.constant 0 : i32
    %c0_i32_1 = arith.constant 0 : i32
    return %c0_i32, %c0_i32_0 : i32, i32
  }
  func.func @transform_8(%arg0: i32) -> (i32, i32) {
    %c0_i32 = arith.constant 0 : i32
    %c0_i32_0 = arith.constant 0 : i32
    %c0_i32_1 = arith.constant 0 : i32
    return %c0_i32, %c0_i32_0 : i32, i32
  }
  func.func @transform_9(%arg0: i32) -> (i32, i32) {
    %c0_i32 = arith.constant 0 : i32
    %c0_i32_0 = arith.constant 0 : i32
    %c0_i32_1 = arith.constant 0 : i32
    return %c0_i32, %c0_i32_0 : i32, i32
  }
  func.func @transform_10(%arg0: i32) -> (i32, i32) {
    %c0_i32 = arith.constant 0 : i32
    %c0_i32_0 = arith.constant 0 : i32
    return %c0_i32, %arg0 : i32, i32
  }
  func.func @transform_11(%arg0: i32) -> (i32, i32) {
    %c0_i32 = arith.constant 0 : i32
    %c0_i32_0 = arith.constant 0 : i32
    %c0_i32_1 = arith.constant 0 : i32
    return %c0_i32, %c0_i32_0 : i32, i32
  }
  func.func @transform_12(%arg0: i32) -> (i32, i32) {
    %c0_i32 = arith.constant 0 : i32
    %c0_i32_0 = arith.constant 0 : i32
    %c0_i32_1 = arith.constant 0 : i32
    return %c0_i32, %c0_i32_0 : i32, i32
  }
}

</mosaic_0001>

<llo_original>
// kernel: tpu_custom_call.1
$region0: #{tpu_custom_call.1}
  #allocation0 [shape = 'u32[]', space=smem, size = 0x4, offset = 0x4, fixed_abs, tag = 'smem constant byte address 0x4 - core index']
  #allocation1 [shape = 'u32[72,128]{1,0:T(1,128)}', space=vmem, size = 0x9000, scoped, tag = 'internal scratch']
  #allocation2 [shape = 'bf16[128,288]{1,0:T(8,128)(2,1)}', space=vmem, size = 0x18000, scoped, tag = 'scratch operand']
  %s0 = inlined_call_operand.vmem [shape: bf16[512,36], index: 0, kind: input, shape index: {}]
  %s1 = inlined_call_operand.hbm [shape: bf16[320,512], index: 1, kind: input, shape index: {}]
  %s2 = inlined_call_operand.vmem [shape: bf16[2,36,32], index: 2, kind: input, shape index: {}]
  %s3 = inlined_call_operand.vmem [shape: f32[2,1,32], index: 3, kind: input, shape index: {}]
  %s4 = inlined_call_operand.vmem [shape: bf16[2,288,32], index: 4, kind: input, shape index: {}]
  %s5 = inlined_call_operand.vmem [shape: f32[2,1,32], index: 5, kind: input, shape index: {}]
  %s6 = inlined_call_operand.vmem [shape: f32[2,32,128], index: 6, kind: input, shape index: {}]
  %s7 = inlined_call_operand.vmem [shape: f32[1,128], index: 7, kind: input, shape index: {}]
  %s8 = inlined_call_operand.vmem [shape: f32[32,128], index: 8, kind: input, shape index: {}]
  %s9 = inlined_call_operand.vmem [shape: f32[1,128], index: 9, kind: input, shape index: {}]
  %s10 = inlined_call_operand.hbm [shape: f32[2,256], index: 10, kind: output, shape index: {0}]
  %s11 = inlined_call_operand.hbm [shape: f32[2,128], index: 11, kind: output, shape index: {1}]
  %s12 = inlined_call_operand.hbm [shape: f32[2,128], index: 12, kind: output, shape index: {2}]
  %13 = xla_tuple %s10, %s11, %s12
  %s14 = sld [smem:[#allocation0]]
  $region101: #{tpu_custom_call.1} parent=0
    _
  %s16 = ssub.s32 1, %s14
  %s17 = scalar_select 0, %s16, %s14
  $region1: #{tpu_custom_call.1} parent=0
    #allocation3 [shape = 'u8[327680]{0}', space=vmem, size = 0x50000, scoped, tag = 'input window, operand 1, single buffered']
    #allocation4 [shape = 's32[2]{0}', space=sflag, size = 0x8, scoped, tag = 'scoped memory for tpu_custom_call.1']
    #allocation5 [shape = 's32[2]{0}', space=sflag, size = 0x8, scoped, tag = 'scoped memory for tpu_custom_call.1']
    #allocation6 [shape = 'u8[2048]{0}', space=vmem, size = 0x800, scoped, tag = 'output window, operand 0']
    #allocation7 [shape = 'u8[1024]{0}', space=vmem, size = 0x400, scoped, tag = 'output window, operand 1, single buffered']
    #allocation8 [shape = 's32[1]{0}', space=sflag, size = 0x4, scoped, tag = 'scoped memory for tpu_custom_call.1']
    #allocation9 [shape = 'u8[1024]{0}', space=vmem, size = 0x400, scoped, tag = 'output window, operand 2, single buffered']
    %18 = vsyncpa [#allocation4], 0
    %19 = vsyncpa [#allocation5], 0
    %s20 = scalar_lea.sflag [#allocation5], 1
    %21 = vsyncpa %s20, 0
    %22 = vsyncpa [#allocation8], 0
    loop: start=0, step=1, limit=4
    $region2: #{tpu_custom_call.1} parent=1 // loop_pre_header
      _
    $region3: #{tpu_custom_call.1} parent=1 // loop_header
      %s24 = sphi 0, %s28
      %p25 = scmp.ge.s32.totalorder %s24, 4
      %s32 = sphi 0, %s32
      %s34 = sphi 0, %s32
      %s35 = sphi 0, %s34
      %s49 = sphi 0, %s35
      %s53 = sphi 0, %s53
      %s55 = sphi 0, %s53
      %s56 = sphi 0, %s55
      %s70 = sphi 0, %s56
      %s76 = sphi 0, %s78
      %s79 = sphi 0, %s76
      %s80 = sphi 0, %s79
      %s96 = sphi 0, %s80
      %s102 = sphi 0, %s104
      %s105 = sphi 0, %s102
      %s106 = sphi 0, %s105
      %s122 = sphi 0, %s106
      %s128 = sphi 0, %s130
      %s131 = sphi 0, %s128
      %s132 = sphi 0, %s131
      %s148 = sphi 0, %s132
      %s154 = sphi 0, %s156
      %s157 = sphi 0, %s154
      %s158 = sphi 0, %s157
      %s174 = sphi 0, %s158
      %s180 = sphi 0, %s182
      %s183 = sphi 0, %s180
      %s184 = sphi 0, %s183
      %s200 = sphi 0, %s184
      %s204 = sphi 0, %s204
      %s206 = sphi 0, %s204
      %s207 = sphi 0, %s206
      %s221 = sphi 0, %s207
      %s225 = sphi 0, %s225
      %s227 = sphi 0, %s225
      %s228 = sphi 0, %s227
      %s242 = sphi 0, %s228
      %s246 = sphi 0, %s246
      %s248 = sphi 0, %s246
      %s249 = sphi 0, %s248
      %s263 = sphi 0, %s249
      %s269 = sphi 0, %s271
      %s272 = sphi 0, %s269
      %s273 = sphi 0, %s272
      %s289 = sphi 0, %s273
      %s293 = sphi 0, %s293
      %s295 = sphi 0, %s293
      %s296 = sphi 0, %s295
      %s310 = sphi 0, %s296
      %s314 = sphi 0, %s314
      %s316 = sphi 0, %s314
      %s317 = sphi 0, %s316
      %s331 = sphi 0, %s317
    $region4: #{tpu_custom_call.1} parent=1 // loop_header_branch
      %27 = sbr.rel (%p25) target = $region8
    $region5: #{tpu_custom_call.1} parent=1 // loop_body
      %s29 = ssub.s32 %s24, 1
      %s30 = ssub.s32 %s24, 2
      %s31 = sadd.s32 %s24, 1
      %s33 = sadd.s32 %s32, 1
      %p36 = scmp.eq.s32.totalorder %s24, 1
      %p37 = scmp.ne.s32.totalorder %s32, %s34
      %p38 = scmp.eq.s32.totalorder %s24, 0
      %p39 = por %p37, %p38
      %p40 = scmp.ne.s32.totalorder %s32, %s34
      %p41 = scmp.eq.s32.totalorder %s29, 1
      %p42 = por %p40, %p41
      %p43 = scmp.ne.s32.totalorder %s34, %s35
      %p44 = scmp.eq.s32.totalorder %s29, 0
      %p45 = por %p43, %p44
      %p46 = scmp.ne.s32.totalorder %s34, %s35
      %p47 = scmp.eq.s32.totalorder %s30, 1
      %p48 = por %p46, %p47
      %p50 = scmp.ne.s32.totalorder %s35, %s49
      %p51 = scmp.eq.s32.totalorder %s30, 0
      %p52 = por %p50, %p51
      %s54 = sadd.s32 %s53, 1
      %p57 = scmp.eq.s32.totalorder %s24, 1
      %p58 = scmp.ne.s32.totalorder %s53, %s55
      %p59 = scmp.eq.s32.totalorder %s24, 0
      %p60 = por %p58, %p59
      %p61 = scmp.ne.s32.totalorder %s53, %s55
      %p62 = scmp.eq.s32.totalorder %s29, 1
      %p63 = por %p61, %p62
      %p64 = scmp.ne.s32.totalorder %s55, %s56
      %p65 = scmp.eq.s32.totalorder %s29, 0
      %p66 = por %p64, %p65
      %p67 = scmp.ne.s32.totalorder %s55, %s56
      %p68 = scmp.eq.s32.totalorder %s30, 1
      %p69 = por %p67, %p68
      %p71 = scmp.ne.s32.totalorder %s56, %s70
      %p72 = scmp.eq.s32.totalorder %s30, 0
      %p73 = por %p71, %p72
      %s74 = ssub.s32 %s24, %s31
      %p75 = scmp.eq.s32.totalorder %s74, 0
      %s77 = sadd.s32 %s76, 1
      %s78 = scalar_select %p75, %s76, %s77
      %p81 = pneg %p75
      %p82 = scmp.eq.s32.totalorder %s24, 1
      %p83 = por %p81, %p82
      %p84 = scmp.ne.s32.totalorder %s76, %s79
      %p85 = scmp.eq.s32.totalorder %s24, 0
      %p86 = por %p84, %p85
      %p87 = scmp.ne.s32.totalorder %s76, %s79
      %p88 = scmp.eq.s32.totalorder %s29, 1
      %p89 = por %p87, %p88
      %p90 = scmp.ne.s32.totalorder %s79, %s80
      %p91 = scmp.eq.s32.totalorder %s29, 0
      %p92 = por %p90, %p91
      %p93 = scmp.ne.s32.totalorder %s79, %s80
      %p94 = scmp.eq.s32.totalorder %s30, 1
      %p95 = por %p93, %p94
      %p97 = scmp.ne.s32.totalorder %s80, %s96
      %p98 = scmp.eq.s32.totalorder %s30, 0
      %p99 = por %p97, %p98
      %s100 = ssub.s32 %s24, %s31
      %p101 = scmp.eq.s32.totalorder %s100, 0
      %s103 = sadd.s32 %s102, 1
      %s104 = scalar_select %p101, %s102, %s103
      %p107 = pneg %p101
      %p108 = scmp.eq.s32.totalorder %s24, 1
      %p109 = por %p107, %p108
      %p110 = scmp.ne.s32.totalorder %s102, %s105
      %p111 = scmp.eq.s32.totalorder %s24, 0
      %p112 = por %p110, %p111
      %p113 = scmp.ne.s32.totalorder %s102, %s105
      %p114 = scmp.eq.s32.totalorder %s29, 1
      %p115 = por %p113, %p114
      %p116 = scmp.ne.s32.totalorder %s105, %s106
      %p117 = scmp.eq.s32.totalorder %s29, 0
      %p118 = por %p116, %p117
      %p119 = scmp.ne.s32.totalorder %s105, %s106
      %p120 = scmp.eq.s32.totalorder %s30, 1
      %p121 = por %p119, %p120
      %p123 = scmp.ne.s32.totalorder %s106, %s122
      %p124 = scmp.eq.s32.totalorder %s30, 0
      %p125 = por %p123, %p124
      %s126 = ssub.s32 %s24, %s31
      %p127 = scmp.eq.s32.totalorder %s126, 0
      %s129 = sadd.s32 %s128, 1
      %s130 = scalar_select %p127, %s128, %s129
      %p133 = pneg %p127
      %p134 = scmp.eq.s32.totalorder %s24, 1
      %p135 = por %p133, %p134
      %p136 = scmp.ne.s32.totalorder %s128, %s131
      %p137 = scmp.eq.s32.totalorder %s24, 0
      %p138 = por %p136, %p137
      %p139 = scmp.ne.s32.totalorder %s128, %s131
      %p140 = scmp.eq.s32.totalorder %s29, 1
      %p141 = por %p139, %p140
      %p142 = scmp.ne.s32.totalorder %s131, %s132
      %p143 = scmp.eq.s32.totalorder %s29, 0
      %p144 = por %p142, %p143
      %p145 = scmp.ne.s32.totalorder %s131, %s132
      %p146 = scmp.eq.s32.totalorder %s30, 1
      %p147 = por %p145, %p146
      %p149 = scmp.ne.s32.totalorder %s132, %s148
      %p150 = scmp.eq.s32.totalorder %s30, 0
      %p151 = por %p149, %p150
      %s152 = ssub.s32 %s24, %s31
      %p153 = scmp.eq.s32.totalorder %s152, 0
      %s155 = sadd.s32 %s154, 1
      %s156 = scalar_select %p153, %s154, %s155
      %p159 = pneg %p153
      %p160 = scmp.eq.s32.totalorder %s24, 1
      %p161 = por %p159, %p160
      %p162 = scmp.ne.s32.totalorder %s154, %s157
      %p163 = scmp.eq.s32.totalorder %s24, 0
      %p164 = por %p162, %p163
      %p165 = scmp.ne.s32.totalorder %s154, %s157
      %p166 = scmp.eq.s32.totalorder %s29, 1
      %p167 = por %p165, %p166
      %p168 = scmp.ne.s32.totalorder %s157, %s158
      %p169 = scmp.eq.s32.totalorder %s29, 0
      %p170 = por %p168, %p169
      %p171 = scmp.ne.s32.totalorder %s157, %s158
      %p172 = scmp.eq.s32.totalorder %s30, 1
      %p173 = por %p171, %p172
      %p175 = scmp.ne.s32.totalorder %s158, %s174
      %p176 = scmp.eq.s32.totalorder %s30, 0
      %p177 = por %p175, %p176
      %s178 = ssub.s32 %s24, %s31
      %p179 = scmp.eq.s32.totalorder %s178, 0
      %s181 = sadd.s32 %s180, 1
      %s182 = scalar_select %p179, %s180, %s181
      %p185 = pneg %p179
      %p186 = scmp.eq.s32.totalorder %s24, 1
      %p187 = por %p185, %p186
      %p188 = scmp.ne.s32.totalorder %s180, %s183
      %p189 = scmp.eq.s32.totalorder %s24, 0
      %p190 = por %p188, %p189
      %p191 = scmp.ne.s32.totalorder %s180, %s183
      %p192 = scmp.eq.s32.totalorder %s29, 1
      %p193 = por %p191, %p192
      %p194 = scmp.ne.s32.totalorder %s183, %s184
      %p195 = scmp.eq.s32.totalorder %s29, 0
      %p196 = por %p194, %p195
      %p197 = scmp.ne.s32.totalorder %s183, %s184
      %p198 = scmp.eq.s32.totalorder %s30, 1
      %p199 = por %p197, %p198
      %p201 = scmp.ne.s32.totalorder %s184, %s200
      %p202 = scmp.eq.s32.totalorder %s30, 0
      %p203 = por %p201, %p202
      %s205 = sadd.s32 %s204, 1
      %p208 = scmp.eq.s32.totalorder %s24, 1
      %p209 = scmp.ne.s32.totalorder %s204, %s206
      %p210 = scmp.eq.s32.totalorder %s24, 0
      %p211 = por %p209, %p210
      %p212 = scmp.ne.s32.totalorder %s204, %s206
      %p213 = scmp.eq.s32.totalorder %s29, 1
      %p214 = por %p212, %p213
      %p215 = scmp.ne.s32.totalorder %s206, %s207
      %p216 = scmp.eq.s32.totalorder %s29, 0
      %p217 = por %p215, %p216
      %p218 = scmp.ne.s32.totalorder %s206, %s207
      %p219 = scmp.eq.s32.totalorder %s30, 1
      %p220 = por %p218, %p219
      %p222 = scmp.ne.s32.totalorder %s207, %s221
      %p223 = scmp.eq.s32.totalorder %s30, 0
      %p224 = por %p222, %p223
      %s226 = sadd.s32 %s225, 1
      %p229 = scmp.eq.s32.totalorder %s24, 1
      %p230 = scmp.ne.s32.totalorder %s225, %s227
      %p231 = scmp.eq.s32.totalorder %s24, 0
      %p232 = por %p230, %p231
      %p233 = scmp.ne.s32.totalorder %s225, %s227
      %p234 = scmp.eq.s32.totalorder %s29, 1
      %p235 = por %p233, %p234
      %p236 = scmp.ne.s32.totalorder %s227, %s228
      %p237 = scmp.eq.s32.totalorder %s29, 0
      %p238 = por %p236, %p237
      %p239 = scmp.ne.s32.totalorder %s227, %s228
      %p240 = scmp.eq.s32.totalorder %s30, 1
      %p241 = por %p239, %p240
      %p243 = scmp.ne.s32.totalorder %s228, %s242
      %p244 = scmp.eq.s32.totalorder %s30, 0
      %p245 = por %p243, %p244
      %s247 = sadd.s32 %s246, 1
      %p250 = scmp.eq.s32.totalorder %s24, 1
      %p251 = scmp.ne.s32.totalorder %s246, %s248
      %p252 = scmp.eq.s32.totalorder %s24, 0
      %p253 = por %p251, %p252
      %p254 = scmp.ne.s32.totalorder %s246, %s248
      %p255 = scmp.eq.s32.totalorder %s29, 1
      %p256 = por %p254, %p255
      %p257 = scmp.ne.s32.totalorder %s248, %s249
      %p258 = scmp.eq.s32.totalorder %s29, 0
      %p259 = por %p257, %p258
      %p260 = scmp.ne.s32.totalorder %s248, %s249
      %p261 = scmp.eq.s32.totalorder %s30, 1
      %p262 = por %p260, %p261
      %p264 = scmp.ne.s32.totalorder %s249, %s263
      %p265 = scmp.eq.s32.totalorder %s30, 0
      %p266 = por %p264, %p265
      %s267 = ssub.s32 %s24, %s31
      %p268 = scmp.eq.s32.totalorder %s267, 0
      %s270 = sadd.s32 %s269, 1
      %s271 = scalar_select %p268, %s269, %s270
      %p274 = pneg %p268
      %p275 = scmp.eq.s32.totalorder %s24, 1
      %p276 = por %p274, %p275
      %p277 = scmp.ne.s32.totalorder %s269, %s272
      %p278 = scmp.eq.s32.totalorder %s24, 0
      %p279 = por %p277, %p278
      %p280 = scmp.ne.s32.totalorder %s269, %s272
      %p281 = scmp.eq.s32.totalorder %s29, 1
      %p282 = por %p280, %p281
      %p283 = scmp.ne.s32.totalorder %s272, %s273
      %p284 = scmp.eq.s32.totalorder %s29, 0
      %p285 = por %p283, %p284
      %p286 = scmp.ne.s32.totalorder %s272, %s273
      %p287 = scmp.eq.s32.totalorder %s30, 1
      %p288 = por %p286, %p287
      %p290 = scmp.ne.s32.totalorder %s273, %s289
      %p291 = scmp.eq.s32.totalorder %s30, 0
      %p292 = por %p290, %p291
      %s294 = sadd.s32 %s293, 1
      %p297 = scmp.eq.s32.totalorder %s24, 1
      %p298 = scmp.ne.s32.totalorder %s293, %s295
      %p299 = scmp.eq.s32.totalorder %s24, 0
      %p300 = por %p298, %p299
      %p301 = scmp.ne.s32.totalorder %s293, %s295
      %p302 = scmp.eq.s32.totalorder %s29, 1
      %p303 = por %p301, %p302
      %p304 = scmp.ne.s32.totalorder %s295, %s296
      %p305 = scmp.eq.s32.totalorder %s29, 0
      %p306 = por %p304, %p305
      %p307 = scmp.ne.s32.totalorder %s295, %s296
      %p308 = scmp.eq.s32.totalorder %s30, 1
      %p309 = por %p307, %p308
      %p311 = scmp.ne.s32.totalorder %s296, %s310
      %p312 = scmp.eq.s32.totalorder %s30, 0
      %p313 = por %p311, %p312
      %s315 = sadd.s32 %s314, 1
      %p318 = scmp.eq.s32.totalorder %s24, 1
      %p319 = scmp.ne.s32.totalorder %s314, %s316
      %p320 = scmp.eq.s32.totalorder %s24, 0
      %p321 = por %p319, %p320
      %p322 = scmp.ne.s32.totalorder %s314, %s316
      %p323 = scmp.eq.s32.totalorder %s29, 1
      %p324 = por %p322, %p323
      %p325 = scmp.ne.s32.totalorder %s316, %s317
      %p326 = scmp.eq.s32.totalorder %s29, 0
      %p327 = por %p325, %p326
      %p328 = scmp.ne.s32.totalorder %s316, %s317
      %p329 = scmp.eq.s32.totalorder %s30, 1
      %p330 = por %p328, %p329
      %p332 = scmp.ne.s32.totalorder %s317, %s331
      %p333 = scmp.eq.s32.totalorder %s30, 0
      %p334 = por %p332, %p333
      %p335 = scmp.le.s32.totalorder 1, %s24
      %p336 = scmp.lt.s32.totalorder %s24, 3
      %p337 = pnand %p335, %p336
      %p338 = pneg %p337
      // Predicated region
      $region9: #{tpu_custom_call.1} parent=5 // pred_check
        _
      $region10: #{tpu_custom_call.1} parent=5 // pred_check_branch
        %340 = sbr.rel (%p337) target = $region12
      $region11: #{tpu_custom_call.1} parent=5 // pred_region
        %s341 = ssub.s32 %s24, 1
        // Predicated region
        $region13: #{tpu_custom_call.1} parent=11 // pred_check
          %p342 = pneg %p45
        $region14: #{tpu_custom_call.1} parent=11 // pred_check_branch
          %344 = sbr.rel (%p342) target = $region16
        $region15: #{tpu_custom_call.1} parent=11 // pred_region
          _
        $region16: #{tpu_custom_call.1} parent=11 // pred_fallthru
          _
        // Predicated region
        $region17: #{tpu_custom_call.1} parent=11 // pred_check
          %p345 = pneg %p66
        $region18: #{tpu_custom_call.1} parent=11 // pred_check_branch
          %347 = sbr.rel (%p345) target = $region20
        $region19: #{tpu_custom_call.1} parent=11 // pred_region
          %349 = vsyncadd [#allocation4], 0
          %s350 = sshll.u32 %s1, 4
          %s351 = int_to_ptr.hbm [resolvable:$true] %s350
          %s352 = sshll.u32 [#allocation3], 4
          %s353 = int_to_ptr.vmem [resolvable:$true] %s352
          %358 = dma.hbm_to_vmem [thread:$0]  %s351, 10240, %s353, [#allocation4], 256, 256, 16
        $region20: #{tpu_custom_call.1} parent=11 // pred_fallthru
          _
        // Predicated region
        $region21: #{tpu_custom_call.1} parent=11 // pred_check
          %p359 = pneg %p217
        $region22: #{tpu_custom_call.1} parent=11 // pred_check_branch
          %361 = sbr.rel (%p359) target = $region24
        $region23: #{tpu_custom_call.1} parent=11 // pred_region
          _
        $region24: #{tpu_custom_call.1} parent=11 // pred_fallthru
          _
        // Predicated region
        $region25: #{tpu_custom_call.1} parent=11 // pred_check
          %p362 = pneg %p238
        $region26: #{tpu_custom_call.1} parent=11 // pred_check_branch
          %364 = sbr.rel (%p362) target = $region28
        $region27: #{tpu_custom_call.1} parent=11 // pred_region
          _
        $region28: #{tpu_custom_call.1} parent=11 // pred_fallthru
          _
        // Predicated region
        $region29: #{tpu_custom_call.1} parent=11 // pred_check
          %p365 = pneg %p259
        $region30: #{tpu_custom_call.1} parent=11 // pred_check_branch
          %367 = sbr.rel (%p365) target = $region32
        $region31: #{tpu_custom_call.1} parent=11 // pred_region
          _
        $region32: #{tpu_custom_call.1} parent=11 // pred_fallthru
          _
      $region12: #{tpu_custom_call.1} parent=5 // pred_fallthru
        _
      %p368 = scmp.lt.s32.totalorder %s24, 2
      // Predicated region
      $region33: #{tpu_custom_call.1} parent=5 // pred_check
        %p369 = pneg %p368
      $region34: #{tpu_custom_call.1} parent=5 // pred_check_branch
        %371 = sbr.rel (%p369) target = $region36
      $region35: #{tpu_custom_call.1} parent=5 // pred_region
        // Predicated region
        $region37: #{tpu_custom_call.1} parent=35 // pred_check
          %p372 = pneg %p86
        $region38: #{tpu_custom_call.1} parent=35 // pred_check_branch
          %374 = sbr.rel (%p372) target = $region40
        $region39: #{tpu_custom_call.1} parent=35 // pred_region
          %p375 = scmp.lt.s32.totalorder %s24, 1
          %s376 = scalar_select %p375, %s24, 1
          %s377 = smul.addr %s376, 5
          %s378 = smul.addr %s377, 4
          %s379 = scalar_lea.vmem %s2, %s378
        $region40: #{tpu_custom_call.1} parent=35 // pred_fallthru
          _
        // Predicated region
        $region41: #{tpu_custom_call.1} parent=35 // pred_check
          %p380 = pneg %p112
        $region42: #{tpu_custom_call.1} parent=35 // pred_check_branch
          %382 = sbr.rel (%p380) target = $region44
        $region43: #{tpu_custom_call.1} parent=35 // pred_region
          %p383 = scmp.lt.s32.totalorder %s24, 1
          %s384 = scalar_select %p383, %s24, 1
          %s385 = scalar_lea.vmem %s3, %s384
        $region44: #{tpu_custom_call.1} parent=35 // pred_fallthru
          _
        // Predicated region
        $region45: #{tpu_custom_call.1} parent=35 // pred_check
          %p386 = pneg %p138
        $region46: #{tpu_custom_call.1} parent=35 // pred_check_branch
          %388 = sbr.rel (%p386) target = $region48
        $region47: #{tpu_custom_call.1} parent=35 // pred_region
          %p389 = scmp.lt.s32.totalorder %s24, 1
          %s390 = scalar_select %p389, %s24, 1
          %s391 = smul.addr %s390, 36
          %s392 = smul.addr %s391, 4
          %s393 = scalar_lea.vmem %s4, %s392
        $region48: #{tpu_custom_call.1} parent=35 // pred_fallthru
          _
        // Predicated region
        $region49: #{tpu_custom_call.1} parent=35 // pred_check
          %p394 = pneg %p164
        $region50: #{tpu_custom_call.1} parent=35 // pred_check_branch
          %396 = sbr.rel (%p394) target = $region52
        $region51: #{tpu_custom_call.1} parent=35 // pred_region
          %p397 = scmp.lt.s32.totalorder %s24, 1
          %s398 = scalar_select %p397, %s24, 1
          %s399 = scalar_lea.vmem %s5, %s398
        $region52: #{tpu_custom_call.1} parent=35 // pred_fallthru
          _
        // Predicated region
        $region53: #{tpu_custom_call.1} parent=35 // pred_check
          %p400 = pneg %p190
        $region54: #{tpu_custom_call.1} parent=35 // pred_check_branch
          %402 = sbr.rel (%p400) target = $region56
        $region55: #{tpu_custom_call.1} parent=35 // pred_region
          %p403 = scmp.lt.s32.totalorder %s24, 1
          %s404 = scalar_select %p403, %s24, 1
          %s405 = smul.addr %s404, 4
          %s406 = smul.addr %s405, 8
          %s407 = scalar_lea.vmem %s6, %s406
        $region56: #{tpu_custom_call.1} parent=35 // pred_fallthru
          _
      $region36: #{tpu_custom_call.1} parent=5 // pred_fallthru
        _
      %p408 = scmp.le.s32.totalorder 1, %s24
      %p409 = scmp.lt.s32.totalorder %s24, 3
      %p410 = pnand %p408, %p409
      %p411 = pneg %p410
      // Predicated region
      $region57: #{tpu_custom_call.1} parent=5 // pred_check
        _
      $region58: #{tpu_custom_call.1} parent=5 // pred_check_branch
        %413 = sbr.rel (%p410) target = $region60
      $region59: #{tpu_custom_call.1} parent=5 // pred_region
        %s414 = ssub.s32 %s24, 1
        // Predicated region
        $region61: #{tpu_custom_call.1} parent=59 // pred_check
          %p415 = pneg %p66
        $region62: #{tpu_custom_call.1} parent=59 // pred_check_branch
          %417 = sbr.rel (%p415) target = $region64
        $region63: #{tpu_custom_call.1} parent=59 // pred_region
          %419 = dma.done [#allocation4], 10240
        $region64: #{tpu_custom_call.1} parent=59 // pred_fallthru
          _
        %p420 = pneg %p45
        %p421 = pneg %p42
        %p422 = pneg %p66
        %p423 = pneg %p63
        %p424 = scmp.lt.s32.totalorder %s29, 1
        %s425 = scalar_select %p424, %s29, 1
        %s426 = smul.addr %s425, 5
        %s427 = smul.addr %s426, 4
        %s428 = scalar_lea.vmem %s2, %s427
        %p429 = pneg %p92
        %p430 = pneg %p89
        %p431 = scmp.lt.s32.totalorder %s29, 1
        %s432 = scalar_select %p431, %s29, 1
        %s433 = scalar_lea.vmem %s3, %s432
        %p434 = pneg %p118
        %p435 = pneg %p115
        %p436 = scmp.lt.s32.totalorder %s29, 1
        %s437 = scalar_select %p436, %s29, 1
        %s438 = smul.addr %s437, 36
        %s439 = smul.addr %s438, 4
        %s440 = scalar_lea.vmem %s4, %s439
        %p441 = pneg %p144
        %p442 = pneg %p141
        %p443 = scmp.lt.s32.totalorder %s29, 1
        %s444 = scalar_select %p443, %s29, 1
        %s445 = scalar_lea.vmem %s5, %s444
        %p446 = pneg %p170
        %p447 = pneg %p167
        %p448 = scmp.lt.s32.totalorder %s29, 1
        %s449 = scalar_select %p448, %s29, 1
        %s450 = smul.addr %s449, 4
        %s451 = smul.addr %s450, 8
        %s452 = scalar_lea.vmem %s6, %s451
        %p453 = pneg %p196
        %p454 = pneg %p193
        %p455 = pneg %p217
        %p456 = pneg %p214
        %p457 = pneg %p238
        %p458 = pneg %p235
        %p459 = pneg %p259
        %p460 = pneg %p256
        %p461 = pneg %p285
        %p462 = pneg %p282
        %s463 = sand.u32 %s272, 1
        %s464 = scalar_lea.sflag [#allocation5], %s463
        %s465 = sand.u32 %s272, 1
        %s466 = smul.addr %s465, 2
        %s467 = scalar_lea.vmem [#allocation6], %s466
        %p468 = pneg %p306
        %p469 = pneg %p303
        %p470 = pneg %p327
        %p471 = pneg %p324
        %p472 = scmp.lt.s32.totalorder %s29, 1
        %s473 = scalar_select %p472, %s29, 1
        %s474 = smul.addr %s473, 5
        %s475 = smul.addr %s474, 4
        %s476 = scalar_lea.vmem %s2, %s475
        %p477 = scmp.lt.s32.totalorder %s29, 1
        %s478 = scalar_select %p477, %s29, 1
        %s479 = scalar_lea.vmem %s3, %s478
        %p480 = scmp.lt.s32.totalorder %s29, 1
        %s481 = scalar_select %p480, %s29, 1
        %s482 = smul.addr %s481, 36
        %s483 = smul.addr %s482, 4
        %s484 = scalar_lea.vmem %s4, %s483
        %p485 = scmp.lt.s32.totalorder %s29, 1
        %s486 = scalar_select %p485, %s29, 1
        %s487 = scalar_lea.vmem %s5, %s486
        %p488 = scmp.lt.s32.totalorder %s29, 1
        %s489 = scalar_select %p488, %s29, 1
        %s490 = smul.addr %s489, 4
        %s491 = smul.addr %s490, 8
        %s492 = scalar_lea.vmem %s6, %s491
        %v494 = vld [vmem:[%s0] sm:$0xf]
        %v495 = vld [vmem:[%s0 + $0x4] sm:$0xf]
        %v496 = vld [vmem:[%s0 + $0x8] sm:$0xf]
        %v497 = vld [vmem:[%s0 + $0xc] sm:$0xf]
        %v498 = vld [vmem:[%s0 + $0x10] sm:$0xf]
        %v499 = vld [vmem:[%s0 + $0x14] sm:$0xf]
        %v500 = vld [vmem:[%s0 + $0x18] sm:$0xf]
        %v501 = vld [vmem:[%s0 + $0x1c] sm:$0xf]
        %v502 = vld [vmem:[%s0 + $0x20] sm:$0xf]
        %v503 = vld [vmem:[%s0 + $0x24] sm:$0xf]
        %v504 = vld [vmem:[%s0 + $0x28] sm:$0xf]
        %v505 = vld [vmem:[%s0 + $0x2c] sm:$0xf]
        %v506 = vld [vmem:[%s0 + $0x30] sm:$0xf]
        %v507 = vld [vmem:[%s0 + $0x34] sm:$0xf]
        %v508 = vld [vmem:[%s0 + $0x38] sm:$0xf]
        %v509 = vld [vmem:[%s0 + $0x3c] sm:$0xf]
        %v510 = vld [vmem:[%s0 + $0x40] sm:$0xf]
        %v511 = vld [vmem:[%s0 + $0x44] sm:$0xf]
        %v512 = vld [vmem:[%s0 + $0x48] sm:$0xf]
        %v513 = vld [vmem:[%s0 + $0x4c] sm:$0xf]
        %v514 = vld [vmem:[%s0 + $0x50] sm:$0xf]
        %v515 = vld [vmem:[%s0 + $0x54] sm:$0xf]
        %v516 = vld [vmem:[%s0 + $0x58] sm:$0xf]
        %v517 = vld [vmem:[%s0 + $0x5c] sm:$0xf]
        %v518 = vld [vmem:[%s0 + $0x60] sm:$0xf]
        %v519 = vld [vmem:[%s0 + $0x64] sm:$0xf]
        %v520 = vld [vmem:[%s0 + $0x68] sm:$0xf]
        %v521 = vld [vmem:[%s0 + $0x6c] sm:$0xf]
        %v522 = vld [vmem:[%s0 + $0x70] sm:$0xf]
        %v523 = vld [vmem:[%s0 + $0x74] sm:$0xf]
        %v524 = vld [vmem:[%s0 + $0x78] sm:$0xf]
        %v525 = vld [vmem:[%s0 + $0x7c] sm:$0xf]
        %v526 = vld [vmem:[%s0 + $0x80] sm:$0xf]
        %v527 = vld [vmem:[%s0 + $0x84] sm:$0xf]
        %v528 = vld [vmem:[%s0 + $0x88] sm:$0xf]
        %v529 = vld [vmem:[%s0 + $0x8c] sm:$0xf]
        %v530 = vld [vmem:[%s0 + $0x90] sm:$0xf]
        %v531 = vld [vmem:[%s0 + $0x94] sm:$0xf]
        %v532 = vld [vmem:[%s0 + $0x98] sm:$0xf]
        %v533 = vld [vmem:[%s0 + $0x9c] sm:$0xf]
        %v534 = vld [vmem:[%s0 + $0xa0] sm:$0xf]
        %v535 = vld [vmem:[%s0 + $0xa4] sm:$0xf]
        %v536 = vld [vmem:[%s0 + $0xa8] sm:$0xf]
        %v537 = vld [vmem:[%s0 + $0xac] sm:$0xf]
        %v538 = vld [vmem:[%s0 + $0xb0] sm:$0xf]
        %v539 = vld [vmem:[%s0 + $0xb4] sm:$0xf]
        %v540 = vld [vmem:[%s0 + $0xb8] sm:$0xf]
        %v541 = vld [vmem:[%s0 + $0xbc] sm:$0xf]
        %v542 = vld [vmem:[%s0 + $0xc0] sm:$0xf]
        %v543 = vld [vmem:[%s0 + $0xc4] sm:$0xf]
        %v544 = vld [vmem:[%s0 + $0xc8] sm:$0xf]
        %v545 = vld [vmem:[%s0 + $0xcc] sm:$0xf]
        %v546 = vld [vmem:[%s0 + $0xd0] sm:$0xf]
        %v547 = vld [vmem:[%s0 + $0xd4] sm:$0xf]
        %v548 = vld [vmem:[%s0 + $0xd8] sm:$0xf]
        %v549 = vld [vmem:[%s0 + $0xdc] sm:$0xf]
        %v550 = vld [vmem:[%s0 + $0xe0] sm:$0xf]
        %v551 = vld [vmem:[%s0 + $0xe4] sm:$0xf]
        %v552 = vld [vmem:[%s0 + $0xe8] sm:$0xf]
        %v553 = vld [vmem:[%s0 + $0xec] sm:$0xf]
        %v554 = vld [vmem:[%s0 + $0xf0] sm:$0xf]
        %v555 = vld [vmem:[%s0 + $0xf4] sm:$0xf]
        %v556 = vld [vmem:[%s0 + $0xf8] sm:$0xf]
        %v557 = vld [vmem:[%s0 + $0xfc] sm:$0xf]
        %v558 = vld [vmem:[%s476] sm:$0xf]
        %v559 = vld [vmem:[%s476 + $0x4] sm:$0xf]
        %v560 = vld [vmem:[%s476 + $0x8] sm:$0xf]
        %v561 = vld [vmem:[%s476 + $0xc] sm:$0xf]
        %v562 = vld [vmem:[%s476 + $0x10] sm:$0x3]
        %v563 = vld [vmem:[%s479] sm:$0x1]
        %v565 = vperm.slane %v563, 0
        %v631 = vunpack.c.l.b16 %v494
        %v632 = vunpack.c.l.b16 %v495
        %v633 = vunpack.c.l.b16 %v496
        %v634 = vunpack.c.l.b16 %v497
        %v635 = vunpack.c.l.b16 %v498
        %v636 = vunpack.c.l.b16 %v499
        %v637 = vunpack.c.l.b16 %v500
        %v638 = vunpack.c.l.b16 %v501
        %v639 = vunpack.c.l.b16 %v502
        %v640 = vunpack.c.l.b16 %v503
        %v641 = vunpack.c.l.b16 %v504
        %v642 = vunpack.c.l.b16 %v505
        %v643 = vunpack.c.l.b16 %v506
        %v644 = vunpack.c.l.b16 %v507
        %v645 = vunpack.c.l.b16 %v508
        %v646 = vunpack.c.l.b16 %v509
        %v647 = vunpack.c.l.b16 %v510
        %v648 = vunpack.c.l.b16 %v511
        %v649 = vunpack.c.l.b16 %v512
        %v650 = vunpack.c.l.b16 %v513
        %v651 = vunpack.c.l.b16 %v514
        %v652 = vunpack.c.l.b16 %v515
        %v653 = vunpack.c.l.b16 %v516
        %v654 = vunpack.c.l.b16 %v517
        %v655 = vunpack.c.l.b16 %v518
        %v656 = vunpack.c.l.b16 %v519
        %v657 = vunpack.c.l.b16 %v520
        %v658 = vunpack.c.l.b16 %v521
        %v659 = vunpack.c.l.b16 %v522
        %v660 = vunpack.c.l.b16 %v523
        %v661 = vunpack.c.l.b16 %v524
        %v662 = vunpack.c.l.b16 %v525
        %v663 = vunpack.c.l.b16 %v526
        %v664 = vunpack.c.l.b16 %v527
        %v665 = vunpack.c.l.b16 %v528
        %v666 = vunpack.c.l.b16 %v529
        %v667 = vunpack.c.l.b16 %v530
        %v668 = vunpack.c.l.b16 %v531
        %v669 = vunpack.c.l.b16 %v532
        %v670 = vunpack.c.l.b16 %v533
        %v671 = vunpack.c.l.b16 %v534
        %v672 = vunpack.c.l.b16 %v535
        %v673 = vunpack.c.l.b16 %v536
        %v674 = vunpack.c.l.b16 %v537
        %v675 = vunpack.c.l.b16 %v538
        %v676 = vunpack.c.l.b16 %v539
        %v677 = vunpack.c.l.b16 %v540
        %v678 = vunpack.c.l.b16 %v541
        %v679 = vunpack.c.l.b16 %v542
        %v680 = vunpack.c.l.b16 %v543
        %v681 = vunpack.c.l.b16 %v544
        %v682 = vunpack.c.l.b16 %v545
        %v683 = vunpack.c.l.b16 %v546
        %v684 = vunpack.c.l.b16 %v547
        %v685 = vunpack.c.l.b16 %v548
        %v686 = vunpack.c.l.b16 %v549
        %v687 = vunpack.c.l.b16 %v550
        %v688 = vunpack.c.l.b16 %v551
        %v689 = vunpack.c.l.b16 %v552
        %v690 = vunpack.c.l.b16 %v553
        %v691 = vunpack.c.l.b16 %v554
        %v692 = vunpack.c.l.b16 %v555
        %v693 = vunpack.c.l.b16 %v556
        %v694 = vunpack.c.l.b16 %v557
        %v695 = vpack.c.b16 %v632, %v631
        %v696 = vpack.c.b16 %v634, %v633
        %v697 = vpack.c.b16 %v636, %v635
        %v698 = vpack.c.b16 %v638, %v637
        %v699 = vpack.c.b16 %v640, %v639
        %v700 = vpack.c.b16 %v642, %v641
        %v701 = vpack.c.b16 %v644, %v643
        %v702 = vpack.c.b16 %v646, %v645
        %v703 = vpack.c.b16 %v648, %v647
        %v704 = vpack.c.b16 %v650, %v649
        %v705 = vpack.c.b16 %v652, %v651
        %v706 = vpack.c.b16 %v654, %v653
        %v707 = vpack.c.b16 %v656, %v655
        %v708 = vpack.c.b16 %v658, %v657
        %v709 = vpack.c.b16 %v660, %v659
        %v710 = vpack.c.b16 %v662, %v661
        %v711 = vpack.c.b16 %v664, %v663
        %v712 = vpack.c.b16 %v666, %v665
        %v713 = vpack.c.b16 %v668, %v667
        %v714 = vpack.c.b16 %v670, %v669
        %v715 = vpack.c.b16 %v672, %v671
        %v716 = vpack.c.b16 %v674, %v673
        %v717 = vpack.c.b16 %v676, %v675
        %v718 = vpack.c.b16 %v678, %v677
        %v719 = vpack.c.b16 %v680, %v679
        %v720 = vpack.c.b16 %v682, %v681
        %v721 = vpack.c.b16 %v684, %v683
        %v722 = vpack.c.b16 %v686, %v685
        %v723 = vpack.c.b16 %v688, %v687
        %v724 = vpack.c.b16 %v690, %v689
        %v725 = vpack.c.b16 %v692, %v691
        %v726 = vpack.c.b16 %v694, %v693
        %v732 = vunpack.c.l.b16 %v558
        %v733 = vunpack.c.l.b16 %v559
        %v734 = vunpack.c.l.b16 %v560
        %v735 = vunpack.c.l.b16 %v561
        %v736 = vunpack.c.l.b16 %v562
        %v737 = vpack.c.b16 %v733, %v732
        %v738 = vpack.c.b16 %v735, %v734
        %v739 = vpack.c.b16 %v736, %v736
        %vm742 = vcmask 293888
        %v744 = vsel %vm742, %v695, 0
        %v747 = vsel %vm742, %v696, 0
        %v750 = vsel %vm742, %v697, 0
        %v753 = vsel %vm742, %v698, 0
        %v756 = vsel %vm742, %v699, 0
        %v759 = vsel %vm742, %v700, 0
        %v762 = vsel %vm742, %v701, 0
        %v765 = vsel %vm742, %v702, 0
        %v768 = vsel %vm742, %v703, 0
        %v771 = vsel %vm742, %v704, 0
        %v774 = vsel %vm742, %v705, 0
        %v777 = vsel %vm742, %v706, 0
        %v780 = vsel %vm742, %v707, 0
        %v783 = vsel %vm742, %v708, 0
        %v786 = vsel %vm742, %v709, 0
        %v789 = vsel %vm742, %v710, 0
        %v792 = vsel %vm742, %v711, 0
        %v795 = vsel %vm742, %v712, 0
        %v798 = vsel %vm742, %v713, 0
        %v801 = vsel %vm742, %v714, 0
        %v804 = vsel %vm742, %v715, 0
        %v807 = vsel %vm742, %v716, 0
        %v810 = vsel %vm742, %v717, 0
        %v813 = vsel %vm742, %v718, 0
        %v816 = vsel %vm742, %v719, 0
        %v819 = vsel %vm742, %v720, 0
        %v822 = vsel %vm742, %v721, 0
        %v825 = vsel %vm742, %v722, 0
        %v828 = vsel %vm742, %v723, 0
        %v831 = vsel %vm742, %v724, 0
        %v834 = vsel %vm742, %v725, 0
        %v837 = vsel %vm742, %v726, 0
        %vm839 = vcmask 1041408
        %v841 = vsel %vm839, %v739, 0
        %843 = vmatpush.bf16.msra.mxu0 0
        %844 = vmatpush.bf16.msra.mxu0 0
        %845 = vmatpush.bf16.msra.mxu0 0
        %846 = vmatpush.bf16.msra.mxu0 0
        %847 = vmatpush.bf16.msra.mxu0 0
        %848 = vmatpush.bf16.msra.mxu0 %v841
        %849 = vmatpush.bf16.msra.mxu0 %v738
        %850 = vmatpush.bf16.msra.mxu0 %v737
        %851 = vmatmul.bf16.gmra.mxu0 %v744
        %v852 = vpop.f32.mrf.mxu0
        %v853 = vadd.f32 %v565, %v852
        %v854 = vpop.f32.mrf.mxu0
        %v855 = vadd.f32 %v565, %v854
        %856 = vmatmul.bf16.gmra.mxu0 %v747
        %v857 = vpop.f32.mrf.mxu0
        %v858 = vadd.f32 %v565, %v857
        %v859 = vpop.f32.mrf.mxu0
        %v860 = vadd.f32 %v565, %v859
        %861 = vmatmul.bf16.gmra.mxu0 %v750
        %v862 = vpop.f32.mrf.mxu0
        %v863 = vadd.f32 %v565, %v862
        %v864 = vpop.f32.mrf.mxu0
        %v865 = vadd.f32 %v565, %v864
        %866 = vmatmul.bf16.gmra.mxu0 %v753
        %v867 = vpop.f32.mrf.mxu0
        %v868 = vadd.f32 %v565, %v867
        %v869 = vpop.f32.mrf.mxu0
        %v870 = vadd.f32 %v565, %v869
        %871 = vmatmul.bf16.gmra.mxu0 %v756
        %v872 = vpop.f32.mrf.mxu0
        %v873 = vadd.f32 %v565, %v872
        %v874 = vpop.f32.mrf.mxu0
        %v875 = vadd.f32 %v565, %v874
        %876 = vmatmul.bf16.gmra.mxu0 %v759
        %v877 = vpop.f32.mrf.mxu0
        %v878 = vadd.f32 %v565, %v877
        %v879 = vpop.f32.mrf.mxu0
        %v880 = vadd.f32 %v565, %v879
        %881 = vmatmul.bf16.gmra.mxu0 %v762
        %v882 = vpop.f32.mrf.mxu0
        %v883 = vadd.f32 %v565, %v882
        %v884 = vpop.f32.mrf.mxu0
        %v885 = vadd.f32 %v565, %v884
        %886 = vmatmul.bf16.gmra.mxu0 %v765
        %v887 = vpop.f32.mrf.mxu0
        %v888 = vadd.f32 %v565, %v887
        %v889 = vpop.f32.mrf.mxu0
        %v890 = vadd.f32 %v565, %v889
        %891 = vmatmul.bf16.gmra.mxu0 %v768
        %v892 = vpop.f32.mrf.mxu0
        %v893 = vadd.f32 %v565, %v892
        %v894 = vpop.f32.mrf.mxu0
        %v895 = vadd.f32 %v565, %v894
        %896 = vmatmul.bf16.gmra.mxu0 %v771
        %v897 = vpop.f32.mrf.mxu0
        %v898 = vadd.f32 %v565, %v897
        %v899 = vpop.f32.mrf.mxu0
        %v900 = vadd.f32 %v565, %v899
        %901 = vmatmul.bf16.gmra.mxu0 %v774
        %v902 = vpop.f32.mrf.mxu0
        %v903 = vadd.f32 %v565, %v902
        %v904 = vpop.f32.mrf.mxu0
        %v905 = vadd.f32 %v565, %v904
        %906 = vmatmul.bf16.gmra.mxu0 %v777
        %v907 = vpop.f32.mrf.mxu0
        %v908 = vadd.f32 %v565, %v907
        %v909 = vpop.f32.mrf.mxu0
        %v910 = vadd.f32 %v565, %v909
        %911 = vmatmul.bf16.gmra.mxu0 %v780
        %v912 = vpop.f32.mrf.mxu0
        %v913 = vadd.f32 %v565, %v912
        %v914 = vpop.f32.mrf.mxu0
        %v915 = vadd.f32 %v565, %v914
        %916 = vmatmul.bf16.gmra.mxu0 %v783
        %v917 = vpop.f32.mrf.mxu0
        %v918 = vadd.f32 %v565, %v917
        %v919 = vpop.f32.mrf.mxu0
        %v920 = vadd.f32 %v565, %v919
        %921 = vmatmul.bf16.gmra.mxu0 %v786
        %v922 = vpop.f32.mrf.mxu0
        %v923 = vadd.f32 %v565, %v922
        %v924 = vpop.f32.mrf.mxu0
        %v925 = vadd.f32 %v565, %v924
        %926 = vmatmul.bf16.gmra.mxu0 %v789
        %v927 = vpop.f32.mrf.mxu0
        %v928 = vadd.f32 %v565, %v927
        %v929 = vpop.f32.mrf.mxu0
        %v930 = vadd.f32 %v565, %v929
        %931 = vmatmul.bf16.gmra.mxu0 %v792
        %v932 = vpop.f32.mrf.mxu0
        %v933 = vadd.f32 %v565, %v932
        %v934 = vpop.f32.mrf.mxu0
        %v935 = vadd.f32 %v565, %v934
        %936 = vmatmul.bf16.gmra.mxu0 %v795
        %v937 = vpop.f32.mrf.mxu0
        %v938 = vadd.f32 %v565, %v937
        %v939 = vpop.f32.mrf.mxu0
        %v940 = vadd.f32 %v565, %v939
        %941 = vmatmul.bf16.gmra.mxu0 %v798
        %v942 = vpop.f32.mrf.mxu0
        %v943 = vadd.f32 %v565, %v942
        %v944 = vpop.f32.mrf.mxu0
        %v945 = vadd.f32 %v565, %v944
        %946 = vmatmul.bf16.gmra.mxu0 %v801
        %v947 = vpop.f32.mrf.mxu0
        %v948 = vadd.f32 %v565, %v947
        %v949 = vpop.f32.mrf.mxu0
        %v950 = vadd.f32 %v565, %v949
        %951 = vmatmul.bf16.gmra.mxu0 %v804
        %v952 = vpop.f32.mrf.mxu0
        %v953 = vadd.f32 %v565, %v952
        %v954 = vpop.f32.mrf.mxu0
        %v955 = vadd.f32 %v565, %v954
        %956 = vmatmul.bf16.gmra.mxu0 %v807
        %v957 = vpop.f32.mrf.mxu0
        %v958 = vadd.f32 %v565, %v957
        %v959 = vpop.f32.mrf.mxu0
        %v960 = vadd.f32 %v565, %v959
        %961 = vmatmul.bf16.gmra.mxu0 %v810
        %v962 = vpop.f32.mrf.mxu0
        %v963 = vadd.f32 %v565, %v962
        %v964 = vpop.f32.mrf.mxu0
        %v965 = vadd.f32 %v565, %v964
        %966 = vmatmul.bf16.gmra.mxu0 %v813
        %v967 = vpop.f32.mrf.mxu0
        %v968 = vadd.f32 %v565, %v967
        %v969 = vpop.f32.mrf.mxu0
        %v970 = vadd.f32 %v565, %v969
        %971 = vmatmul.bf16.gmra.mxu0 %v816
        %v972 = vpop.f32.mrf.mxu0
        %v973 = vadd.f32 %v565, %v972
        %v974 = vpop.f32.mrf.mxu0
        %v975 = vadd.f32 %v565, %v974
        %976 = vmatmul.bf16.gmra.mxu0 %v819
        %v977 = vpop.f32.mrf.mxu0
        %v978 = vadd.f32 %v565, %v977
        %v979 = vpop.f32.mrf.mxu0
        %v980 = vadd.f32 %v565, %v979
        %981 = vmatmul.bf16.gmra.mxu0 %v822
        %v982 = vpop.f32.mrf.mxu0
        %v983 = vadd.f32 %v565, %v982
        %v984 = vpop.f32.mrf.mxu0
        %v985 = vadd.f32 %v565, %v984
        %986 = vmatmul.bf16.gmra.mxu0 %v825
        %v987 = vpop.f32.mrf.mxu0
        %v988 = vadd.f32 %v565, %v987
        %v989 = vpop.f32.mrf.mxu0
        %v990 = vadd.f32 %v565, %v989
        %991 = vmatmul.bf16.gmra.mxu0 %v828
        %v992 = vpop.f32.mrf.mxu0
        %v993 = vadd.f32 %v565, %v992
        %v994 = vpop.f32.mrf.mxu0
        %v995 = vadd.f32 %v565, %v994
        %996 = vmatmul.bf16.gmra.mxu0 %v831
        %v997 = vpop.f32.mrf.mxu0
        %v998 = vadd.f32 %v565, %v997
        %v999 = vpop.f32.mrf.mxu0
        %v1000 = vadd.f32 %v565, %v999
        %1001 = vmatmul.bf16.gmra.mxu0 %v834
        %v1002 = vpop.f32.mrf.mxu0
        %v1003 = vadd.f32 %v565, %v1002
        %v1004 = vpop.f32.mrf.mxu0
        %v1005 = vadd.f32 %v565, %v1004
        %1006 = vmatmul.bf16.gmra.mxu0 %v837
        %v1007 = vpop.f32.mrf.mxu0
        %v1008 = vadd.f32 %v565, %v1007
        %v1009 = vpop.f32.mrf.mxu0
        %v1010 = vadd.f32 %v565, %v1009
        %1011 = vdwg.mxu0
        %v1012 = vmax.f32 %v853, 0.0
        %v1013 = vmax.f32 %v855, 0.0
        %v1014 = vmax.f32 %v858, 0.0
        %v1015 = vmax.f32 %v860, 0.0
        %v1016 = vmax.f32 %v863, 0.0
        %v1017 = vmax.f32 %v865, 0.0
        %v1018 = vmax.f32 %v868, 0.0
        %v1019 = vmax.f32 %v870, 0.0
        %v1020 = vmax.f32 %v873, 0.0
        %v1021 = vmax.f32 %v875, 0.0
        %v1022 = vmax.f32 %v878, 0.0
        %v1023 = vmax.f32 %v880, 0.0
        %v1024 = vmax.f32 %v883, 0.0
        %v1025 = vmax.f32 %v885, 0.0
        %v1026 = vmax.f32 %v888, 0.0
        %v1027 = vmax.f32 %v890, 0.0
        %v1028 = vmax.f32 %v893, 0.0
        %v1029 = vmax.f32 %v895, 0.0
        %v1030 = vmax.f32 %v898, 0.0
        %v1031 = vmax.f32 %v900, 0.0
        %v1032 = vmax.f32 %v903, 0.0
        %v1033 = vmax.f32 %v905, 0.0
        %v1034 = vmax.f32 %v908, 0.0
        %v1035 = vmax.f32 %v910, 0.0
        %v1036 = vmax.f32 %v913, 0.0
        %v1037 = vmax.f32 %v915, 0.0
        %v1038 = vmax.f32 %v918, 0.0
        %v1039 = vmax.f32 %v920, 0.0
        %v1040 = vmax.f32 %v923, 0.0
        %v1041 = vmax.f32 %v925, 0.0
        %v1042 = vmax.f32 %v928, 0.0
        %v1043 = vmax.f32 %v930, 0.0
        %v1044 = vmax.f32 %v933, 0.0
        %v1045 = vmax.f32 %v935, 0.0
        %v1046 = vmax.f32 %v938, 0.0
        %v1047 = vmax.f32 %v940, 0.0
        %v1048 = vmax.f32 %v943, 0.0
        %v1049 = vmax.f32 %v945, 0.0
        %v1050 = vmax.f32 %v948, 0.0
        %v1051 = vmax.f32 %v950, 0.0
        %v1052 = vmax.f32 %v953, 0.0
        %v1053 = vmax.f32 %v955, 0.0
        %v1054 = vmax.f32 %v958, 0.0
        %v1055 = vmax.f32 %v960, 0.0
        %v1056 = vmax.f32 %v963, 0.0
        %v1057 = vmax.f32 %v965, 0.0
        %v1058 = vmax.f32 %v968, 0.0
        %v1059 = vmax.f32 %v970, 0.0
        %v1060 = vmax.f32 %v973, 0.0
        %v1061 = vmax.f32 %v975, 0.0
        %v1062 = vmax.f32 %v978, 0.0
        %v1063 = vmax.f32 %v980, 0.0
        %v1064 = vmax.f32 %v983, 0.0
        %v1065 = vmax.f32 %v985, 0.0
        %v1066 = vmax.f32 %v988, 0.0
        %v1067 = vmax.f32 %v990, 0.0
        %v1068 = vmax.f32 %v993, 0.0
        %v1069 = vmax.f32 %v995, 0.0
        %v1070 = vmax.f32 %v998, 0.0
        %v1071 = vmax.f32 %v1000, 0.0
        %v1072 = vmax.f32 %v1003, 0.0
        %v1073 = vmax.f32 %v1005, 0.0
        %v1074 = vmax.f32 %v1008, 0.0
        %v1075 = vmax.f32 %v1010, 0.0
        %v1076 = vpack.c.bf16 %v1013, %v1012
        %v1077 = vpack.c.bf16 %v1015, %v1014
        %v1078 = vpack.c.bf16 %v1017, %v1016
        %v1079 = vpack.c.bf16 %v1019, %v1018
        %v1080 = vpack.c.bf16 %v1021, %v1020
        %v1081 = vpack.c.bf16 %v1023, %v1022
        %v1082 = vpack.c.bf16 %v1025, %v1024
        %v1083 = vpack.c.bf16 %v1027, %v1026
        %v1084 = vpack.c.bf16 %v1029, %v1028
        %v1085 = vpack.c.bf16 %v1031, %v1030
        %v1086 = vpack.c.bf16 %v1033, %v1032
        %v1087 = vpack.c.bf16 %v1035, %v1034
        %v1088 = vpack.c.bf16 %v1037, %v1036
        %v1089 = vpack.c.bf16 %v1039, %v1038
        %v1090 = vpack.c.bf16 %v1041, %v1040
        %v1091 = vpack.c.bf16 %v1043, %v1042
        %v1092 = vpack.c.bf16 %v1045, %v1044
        %v1093 = vpack.c.bf16 %v1047, %v1046
        %v1094 = vpack.c.bf16 %v1049, %v1048
        %v1095 = vpack.c.bf16 %v1051, %v1050
        %v1096 = vpack.c.bf16 %v1053, %v1052
        %v1097 = vpack.c.bf16 %v1055, %v1054
        %v1098 = vpack.c.bf16 %v1057, %v1056
        %v1099 = vpack.c.bf16 %v1059, %v1058
        %v1100 = vpack.c.bf16 %v1061, %v1060
        %v1101 = vpack.c.bf16 %v1063, %v1062
        %v1102 = vpack.c.bf16 %v1065, %v1064
        %v1103 = vpack.c.bf16 %v1067, %v1066
        %v1104 = vpack.c.bf16 %v1069, %v1068
        %v1105 = vpack.c.bf16 %v1071, %v1070
        %v1106 = vpack.c.bf16 %v1073, %v1072
        %v1107 = vpack.c.bf16 %v1075, %v1074
        %v1108 = vld [vmem:[#allocation3] sm:$0xff]
        %v1109 = vld [vmem:[#allocation3 + $0x8] sm:$0xff]
        %v1110 = vld [vmem:[#allocation3 + $0x10] sm:$0xff]
        %v1111 = vld [vmem:[#allocation3 + $0x18] sm:$0xff]
        %v1112 = vld [vmem:[#allocation3 + $0x20] sm:$0xff]
        %v1113 = vld [vmem:[#allocation3 + $0x28] sm:$0xff]
        %v1114 = vld [vmem:[#allocation3 + $0x30] sm:$0xff]
        %v1115 = vld [vmem:[#allocation3 + $0x38] sm:$0xff]
        %v1116 = vld [vmem:[#allocation3 + $0x40] sm:$0xff]
        %v1117 = vld [vmem:[#allocation3 + $0x48] sm:$0xff]
        %v1118 = vld [vmem:[#allocation3 + $0x50] sm:$0xff]
        %v1119 = vld [vmem:[#allocation3 + $0x58] sm:$0xff]
        %v1120 = vld [vmem:[#allocation3 + $0x60] sm:$0xff]
        %v1121 = vld [vmem:[#allocation3 + $0x68] sm:$0xff]
        %v1122 = vld [vmem:[#allocation3 + $0x70] sm:$0xff]
        %v1123 = vld [vmem:[#allocation3 + $0x78] sm:$0xff]
        %v1124 = vld [vmem:[#allocation3 + $0x80] sm:$0xff]
        %v1125 = vld [vmem:[#allocation3 + $0x88] sm:$0xff]
        %v1126 = vld [vmem:[#allocation3 + $0x90] sm:$0xff]
        %v1127 = vld [vmem:[#allocation3 + $0x98] sm:$0xff]
        %v1128 = vld [vmem:[#allocation3 + $0xa0] sm:$0xff]
        %v1129 = vld [vmem:[#allocation3 + $0xa8] sm:$0xff]
        %v1130 = vld [vmem:[#allocation3 + $0xb0] sm:$0xff]
        %v1131 = vld [vmem:[#allocation3 + $0xb8] sm:$0xff]
        %v1132 = vld [vmem:[#allocation3 + $0xc0] sm:$0xff]
        %v1133 = vld [vmem:[#allocation3 + $0xc8] sm:$0xff]
        %v1134 = vld [vmem:[#allocation3 + $0xd0] sm:$0xff]
        %v1135 = vld [vmem:[#allocation3 + $0xd8] sm:$0xff]
        %v1136 = vld [vmem:[#allocation3 + $0xe0] sm:$0xff]
        %v1137 = vld [vmem:[#allocation3 + $0xe8] sm:$0xff]
        %v1138 = vld [vmem:[#allocation3 + $0xf0] sm:$0xff]
        %v1139 = vld [vmem:[#allocation3 + $0xf8] sm:$0xff]
        %v1140 = vld [vmem:[#allocation3 + $0x100] sm:$0xff]
        %v1141 = vld [vmem:[#allocation3 + $0x108] sm:$0xff]
        %v1142 = vld [vmem:[#allocation3 + $0x110] sm:$0xff]
        %v1143 = vld [vmem:[#allocation3 + $0x118] sm:$0xff]
        %v1144 = vld [vmem:[#allocation3 + $0x120] sm:$0xff]
        %v1145 = vld [vmem:[#allocation3 + $0x128] sm:$0xff]
        %v1146 = vld [vmem:[#allocation3 + $0x130] sm:$0xff]
        %v1147 = vld [vmem:[#allocation3 + $0x138] sm:$0xff]
        %v1148 = vld [vmem:[#allocation3 + $0x140] sm:$0xff]
        %v1149 = vld [vmem:[#allocation3 + $0x148] sm:$0xff]
        %v1150 = vld [vmem:[#allocation3 + $0x150] sm:$0xff]
        %v1151 = vld [vmem:[#allocation3 + $0x158] sm:$0xff]
        %v1152 = vld [vmem:[#allocation3 + $0x160] sm:$0xff]
        %v1153 = vld [vmem:[#allocation3 + $0x168] sm:$0xff]
        %v1154 = vld [vmem:[#allocation3 + $0x170] sm:$0xff]
        %v1155 = vld [vmem:[#allocation3 + $0x178] sm:$0xff]
        %v1156 = vld [vmem:[#allocation3 + $0x180] sm:$0xff]
        %v1157 = vld [vmem:[#allocation3 + $0x188] sm:$0xff]
        %v1158 = vld [vmem:[#allocation3 + $0x190] sm:$0xff]
        %v1159 = vld [vmem:[#allocation3 + $0x198] sm:$0xff]
        %v1160 = vld [vmem:[#allocation3 + $0x1a0] sm:$0xff]
        %v1161 = vld [vmem:[#allocation3 + $0x1a8] sm:$0xff]
        %v1162 = vld [vmem:[#allocation3 + $0x1b0] sm:$0xff]
        %v1163 = vld [vmem:[#allocation3 + $0x1b8] sm:$0xff]
        %v1164 = vld [vmem:[#allocation3 + $0x1c0] sm:$0xff]
        %v1165 = vld [vmem:[#allocation3 + $0x1c8] sm:$0xff]
        %v1166 = vld [vmem:[#allocation3 + $0x1d0] sm:$0xff]
        %v1167 = vld [vmem:[#allocation3 + $0x1d8] sm:$0xff]
        %v1168 = vld [vmem:[#allocation3 + $0x1e0] sm:$0xff]
        %v1169 = vld [vmem:[#allocation3 + $0x1e8] sm:$0xff]
        %v1170 = vld [vmem:[#allocation3 + $0x1f0] sm:$0xff]
        %v1171 = vld [vmem:[#allocation3 + $0x1f8] sm:$0xff]
        %v1172 = vld [vmem:[#allocation3 + $0x200] sm:$0xff]
        %v1173 = vld [vmem:[#allocation3 + $0x208] sm:$0xff]
        %v1174 = vld [vmem:[#allocation3 + $0x210] sm:$0xff]
        %v1175 = vld [vmem:[#allocation3 + $0x218] sm:$0xff]
        %v1176 = vld [vmem:[#allocation3 + $0x220] sm:$0xff]
        %v1177 = vld [vmem:[#allocation3 + $0x228] sm:$0xff]
        %v1178 = vld [vmem:[#allocation3 + $0x230] sm:$0xff]
        %v1179 = vld [vmem:[#allocation3 + $0x238] sm:$0xff]
        %v1180 = vld [vmem:[#allocation3 + $0x240] sm:$0xff]
        %v1181 = vld [vmem:[#allocation3 + $0x248] sm:$0xff]
        %v1182 = vld [vmem:[#allocation3 + $0x250] sm:$0xff]
        %v1183 = vld [vmem:[#allocation3 + $0x258] sm:$0xff]
        %v1184 = vld [vmem:[#allocation3 + $0x260] sm:$0xff]
        %v1185 = vld [vmem:[#allocation3 + $0x268] sm:$0xff]
        %v1186 = vld [vmem:[#allocation3 + $0x270] sm:$0xff]
        %v1187 = vld [vmem:[#allocation3 + $0x278] sm:$0xff]
        %v1268 = vunpack.c.l.b16 %v1108
        %v1269 = vunpack.c.h.b16 %v1108
        %v1270 = vunpack.c.l.b16 %v1109
        %v1271 = vunpack.c.h.b16 %v1109
        %v1272 = vunpack.c.l.b16 %v1110
        %v1273 = vunpack.c.h.b16 %v1110
        %v1274 = vunpack.c.l.b16 %v1111
        %v1275 = vunpack.c.h.b16 %v1111
        %v1276 = vunpack.c.l.b16 %v1112
        %v1277 = vunpack.c.h.b16 %v1112
        %v1278 = vunpack.c.l.b16 %v1113
        %v1279 = vunpack.c.h.b16 %v1113
        %v1280 = vunpack.c.l.b16 %v1114
        %v1281 = vunpack.c.h.b16 %v1114
        %v1282 = vunpack.c.l.b16 %v1115
        %v1283 = vunpack.c.h.b16 %v1115
        %v1284 = vunpack.c.l.b16 %v1116
        %v1285 = vunpack.c.h.b16 %v1116
        %v1286 = vunpack.c.l.b16 %v1117
        %v1287 = vunpack.c.h.b16 %v1117
        %v1288 = vunpack.c.l.b16 %v1118
        %v1289 = vunpack.c.h.b16 %v1118
        %v1290 = vunpack.c.l.b16 %v1119
        %v1291 = vunpack.c.h.b16 %v1119
        %v1292 = vunpack.c.l.b16 %v1120
        %v1293 = vunpack.c.h.b16 %v1120
        %v1294 = vunpack.c.l.b16 %v1121
        %v1295 = vunpack.c.h.b16 %v1121
        %v1296 = vunpack.c.l.b16 %v1122
        %v1297 = vunpack.c.h.b16 %v1122
        %v1298 = vunpack.c.l.b16 %v1123
        %v1299 = vunpack.c.h.b16 %v1123
        %v1300 = vunpack.c.l.b16 %v1124
        %v1301 = vunpack.c.h.b16 %v1124
        %v1302 = vunpack.c.l.b16 %v1125
        %v1303 = vunpack.c.h.b16 %v1125
        %v1304 = vunpack.c.l.b16 %v1126
        %v1305 = vunpack.c.h.b16 %v1126
        %v1306 = vunpack.c.l.b16 %v1127
        %v1307 = vunpack.c.h.b16 %v1127
        %v1308 = vunpack.c.l.b16 %v1128
        %v1309 = vunpack.c.h.b16 %v1128
        %v1310 = vunpack.c.l.b16 %v1129
        %v1311 = vunpack.c.h.b16 %v1129
        %v1312 = vunpack.c.l.b16 %v1130
        %v1313 = vunpack.c.h.b16 %v1130
        %v1314 = vunpack.c.l.b16 %v1131
        %v1315 = vunpack.c.h.b16 %v1131
        %v1316 = vunpack.c.l.b16 %v1132
        %v1317 = vunpack.c.h.b16 %v1132
        %v1318 = vunpack.c.l.b16 %v1133
        %v1319 = vunpack.c.h.b16 %v1133
        %v1320 = vunpack.c.l.b16 %v1134
        %v1321 = vunpack.c.h.b16 %v1134
        %v1322 = vunpack.c.l.b16 %v1135
        %v1323 = vunpack.c.h.b16 %v1135
        %v1324 = vunpack.c.l.b16 %v1136
        %v1325 = vunpack.c.h.b16 %v1136
        %v1326 = vunpack.c.l.b16 %v1137
        %v1327 = vunpack.c.h.b16 %v1137
        %v1328 = vunpack.c.l.b16 %v1138
        %v1329 = vunpack.c.h.b16 %v1138
        %v1330 = vunpack.c.l.b16 %v1139
        %v1331 = vunpack.c.h.b16 %v1139
        %v1332 = vunpack.c.l.b16 %v1140
        %v1333 = vunpack.c.h.b16 %v1140
        %v1334 = vunpack.c.l.b16 %v1141
        %v1335 = vunpack.c.h.b16 %v1141
        %v1336 = vunpack.c.l.b16 %v1142
        %v1337 = vunpack.c.h.b16 %v1142
        %v1338 = vunpack.c.l.b16 %v1143
        %v1339 = vunpack.c.h.b16 %v1143
        %v1340 = vunpack.c.l.b16 %v1144
        %v1341 = vunpack.c.h.b16 %v1144
        %v1342 = vunpack.c.l.b16 %v1145
        %v1343 = vunpack.c.h.b16 %v1145
        %v1344 = vunpack.c.l.b16 %v1146
        %v1345 = vunpack.c.h.b16 %v1146
        %v1346 = vunpack.c.l.b16 %v1147
        %v1347 = vunpack.c.h.b16 %v1147
        %v1348 = vunpack.c.l.b16 %v1148
        %v1349 = vunpack.c.h.b16 %v1148
        %v1350 = vunpack.c.l.b16 %v1149
        %v1351 = vunpack.c.h.b16 %v1149
        %v1352 = vunpack.c.l.b16 %v1150
        %v1353 = vunpack.c.h.b16 %v1150
        %v1354 = vunpack.c.l.b16 %v1151
        %v1355 = vunpack.c.h.b16 %v1151
        %v1356 = vunpack.c.l.b16 %v1152
        %v1357 = vunpack.c.h.b16 %v1152
        %v1358 = vunpack.c.l.b16 %v1153
        %v1359 = vunpack.c.h.b16 %v1153
        %v1360 = vunpack.c.l.b16 %v1154
        %v1361 = vunpack.c.h.b16 %v1154
        %v1362 = vunpack.c.l.b16 %v1155
        %v1363 = vunpack.c.h.b16 %v1155
        %v1364 = vunpack.c.l.b16 %v1156
        %v1365 = vunpack.c.h.b16 %v1156
        %v1366 = vunpack.c.l.b16 %v1157
        %v1367 = vunpack.c.h.b16 %v1157
        %v1368 = vunpack.c.l.b16 %v1158
        %v1369 = vunpack.c.h.b16 %v1158
        %v1370 = vunpack.c.l.b16 %v1159
        %v1371 = vunpack.c.h.b16 %v1159
        %v1372 = vunpack.c.l.b16 %v1160
        %v1373 = vunpack.c.h.b16 %v1160
        %v1374 = vunpack.c.l.b16 %v1161
        %v1375 = vunpack.c.h.b16 %v1161
        %v1376 = vunpack.c.l.b16 %v1162
        %v1377 = vunpack.c.h.b16 %v1162
        %v1378 = vunpack.c.l.b16 %v1163
        %v1379 = vunpack.c.h.b16 %v1163
        %v1380 = vunpack.c.l.b16 %v1164
        %v1381 = vunpack.c.h.b16 %v1164
        %v1382 = vunpack.c.l.b16 %v1165
        %v1383 = vunpack.c.h.b16 %v1165
        %v1384 = vunpack.c.l.b16 %v1166
        %v1385 = vunpack.c.h.b16 %v1166
        %v1386 = vunpack.c.l.b16 %v1167
        %v1387 = vunpack.c.h.b16 %v1167
        %v1388 = vunpack.c.l.b16 %v1168
        %v1389 = vunpack.c.h.b16 %v1168
        %v1390 = vunpack.c.l.b16 %v1169
        %v1391 = vunpack.c.h.b16 %v1169
        %v1392 = vunpack.c.l.b16 %v1170
        %v1393 = vunpack.c.h.b16 %v1170
        %v1394 = vunpack.c.l.b16 %v1171
        %v1395 = vunpack.c.h.b16 %v1171
        %v1396 = vunpack.c.l.b16 %v1172
        %v1397 = vunpack.c.h.b16 %v1172
        %v1398 = vunpack.c.l.b16 %v1173
        %v1399 = vunpack.c.h.b16 %v1173
        %v1400 = vunpack.c.l.b16 %v1174
        %v1401 = vunpack.c.h.b16 %v1174
        %v1402 = vunpack.c.l.b16 %v1175
        %v1403 = vunpack.c.h.b16 %v1175
        %v1404 = vunpack.c.l.b16 %v1176
        %v1405 = vunpack.c.h.b16 %v1176
        %v1406 = vunpack.c.l.b16 %v1177
        %v1407 = vunpack.c.h.b16 %v1177
        %v1408 = vunpack.c.l.b16 %v1178
        %v1409 = vunpack.c.h.b16 %v1178
        %v1410 = vunpack.c.l.b16 %v1179
        %v1411 = vunpack.c.h.b16 %v1179
        %v1412 = vunpack.c.l.b16 %v1180
        %v1413 = vunpack.c.h.b16 %v1180
        %v1414 = vunpack.c.l.b16 %v1181
        %v1415 = vunpack.c.h.b16 %v1181
        %v1416 = vunpack.c.l.b16 %v1182
        %v1417 = vunpack.c.h.b16 %v1182
        %v1418 = vunpack.c.l.b16 %v1183
        %v1419 = vunpack.c.h.b16 %v1183
        %v1420 = vunpack.c.l.b16 %v1184
        %v1421 = vunpack.c.h.b16 %v1184
        %v1422 = vunpack.c.l.b16 %v1185
        %v1423 = vunpack.c.h.b16 %v1185
        %v1424 = vunpack.c.l.b16 %v1186
        %v1425 = vunpack.c.h.b16 %v1186
        %v1426 = vunpack.c.l.b16 %v1187
        %v1427 = vunpack.c.h.b16 %v1187
        %v1428 = vpack.c.b16 %v1272, %v1268
        %v1429 = vpack.c.b16 %v1273, %v1269
        %v1430 = vpack.c.b16 %v1274, %v1270
        %v1431 = vpack.c.b16 %v1275, %v1271
        %v1432 = vpack.c.b16 %v1280, %v1276
        %v1433 = vpack.c.b16 %v1281, %v1277
        %v1434 = vpack.c.b16 %v1282, %v1278
        %v1435 = vpack.c.b16 %v1283, %v1279
        %v1436 = vpack.c.b16 %v1288, %v1284
        %v1437 = vpack.c.b16 %v1289, %v1285
        %v1438 = vpack.c.b16 %v1290, %v1286
        %v1439 = vpack.c.b16 %v1291, %v1287
        %v1440 = vpack.c.b16 %v1296, %v1292
        %v1441 = vpack.c.b16 %v1297, %v1293
        %v1442 = vpack.c.b16 %v1298, %v1294
        %v1443 = vpack.c.b16 %v1299, %v1295
        %v1444 = vpack.c.b16 %v1304, %v1300
        %v1445 = vpack.c.b16 %v1305, %v1301
        %v1446 = vpack.c.b16 %v1306, %v1302
        %v1447 = vpack.c.b16 %v1307, %v1303
        %v1448 = vpack.c.b16 %v1312, %v1308
        %v1449 = vpack.c.b16 %v1313, %v1309
        %v1450 = vpack.c.b16 %v1314, %v1310
        %v1451 = vpack.c.b16 %v1315, %v1311
        %v1452 = vpack.c.b16 %v1320, %v1316
        %v1453 = vpack.c.b16 %v1321, %v1317
        %v1454 = vpack.c.b16 %v1322, %v1318
        %v1455 = vpack.c.b16 %v1323, %v1319
        %v1456 = vpack.c.b16 %v1328, %v1324
        %v1457 = vpack.c.b16 %v1329, %v1325
        %v1458 = vpack.c.b16 %v1330, %v1326
        %v1459 = vpack.c.b16 %v1331, %v1327
        %v1460 = vpack.c.b16 %v1336, %v1332
        %v1461 = vpack.c.b16 %v1337, %v1333
        %v1462 = vpack.c.b16 %v1338, %v1334
        %v1463 = vpack.c.b16 %v1339, %v1335
        %v1464 = vpack.c.b16 %v1344, %v1340
        %v1465 = vpack.c.b16 %v1345, %v1341
        %v1466 = vpack.c.b16 %v1346, %v1342
        %v1467 = vpack.c.b16 %v1347, %v1343
        %v1468 = vpack.c.b16 %v1352, %v1348
        %v1469 = vpack.c.b16 %v1353, %v1349
        %v1470 = vpack.c.b16 %v1354, %v1350
        %v1471 = vpack.c.b16 %v1355, %v1351
        %v1472 = vpack.c.b16 %v1360, %v1356
        %v1473 = vpack.c.b16 %v1361, %v1357
        %v1474 = vpack.c.b16 %v1362, %v1358
        %v1475 = vpack.c.b16 %v1363, %v1359
        %v1476 = vpack.c.b16 %v1368, %v1364
        %v1477 = vpack.c.b16 %v1369, %v1365
        %v1478 = vpack.c.b16 %v1370, %v1366
        %v1479 = vpack.c.b16 %v1371, %v1367
        %v1480 = vpack.c.b16 %v1376, %v1372
        %v1481 = vpack.c.b16 %v1377, %v1373
        %v1482 = vpack.c.b16 %v1378, %v1374
        %v1483 = vpack.c.b16 %v1379, %v1375
        %v1484 = vpack.c.b16 %v1384, %v1380
        %v1485 = vpack.c.b16 %v1385, %v1381
        %v1486 = vpack.c.b16 %v1386, %v1382
        %v1487 = vpack.c.b16 %v1387, %v1383
        %v1488 = vpack.c.b16 %v1392, %v1388
        %v1489 = vpack.c.b16 %v1393, %v1389
        %v1490 = vpack.c.b16 %v1394, %v1390
        %v1491 = vpack.c.b16 %v1395, %v1391
        %v1492 = vpack.c.b16 %v1400, %v1396
        %v1493 = vpack.c.b16 %v1401, %v1397
        %v1494 = vpack.c.b16 %v1402, %v1398
        %v1495 = vpack.c.b16 %v1403, %v1399
        %v1496 = vpack.c.b16 %v1408, %v1404
        %v1497 = vpack.c.b16 %v1409, %v1405
        %v1498 = vpack.c.b16 %v1410, %v1406
        %v1499 = vpack.c.b16 %v1411, %v1407
        %v1500 = vpack.c.b16 %v1416, %v1412
        %v1501 = vpack.c.b16 %v1417, %v1413
        %v1502 = vpack.c.b16 %v1418, %v1414
        %v1503 = vpack.c.b16 %v1419, %v1415
        %v1504 = vpack.c.b16 %v1424, %v1420
        %v1505 = vpack.c.b16 %v1425, %v1421
        %v1506 = vpack.c.b16 %v1426, %v1422
        %v1507 = vpack.c.b16 %v1427, %v1423
        %1588 = vmatpush.bf16.msra.mxu0 %v1083
        %1589 = vmatpush.bf16.msra.mxu0 %v1082
        %1590 = vmatpush.bf16.msra.mxu0 %v1081
        %1591 = vmatpush.bf16.msra.mxu0 %v1080
        %1592 = vmatpush.bf16.msra.mxu0 %v1079
        %1593 = vmatpush.bf16.msra.mxu0 %v1078
        %1594 = vmatpush.bf16.msra.mxu0 %v1077
        %1595 = vmatpush.bf16.msra.mxu0 %v1076
        %1596 = vmatmul.bf16.gmra.mxu0 %v1428
        %v1597 = vpop.f32.mrf.mxu0
        %v1598 = vadd.f32 0.0, %v1597
        %v1599 = vpop.f32.mrf.mxu0
        %v1600 = vadd.f32 0.0, %v1599
        %1601 = vmatmul.bf16.gmra.mxu0 %v1432
        %v1602 = vpop.f32.mrf.mxu0
        %v1603 = vadd.f32 0.0, %v1602
        %v1604 = vpop.f32.mrf.mxu0
        %v1605 = vadd.f32 0.0, %v1604
        %1606 = vmatmul.bf16.gmra.mxu0 %v1436
        %v1607 = vpop.f32.mrf.mxu0
        %v1608 = vadd.f32 0.0, %v1607
        %v1609 = vpop.f32.mrf.mxu0
        %v1610 = vadd.f32 0.0, %v1609
        %1611 = vmatmul.bf16.gmra.mxu0 %v1440
        %v1612 = vpop.f32.mrf.mxu0
        %v1613 = vadd.f32 0.0, %v1612
        %v1614 = vpop.f32.mrf.mxu0
        %v1615 = vadd.f32 0.0, %v1614
        %1616 = vmatmul.bf16.gmra.mxu0 %v1444
        %v1617 = vpop.f32.mrf.mxu0
        %v1618 = vadd.f32 0.0, %v1617
        %v1619 = vpop.f32.mrf.mxu0
        %v1620 = vadd.f32 0.0, %v1619
        %1621 = vmatmul.bf16.gmra.mxu0 %v1448
        %v1622 = vpop.f32.mrf.mxu0
        %v1623 = vadd.f32 0.0, %v1622
        %v1624 = vpop.f32.mrf.mxu0
        %v1625 = vadd.f32 0.0, %v1624
        %1626 = vmatmul.bf16.gmra.mxu0 %v1452
        %v1627 = vpop.f32.mrf.mxu0
        %v1628 = vadd.f32 0.0, %v1627
        %v1629 = vpop.f32.mrf.mxu0
        %v1630 = vadd.f32 0.0, %v1629
        %1631 = vmatmul.bf16.gmra.mxu0 %v1456
        %v1632 = vpop.f32.mrf.mxu0
        %v1633 = vadd.f32 0.0, %v1632
        %v1634 = vpop.f32.mrf.mxu0
        %v1635 = vadd.f32 0.0, %v1634
        %1636 = vmatmul.bf16.gmra.mxu0 %v1460
        %v1637 = vpop.f32.mrf.mxu0
        %v1638 = vadd.f32 0.0, %v1637
        %v1639 = vpop.f32.mrf.mxu0
        %v1640 = vadd.f32 0.0, %v1639
        %1641 = vmatmul.bf16.gmra.mxu0 %v1464
        %v1642 = vpop.f32.mrf.mxu0
        %v1643 = vadd.f32 0.0, %v1642
        %v1644 = vpop.f32.mrf.mxu0
        %v1645 = vadd.f32 0.0, %v1644
        %1646 = vmatmul.bf16.gmra.mxu0 %v1468
        %v1647 = vpop.f32.mrf.mxu0
        %v1648 = vadd.f32 0.0, %v1647
        %v1649 = vpop.f32.mrf.mxu0
        %v1650 = vadd.f32 0.0, %v1649
        %1651 = vmatmul.bf16.gmra.mxu0 %v1472
        %v1652 = vpop.f32.mrf.mxu0
        %v1653 = vadd.f32 0.0, %v1652
        %v1654 = vpop.f32.mrf.mxu0
        %v1655 = vadd.f32 0.0, %v1654
        %1656 = vmatmul.bf16.gmra.mxu0 %v1476
        %v1657 = vpop.f32.mrf.mxu0
        %v1658 = vadd.f32 0.0, %v1657
        %v1659 = vpop.f32.mrf.mxu0
        %v1660 = vadd.f32 0.0, %v1659
        %1661 = vmatmul.bf16.gmra.mxu0 %v1480
        %v1662 = vpop.f32.mrf.mxu0
        %v1663 = vadd.f32 0.0, %v1662
        %v1664 = vpop.f32.mrf.mxu0
        %v1665 = vadd.f32 0.0, %v1664
        %1666 = vmatmul.bf16.gmra.mxu0 %v1484
        %v1667 = vpop.f32.mrf.mxu0
        %v1668 = vadd.f32 0.0, %v1667
        %v1669 = vpop.f32.mrf.mxu0
        %v1670 = vadd.f32 0.0, %v1669
        %1671 = vmatmul.bf16.gmra.mxu0 %v1488
        %v1672 = vpop.f32.mrf.mxu0
        %v1673 = vadd.f32 0.0, %v1672
        %v1674 = vpop.f32.mrf.mxu0
        %v1675 = vadd.f32 0.0, %v1674
        %1676 = vmatmul.bf16.gmra.mxu0 %v1492
        %v1677 = vpop.f32.mrf.mxu0
        %v1678 = vadd.f32 0.0, %v1677
        %v1679 = vpop.f32.mrf.mxu0
        %v1680 = vadd.f32 0.0, %v1679
        %1681 = vmatmul.bf16.gmra.mxu0 %v1496
        %v1682 = vpop.f32.mrf.mxu0
        %v1683 = vadd.f32 0.0, %v1682
        %v1684 = vpop.f32.mrf.mxu0
        %v1685 = vadd.f32 0.0, %v1684
        %1686 = vmatmul.bf16.gmra.mxu0 %v1500
        %v1687 = vpop.f32.mrf.mxu0
        %v1688 = vadd.f32 0.0, %v1687
        %v1689 = vpop.f32.mrf.mxu0
        %v1690 = vadd.f32 0.0, %v1689
        %1691 = vmatmul.bf16.gmra.mxu0 %v1504
        %v1692 = vpop.f32.mrf.mxu0
        %v1693 = vadd.f32 0.0, %v1692
        %v1694 = vpop.f32.mrf.mxu0
        %v1695 = vadd.f32 0.0, %v1694
        %1696 = vdwg.mxu0
        %1697 = vmatpush.bf16.msra.mxu0 %v1091
        %1698 = vmatpush.bf16.msra.mxu0 %v1090
        %1699 = vmatpush.bf16.msra.mxu0 %v1089
        %1700 = vmatpush.bf16.msra.mxu0 %v1088
        %1701 = vmatpush.bf16.msra.mxu0 %v1087
        %1702 = vmatpush.bf16.msra.mxu0 %v1086
        %1703 = vmatpush.bf16.msra.mxu0 %v1085
        %1704 = vmatpush.bf16.msra.mxu0 %v1084
        %1705 = vmatmul.bf16.gmra.mxu0 %v1429
        %v1706 = vpop.f32.mrf.mxu0
        %v1707 = vadd.f32 %v1598, %v1706
        %v1708 = vpop.f32.mrf.mxu0
        %v1709 = vadd.f32 %v1600, %v1708
        %1710 = vmatmul.bf16.gmra.mxu0 %v1433
        %v1711 = vpop.f32.mrf.mxu0
        %v1712 = vadd.f32 %v1603, %v1711
        %v1713 = vpop.f32.mrf.mxu0
        %v1714 = vadd.f32 %v1605, %v1713
        %1715 = vmatmul.bf16.gmra.mxu0 %v1437
        %v1716 = vpop.f32.mrf.mxu0
        %v1717 = vadd.f32 %v1608, %v1716
        %v1718 = vpop.f32.mrf.mxu0
        %v1719 = vadd.f32 %v1610, %v1718
        %1720 = vmatmul.bf16.gmra.mxu0 %v1441
        %v1721 = vpop.f32.mrf.mxu0
        %v1722 = vadd.f32 %v1613, %v1721
        %v1723 = vpop.f32.mrf.mxu0
        %v1724 = vadd.f32 %v1615, %v1723
        %1725 = vmatmul.bf16.gmra.mxu0 %v1445
        %v1726 = vpop.f32.mrf.mxu0
        %v1727 = vadd.f32 %v1618, %v1726
        %v1728 = vpop.f32.mrf.mxu0
        %v1729 = vadd.f32 %v1620, %v1728
        %1730 = vmatmul.bf16.gmra.mxu0 %v1449
        %v1731 = vpop.f32.mrf.mxu0
        %v1732 = vadd.f32 %v1623, %v1731
        %v1733 = vpop.f32.mrf.mxu0
        %v1734 = vadd.f32 %v1625, %v1733
        %1735 = vmatmul.bf16.gmra.mxu0 %v1453
        %v1736 = vpop.f32.mrf.mxu0
        %v1737 = vadd.f32 %v1628, %v1736
        %v1738 = vpop.f32.mrf.mxu0
        %v1739 = vadd.f32 %v1630, %v1738
        %1740 = vmatmul.bf16.gmra.mxu0 %v1457
        %v1741 = vpop.f32.mrf.mxu0
        %v1742 = vadd.f32 %v1633, %v1741
        %v1743 = vpop.f32.mrf.mxu0
        %v1744 = vadd.f32 %v1635, %v1743
        %1745 = vmatmul.bf16.gmra.mxu0 %v1461
        %v1746 = vpop.f32.mrf.mxu0
        %v1747 = vadd.f32 %v1638, %v1746
        %v1748 = vpop.f32.mrf.mxu0
        %v1749 = vadd.f32 %v1640, %v1748
        %1750 = vmatmul.bf16.gmra.mxu0 %v1465
        %v1751 = vpop.f32.mrf.mxu0
        %v1752 = vadd.f32 %v1643, %v1751
        %v1753 = vpop.f32.mrf.mxu0
        %v1754 = vadd.f32 %v1645, %v1753
        %1755 = vmatmul.bf16.gmra.mxu0 %v1469
        %v1756 = vpop.f32.mrf.mxu0
        %v1757 = vadd.f32 %v1648, %v1756
        %v1758 = vpop.f32.mrf.mxu0
        %v1759 = vadd.f32 %v1650, %v1758
        %1760 = vmatmul.bf16.gmra.mxu0 %v1473
        %v1761 = vpop.f32.mrf.mxu0
        %v1762 = vadd.f32 %v1653, %v1761
        %v1763 = vpop.f32.mrf.mxu0
        %v1764 = vadd.f32 %v1655, %v1763
        %1765 = vmatmul.bf16.gmra.mxu0 %v1477
        %v1766 = vpop.f32.mrf.mxu0
        %v1767 = vadd.f32 %v1658, %v1766
        %v1768 = vpop.f32.mrf.mxu0
        %v1769 = vadd.f32 %v1660, %v1768
        %1770 = vmatmul.bf16.gmra.mxu0 %v1481
        %v1771 = vpop.f32.mrf.mxu0
        %v1772 = vadd.f32 %v1663, %v1771
        %v1773 = vpop.f32.mrf.mxu0
        %v1774 = vadd.f32 %v1665, %v1773
        %1775 = vmatmul.bf16.gmra.mxu0 %v1485
        %v1776 = vpop.f32.mrf.mxu0
        %v1777 = vadd.f32 %v1668, %v1776
        %v1778 = vpop.f32.mrf.mxu0
        %v1779 = vadd.f32 %v1670, %v1778
        %1780 = vmatmul.bf16.gmra.mxu0 %v1489
        %v1781 = vpop.f32.mrf.mxu0
        %v1782 = vadd.f32 %v1673, %v1781
        %v1783 = vpop.f32.mrf.mxu0
        %v1784 = vadd.f32 %v1675, %v1783
        %1785 = vmatmul.bf16.gmra.mxu0 %v1493
        %v1786 = vpop.f32.mrf.mxu0
        %v1787 = vadd.f32 %v1678, %v1786
        %v1788 = vpop.f32.mrf.mxu0
        %v1789 = vadd.f32 %v1680, %v1788
        %1790 = vmatmul.bf16.gmra.mxu0 %v1497
        %v1791 = vpop.f32.mrf.mxu0
        %v1792 = vadd.f32 %v1683, %v1791
        %v1793 = vpop.f32.mrf.mxu0
        %v1794 = vadd.f32 %v1685, %v1793
        %1795 = vmatmul.bf16.gmra.mxu0 %v1501
        %v1796 = vpop.f32.mrf.mxu0
        %v1797 = vadd.f32 %v1688, %v1796
        %v1798 = vpop.f32.mrf.mxu0
        %v1799 = vadd.f32 %v1690, %v1798
        %1800 = vmatmul.bf16.gmra.mxu0 %v1505
        %v1801 = vpop.f32.mrf.mxu0
        %v1802 = vadd.f32 %v1693, %v1801
        %v1803 = vpop.f32.mrf.mxu0
        %v1804 = vadd.f32 %v1695, %v1803
        %1805 = vdwg.mxu0
        %1806 = vmatpush.bf16.msra.mxu0 %v1099
        %1807 = vmatpush.bf16.msra.mxu0 %v1098
        %1808 = vmatpush.bf16.msra.mxu0 %v1097
        %1809 = vmatpush.bf16.msra.mxu0 %v1096
        %1810 = vmatpush.bf16.msra.mxu0 %v1095
        %1811 = vmatpush.bf16.msra.mxu0 %v1094
        %1812 = vmatpush.bf16.msra.mxu0 %v1093
        %1813 = vmatpush.bf16.msra.mxu0 %v1092
        %1814 = vmatmul.bf16.gmra.mxu0 %v1430
        %v1815 = vpop.f32.mrf.mxu0
        %v1816 = vadd.f32 %v1707, %v1815
        %v1817 = vpop.f32.mrf.mxu0
        %v1818 = vadd.f32 %v1709, %v1817
        %1819 = vmatmul.bf16.gmra.mxu0 %v1434
        %v1820 = vpop.f32.mrf.mxu0
        %v1821 = vadd.f32 %v1712, %v1820
        %v1822 = vpop.f32.mrf.mxu0
        %v1823 = vadd.f32 %v1714, %v1822
        %1824 = vmatmul.bf16.gmra.mxu0 %v1438
        %v1825 = vpop.f32.mrf.mxu0
        %v1826 = vadd.f32 %v1717, %v1825
        %v1827 = vpop.f32.mrf.mxu0
        %v1828 = vadd.f32 %v1719, %v1827
        %1829 = vmatmul.bf16.gmra.mxu0 %v1442
        %v1830 = vpop.f32.mrf.mxu0
        %v1831 = vadd.f32 %v1722, %v1830
        %v1832 = vpop.f32.mrf.mxu0
        %v1833 = vadd.f32 %v1724, %v1832
        %1834 = vmatmul.bf16.gmra.mxu0 %v1446
        %v1835 = vpop.f32.mrf.mxu0
        %v1836 = vadd.f32 %v1727, %v1835
        %v1837 = vpop.f32.mrf.mxu0
        %v1838 = vadd.f32 %v1729, %v1837
        %1839 = vmatmul.bf16.gmra.mxu0 %v1450
        %v1840 = vpop.f32.mrf.mxu0
        %v1841 = vadd.f32 %v1732, %v1840
        %v1842 = vpop.f32.mrf.mxu0
        %v1843 = vadd.f32 %v1734, %v1842
        %1844 = vmatmul.bf16.gmra.mxu0 %v1454
        %v1845 = vpop.f32.mrf.mxu0
        %v1846 = vadd.f32 %v1737, %v1845
        %v1847 = vpop.f32.mrf.mxu0
        %v1848 = vadd.f32 %v1739, %v1847
        %1849 = vmatmul.bf16.gmra.mxu0 %v1458
        %v1850 = vpop.f32.mrf.mxu0
        %v1851 = vadd.f32 %v1742, %v1850
        %v1852 = vpop.f32.mrf.mxu0
        %v1853 = vadd.f32 %v1744, %v1852
        %1854 = vmatmul.bf16.gmra.mxu0 %v1462
        %v1855 = vpop.f32.mrf.mxu0
        %v1856 = vadd.f32 %v1747, %v1855
        %v1857 = vpop.f32.mrf.mxu0
        %v1858 = vadd.f32 %v1749, %v1857
        %1859 = vmatmul.bf16.gmra.mxu0 %v1466
        %v1860 = vpop.f32.mrf.mxu0
        %v1861 = vadd.f32 %v1752, %v1860
        %v1862 = vpop.f32.mrf.mxu0
        %v1863 = vadd.f32 %v1754, %v1862
        %1864 = vmatmul.bf16.gmra.mxu0 %v1470
        %v1865 = vpop.f32.mrf.mxu0
        %v1866 = vadd.f32 %v1757, %v1865
        %v1867 = vpop.f32.mrf.mxu0
        %v1868 = vadd.f32 %v1759, %v1867
        %1869 = vmatmul.bf16.gmra.mxu0 %v1474
        %v1870 = vpop.f32.mrf.mxu0
        %v1871 = vadd.f32 %v1762, %v1870
        %v1872 = vpop.f32.mrf.mxu0
        %v1873 = vadd.f32 %v1764, %v1872
        %1874 = vmatmul.bf16.gmra.mxu0 %v1478
        %v1875 = vpop.f32.mrf.mxu0
        %v1876 = vadd.f32 %v1767, %v1875
        %v1877 = vpop.f32.mrf.mxu0
        %v1878 = vadd.f32 %v1769, %v1877
        %1879 = vmatmul.bf16.gmra.mxu0 %v1482
        %v1880 = vpop.f32.mrf.mxu0
        %v1881 = vadd.f32 %v1772, %v1880
        %v1882 = vpop.f32.mrf.mxu0
        %v1883 = vadd.f32 %v1774, %v1882
        %1884 = vmatmul.bf16.gmra.mxu0 %v1486
        %v1885 = vpop.f32.mrf.mxu0
        %v1886 = vadd.f32 %v1777, %v1885
        %v1887 = vpop.f32.mrf.mxu0
        %v1888 = vadd.f32 %v1779, %v1887
        %1889 = vmatmul.bf16.gmra.mxu0 %v1490
        %v1890 = vpop.f32.mrf.mxu0
        %v1891 = vadd.f32 %v1782, %v1890
        %v1892 = vpop.f32.mrf.mxu0
        %v1893 = vadd.f32 %v1784, %v1892
        %1894 = vmatmul.bf16.gmra.mxu0 %v1494
        %v1895 = vpop.f32.mrf.mxu0
        %v1896 = vadd.f32 %v1787, %v1895
        %v1897 = vpop.f32.mrf.mxu0
        %v1898 = vadd.f32 %v1789, %v1897
        %1899 = vmatmul.bf16.gmra.mxu0 %v1498
        %v1900 = vpop.f32.mrf.mxu0
        %v1901 = vadd.f32 %v1792, %v1900
        %v1902 = vpop.f32.mrf.mxu0
        %v1903 = vadd.f32 %v1794, %v1902
        %1904 = vmatmul.bf16.gmra.mxu0 %v1502
        %v1905 = vpop.f32.mrf.mxu0
        %v1906 = vadd.f32 %v1797, %v1905
        %v1907 = vpop.f32.mrf.mxu0
        %v1908 = vadd.f32 %v1799, %v1907
        %1909 = vmatmul.bf16.gmra.mxu0 %v1506
        %v1910 = vpop.f32.mrf.mxu0
        %v1911 = vadd.f32 %v1802, %v1910
        %v1912 = vpop.f32.mrf.mxu0
        %v1913 = vadd.f32 %v1804, %v1912
        %1914 = vdwg.mxu0
        %1915 = vmatpush.bf16.msra.mxu0 %v1107
        %1916 = vmatpush.bf16.msra.mxu0 %v1106
        %1917 = vmatpush.bf16.msra.mxu0 %v1105
        %1918 = vmatpush.bf16.msra.mxu0 %v1104
        %1919 = vmatpush.bf16.msra.mxu0 %v1103
        %1920 = vmatpush.bf16.msra.mxu0 %v1102
        %1921 = vmatpush.bf16.msra.mxu0 %v1101
        %1922 = vmatpush.bf16.msra.mxu0 %v1100
        %1923 = vmatmul.bf16.gmra.mxu0 %v1431
        %v1924 = vpop.f32.mrf.mxu0
        %v1925 = vadd.f32 %v1816, %v1924
        %v1926 = vpop.f32.mrf.mxu0
        %v1927 = vadd.f32 %v1818, %v1926
        %1928 = vmatmul.bf16.gmra.mxu0 %v1435
        %v1929 = vpop.f32.mrf.mxu0
        %v1930 = vadd.f32 %v1821, %v1929
        %v1931 = vpop.f32.mrf.mxu0
        %v1932 = vadd.f32 %v1823, %v1931
        %1933 = vmatmul.bf16.gmra.mxu0 %v1439
        %v1934 = vpop.f32.mrf.mxu0
        %v1935 = vadd.f32 %v1826, %v1934
        %v1936 = vpop.f32.mrf.mxu0
        %v1937 = vadd.f32 %v1828, %v1936
        %1938 = vmatmul.bf16.gmra.mxu0 %v1443
        %v1939 = vpop.f32.mrf.mxu0
        %v1940 = vadd.f32 %v1831, %v1939
        %v1941 = vpop.f32.mrf.mxu0
        %v1942 = vadd.f32 %v1833, %v1941
        %1943 = vmatmul.bf16.gmra.mxu0 %v1447
        %v1944 = vpop.f32.mrf.mxu0
        %v1945 = vadd.f32 %v1836, %v1944
        %v1946 = vpop.f32.mrf.mxu0
        %v1947 = vadd.f32 %v1838, %v1946
        %1948 = vmatmul.bf16.gmra.mxu0 %v1451
        %v1949 = vpop.f32.mrf.mxu0
        %v1950 = vadd.f32 %v1841, %v1949
        %v1951 = vpop.f32.mrf.mxu0
        %v1952 = vadd.f32 %v1843, %v1951
        %1953 = vmatmul.bf16.gmra.mxu0 %v1455
        %v1954 = vpop.f32.mrf.mxu0
        %v1955 = vadd.f32 %v1846, %v1954
        %v1956 = vpop.f32.mrf.mxu0
        %v1957 = vadd.f32 %v1848, %v1956
        %1958 = vmatmul.bf16.gmra.mxu0 %v1459
        %v1959 = vpop.f32.mrf.mxu0
        %v1960 = vadd.f32 %v1851, %v1959
        %v1961 = vpop.f32.mrf.mxu0
        %v1962 = vadd.f32 %v1853, %v1961
        %1963 = vmatmul.bf16.gmra.mxu0 %v1463
        %v1964 = vpop.f32.mrf.mxu0
        %v1965 = vadd.f32 %v1856, %v1964
        %v1966 = vpop.f32.mrf.mxu0
        %v1967 = vadd.f32 %v1858, %v1966
        %1968 = vmatmul.bf16.gmra.mxu0 %v1467
        %v1969 = vpop.f32.mrf.mxu0
        %v1970 = vadd.f32 %v1861, %v1969
        %v1971 = vpop.f32.mrf.mxu0
        %v1972 = vadd.f32 %v1863, %v1971
        %1973 = vmatmul.bf16.gmra.mxu0 %v1471
        %v1974 = vpop.f32.mrf.mxu0
        %v1975 = vadd.f32 %v1866, %v1974
        %v1976 = vpop.f32.mrf.mxu0
        %v1977 = vadd.f32 %v1868, %v1976
        %1978 = vmatmul.bf16.gmra.mxu0 %v1475
        %v1979 = vpop.f32.mrf.mxu0
        %v1980 = vadd.f32 %v1871, %v1979
        %v1981 = vpop.f32.mrf.mxu0
        %v1982 = vadd.f32 %v1873, %v1981
        %1983 = vmatmul.bf16.gmra.mxu0 %v1479
        %v1984 = vpop.f32.mrf.mxu0
        %v1985 = vadd.f32 %v1876, %v1984
        %v1986 = vpop.f32.mrf.mxu0
        %v1987 = vadd.f32 %v1878, %v1986
        %1988 = vmatmul.bf16.gmra.mxu0 %v1483
        %v1989 = vpop.f32.mrf.mxu0
        %v1990 = vadd.f32 %v1881, %v1989
        %v1991 = vpop.f32.mrf.mxu0
        %v1992 = vadd.f32 %v1883, %v1991
        %1993 = vmatmul.bf16.gmra.mxu0 %v1487
        %v1994 = vpop.f32.mrf.mxu0
        %v1995 = vadd.f32 %v1886, %v1994
        %v1996 = vpop.f32.mrf.mxu0
        %v1997 = vadd.f32 %v1888, %v1996
        %1998 = vmatmul.bf16.gmra.mxu0 %v1491
        %v1999 = vpop.f32.mrf.mxu0
        %v2000 = vadd.f32 %v1891, %v1999
        %v2001 = vpop.f32.mrf.mxu0
        %v2002 = vadd.f32 %v1893, %v2001
        %2003 = vmatmul.bf16.gmra.mxu0 %v1495
        %v2004 = vpop.f32.mrf.mxu0
        %v2005 = vadd.f32 %v1896, %v2004
        %v2006 = vpop.f32.mrf.mxu0
        %v2007 = vadd.f32 %v1898, %v2006
        %2008 = vmatmul.bf16.gmra.mxu0 %v1499
        %v2009 = vpop.f32.mrf.mxu0
        %v2010 = vadd.f32 %v1901, %v2009
        %v2011 = vpop.f32.mrf.mxu0
        %v2012 = vadd.f32 %v1903, %v2011
        %2013 = vmatmul.bf16.gmra.mxu0 %v1503
        %v2014 = vpop.f32.mrf.mxu0
        %v2015 = vadd.f32 %v1906, %v2014
        %v2016 = vpop.f32.mrf.mxu0
        %v2017 = vadd.f32 %v1908, %v2016
        %2018 = vmatmul.bf16.gmra.mxu0 %v1507
        %v2019 = vpop.f32.mrf.mxu0
        %v2020 = vadd.f32 %v1911, %v2019
        %v2021 = vpop.f32.mrf.mxu0
        %v2022 = vadd.f32 %v1913, %v2021
        %2023 = vdwg.mxu0
        %v2024 = vpack.c.bf16 %v1925, %v1925
        %v2025 = vpack.c.bf16 %v1927, %v1927
        %v2026 = vpack.c.bf16 %v1930, %v1930
        %v2027 = vpack.c.bf16 %v1932, %v1932
        %v2028 = vpack.c.bf16 %v1935, %v1935
        %v2029 = vpack.c.bf16 %v1937, %v1937
        %v2030 = vpack.c.bf16 %v1940, %v1940
        %v2031 = vpack.c.bf16 %v1942, %v1942
        %v2032 = vpack.c.bf16 %v1945, %v1945
        %v2033 = vpack.c.bf16 %v1947, %v1947
        %v2034 = vpack.c.bf16 %v1950, %v1950
        %v2035 = vpack.c.bf16 %v1952, %v1952
        %v2036 = vpack.c.bf16 %v1955, %v1955
        %v2037 = vpack.c.bf16 %v1957, %v1957
        %v2038 = vpack.c.bf16 %v1960, %v1960
        %v2039 = vpack.c.bf16 %v1962, %v1962
        %v2040 = vpack.c.bf16 %v1965, %v1965
        %v2041 = vpack.c.bf16 %v1967, %v1967
        %v2042 = vpack.c.bf16 %v1970, %v1970
        %v2043 = vpack.c.bf16 %v1972, %v1972
        %v2044 = vpack.c.bf16 %v1975, %v1975
        %v2045 = vpack.c.bf16 %v1977, %v1977
        %v2046 = vpack.c.bf16 %v1980, %v1980
        %v2047 = vpack.c.bf16 %v1982, %v1982
        %v2048 = vpack.c.bf16 %v1985, %v1985
        %v2049 = vpack.c.bf16 %v1987, %v1987
        %v2050 = vpack.c.bf16 %v1990, %v1990
        %v2051 = vpack.c.bf16 %v1992, %v1992
        %v2052 = vpack.c.bf16 %v1995, %v1995
        %v2053 = vpack.c.bf16 %v1997, %v1997
        %v2054 = vpack.c.bf16 %v2000, %v2000
        %v2055 = vpack.c.bf16 %v2002, %v2002
        %v2056 = vpack.c.bf16 %v2005, %v2005
        %v2057 = vpack.c.bf16 %v2007, %v2007
        %v2058 = vpack.c.bf16 %v2010, %v2010
        %v2059 = vpack.c.bf16 %v2012, %v2012
        %v2060 = vpack.c.bf16 %v2015, %v2015
        %v2061 = vpack.c.bf16 %v2017, %v2017
        %v2062 = vpack.c.bf16 %v2020, %v2020
        %v2063 = vpack.c.bf16 %v2022, %v2022
        %vm2064 = vcmask 257024
        %2065 = vst.msk [vmem:[#allocation2] sm:$0xf] %vm2064, %v2024
        %2066 = vst.msk [vmem:[#allocation2 + $0xc] sm:$0xf] %vm2064, %v2026
        %2067 = vst.msk [vmem:[#allocation2 + $0x18] sm:$0xf] %vm2064, %v2028
        %2068 = vst.msk [vmem:[#allocation2 + $0x24] sm:$0xf] %vm2064, %v2030
        %2069 = vst.msk [vmem:[#allocation2 + $0x30] sm:$0xf] %vm2064, %v2032
        %2070 = vst.msk [vmem:[#allocation2 + $0x3c] sm:$0xf] %vm2064, %v2034
        %2071 = vst.msk [vmem:[#allocation2 + $0x48] sm:$0xf] %vm2064, %v2036
        %2072 = vst.msk [vmem:[#allocation2 + $0x54] sm:$0xf] %vm2064, %v2038
        %2073 = vst.msk [vmem:[#allocation2 + $0x60] sm:$0xf] %vm2064, %v2044
        %2074 = vst.msk [vmem:[#allocation2 + $0x6c] sm:$0xf] %vm2064, %v2046
        %2075 = vst.msk [vmem:[#allocation2 + $0x78] sm:$0xf] %vm2064, %v2048
        %2076 = vst.msk [vmem:[#allocation2 + $0x84] sm:$0xf] %vm2064, %v2050
        %2077 = vst.msk [vmem:[#allocation2 + $0x90] sm:$0xf] %vm2064, %v2052
        %2078 = vst.msk [vmem:[#allocation2 + $0x9c] sm:$0xf] %vm2064, %v2054
        %2079 = vst.msk [vmem:[#allocation2 + $0xa8] sm:$0xf] %vm2064, %v2056
        %2080 = vst.msk [vmem:[#allocation2 + $0xb4] sm:$0xf] %vm2064, %v2058
        %vm2081 = vsmask.f32 3328
        %vm2082 = vsmask.f32 7440
        %vm2083 = vmor %vm2081, %vm2082
        %v2085 = vshrl.u32 %v2024, 16
        %v2087 = vrot.slane %v2085, 4
        %v2088 = vshll.u32 %v2024, 16
        %v2090 = vrot.slane %v2088, 5
        %v2091 = vor.u32 %v2087, %v2090
        %v2092 = vrot.slane %v2091, 4
        %v2094 = vshll.u32 %v2025, 16
        %v2096 = vrot.slane %v2094, 5
        %v2097 = vsel %vm2083, %v2092, %v2096
        %v2099 = vshrl.u32 %v2026, 16
        %v2101 = vrot.slane %v2099, 4
        %v2102 = vshll.u32 %v2026, 16
        %v2104 = vrot.slane %v2102, 5
        %v2105 = vor.u32 %v2101, %v2104
        %v2106 = vrot.slane %v2105, 4
        %v2108 = vshll.u32 %v2027, 16
        %v2110 = vrot.slane %v2108, 5
        %v2111 = vsel %vm2083, %v2106, %v2110
        %v2113 = vshrl.u32 %v2028, 16
        %v2115 = vrot.slane %v2113, 4
        %v2116 = vshll.u32 %v2028, 16
        %v2118 = vrot.slane %v2116, 5
        %v2119 = vor.u32 %v2115, %v2118
        %v2120 = vrot.slane %v2119, 4
        %v2122 = vshll.u32 %v2029, 16
        %v2124 = vrot.slane %v2122, 5
        %v2125 = vsel %vm2083, %v2120, %v2124
        %v2127 = vshrl.u32 %v2030, 16
        %v2129 = vrot.slane %v2127, 4
        %v2130 = vshll.u32 %v2030, 16
        %v2132 = vrot.slane %v2130, 5
        %v2133 = vor.u32 %v2129, %v2132
        %v2134 = vrot.slane %v2133, 4
        %v2136 = vshll.u32 %v2031, 16
        %v2138 = vrot.slane %v2136, 5
        %v2139 = vsel %vm2083, %v2134, %v2138
        %v2141 = vshrl.u32 %v2032, 16
        %v2143 = vrot.slane %v2141, 4
        %v2144 = vshll.u32 %v2032, 16
        %v2146 = vrot.slane %v2144, 5
        %v2147 = vor.u32 %v2143, %v2146
        %v2148 = vrot.slane %v2147, 4
        %v2150 = vshll.u32 %v2033, 16
        %v2152 = vrot.slane %v2150, 5
        %v2153 = vsel %vm2083, %v2148, %v2152
        %v2155 = vshrl.u32 %v2034, 16
        %v2157 = vrot.slane %v2155, 4
        %v2158 = vshll.u32 %v2034, 16
        %v2160 = vrot.slane %v2158, 5
        %v2161 = vor.u32 %v2157, %v2160
        %v2162 = vrot.slane %v2161, 4
        %v2164 = vshll.u32 %v2035, 16
        %v2166 = vrot.slane %v2164, 5
        %v2167 = vsel %vm2083, %v2162, %v2166
        %v2169 = vshrl.u32 %v2036, 16
        %v2171 = vrot.slane %v2169, 4
        %v2172 = vshll.u32 %v2036, 16
        %v2174 = vrot.slane %v2172, 5
        %v2175 = vor.u32 %v2171, %v2174
        %v2176 = vrot.slane %v2175, 4
        %v2178 = vshll.u32 %v2037, 16
        %v2180 = vrot.slane %v2178, 5
        %v2181 = vsel %vm2083, %v2176, %v2180
        %v2183 = vshrl.u32 %v2038, 16
        %v2185 = vrot.slane %v2183, 4
        %v2186 = vshll.u32 %v2038, 16
        %v2188 = vrot.slane %v2186, 5
        %v2189 = vor.u32 %v2185, %v2188
        %v2190 = vrot.slane %v2189, 4
        %v2192 = vshll.u32 %v2039, 16
        %v2194 = vrot.slane %v2192, 5
        %v2195 = vsel %vm2083, %v2190, %v2194
        %v2197 = vshrl.u32 %v2044, 16
        %v2199 = vrot.slane %v2197, 4
        %v2200 = vshll.u32 %v2044, 16
        %v2202 = vrot.slane %v2200, 5
        %v2203 = vor.u32 %v2199, %v2202
        %v2204 = vrot.slane %v2203, 4
        %v2206 = vshll.u32 %v2045, 16
        %v2208 = vrot.slane %v2206, 5
        %v2209 = vsel %vm2083, %v2204, %v2208
        %v2211 = vshrl.u32 %v2046, 16
        %v2213 = vrot.slane %v2211, 4
        %v2214 = vshll.u32 %v2046, 16
        %v2216 = vrot.slane %v2214, 5
        %v2217 = vor.u32 %v2213, %v2216
        %v2218 = vrot.slane %v2217, 4
        %v2220 = vshll.u32 %v2047, 16
        %v2222 = vrot.slane %v2220, 5
        %v2223 = vsel %vm2083, %v2218, %v2222
        %v2225 = vshrl.u32 %v2048, 16
        %v2227 = vrot.slane %v2225, 4
        %v2228 = vshll.u32 %v2048, 16
        %v2230 = vrot.slane %v2228, 5
        %v2231 = vor.u32 %v2227, %v2230
        %v2232 = vrot.slane %v2231, 4
        %v2234 = vshll.u32 %v2049, 16
        %v2236 = vrot.slane %v2234, 5
        %v2237 = vsel %vm2083, %v2232, %v2236
        %v2239 = vshrl.u32 %v2050, 16
        %v2241 = vrot.slane %v2239, 4
        %v2242 = vshll.u32 %v2050, 16
        %v2244 = vrot.slane %v2242, 5
        %v2245 = vor.u32 %v2241, %v2244
        %v2246 = vrot.slane %v2245, 4
        %v2248 = vshll.u32 %v2051, 16
        %v2250 = vrot.slane %v2248, 5
        %v2251 = vsel %vm2083, %v2246, %v2250
        %v2253 = vshrl.u32 %v2052, 16
        %v2255 = vrot.slane %v2253, 4
        %v2256 = vshll.u32 %v2052, 16
        %v2258 = vrot.slane %v2256, 5
        %v2259 = vor.u32 %v2255, %v2258
        %v2260 = vrot.slane %v2259, 4
        %v2262 = vshll.u32 %v2053, 16
        %v2264 = vrot.slane %v2262, 5
        %v2265 = vsel %vm2083, %v2260, %v2264
        %v2267 = vshrl.u32 %v2054, 16
        %v2269 = vrot.slane %v2267, 4
        %v2270 = vshll.u32 %v2054, 16
        %v2272 = vrot.slane %v2270, 5
        %v2273 = vor.u32 %v2269, %v2272
        %v2274 = vrot.slane %v2273, 4
        %v2276 = vshll.u32 %v2055, 16
        %v2278 = vrot.slane %v2276, 5
        %v2279 = vsel %vm2083, %v2274, %v2278
        %v2281 = vshrl.u32 %v2056, 16
        %v2283 = vrot.slane %v2281, 4
        %v2284 = vshll.u32 %v2056, 16
        %v2286 = vrot.slane %v2284, 5
        %v2287 = vor.u32 %v2283, %v2286
        %v2288 = vrot.slane %v2287, 4
        %v2290 = vshll.u32 %v2057, 16
        %v2292 = vrot.slane %v2290, 5
        %v2293 = vsel %vm2083, %v2288, %v2292
        %v2295 = vshrl.u32 %v2058, 16
        %v2297 = vrot.slane %v2295, 4
        %v2298 = vshll.u32 %v2058, 16
        %v2300 = vrot.slane %v2298, 5
        %v2301 = vor.u32 %v2297, %v2300
        %v2302 = vrot.slane %v2301, 4
        %v2304 = vshll.u32 %v2059, 16
        %v2306 = vrot.slane %v2304, 5
        %v2307 = vsel %vm2083, %v2302, %v2306
        %2308 = vrot.lane.b32.xlu0 %v2097, 32
        %v2309 = vpop.permute.xlu0 %2308
        %2310 = vrot.lane.b32.xlu0 %v2111, 32
        %v2311 = vpop.permute.xlu0 %2310
        %2312 = vrot.lane.b32.xlu0 %v2125, 32
        %v2313 = vpop.permute.xlu0 %2312
        %2314 = vrot.lane.b32.xlu0 %v2139, 32
        %v2315 = vpop.permute.xlu0 %2314
        %2316 = vrot.lane.b32.xlu0 %v2153, 32
        %v2317 = vpop.permute.xlu0 %2316
        %2318 = vrot.lane.b32.xlu0 %v2167, 32
        %v2319 = vpop.permute.xlu0 %2318
        %2320 = vrot.lane.b32.xlu0 %v2181, 32
        %v2321 = vpop.permute.xlu0 %2320
        %2322 = vrot.lane.b32.xlu0 %v2195, 32
        %v2323 = vpop.permute.xlu0 %2322
        %2324 = vrot.lane.b32.xlu0 %v2209, 32
        %v2325 = vpop.permute.xlu0 %2324
        %2326 = vrot.lane.b32.xlu0 %v2223, 32
        %v2327 = vpop.permute.xlu0 %2326
        %2328 = vrot.lane.b32.xlu0 %v2237, 32
        %v2329 = vpop.permute.xlu0 %2328
        %2330 = vrot.lane.b32.xlu0 %v2251, 32
        %v2331 = vpop.permute.xlu0 %2330
        %2332 = vrot.lane.b32.xlu0 %v2265, 32
        %v2333 = vpop.permute.xlu0 %2332
        %2334 = vrot.lane.b32.xlu0 %v2279, 32
        %v2335 = vpop.permute.xlu0 %2334
        %2336 = vrot.lane.b32.xlu0 %v2293, 32
        %v2337 = vpop.permute.xlu0 %2336
        %2338 = vrot.lane.b32.xlu0 %v2307, 32
        %v2339 = vpop.permute.xlu0 %2338
        %vm2356 = vcmask 519424
        %2357 = vst.msk [vmem:[#allocation2] sm:$0xf] %vm2356, %v2309
        %2358 = vst.msk [vmem:[#allocation2 + $0xc] sm:$0xf] %vm2356, %v2311
        %2359 = vst.msk [vmem:[#allocation2 + $0x18] sm:$0xf] %vm2356, %v2313
        %2360 = vst.msk [vmem:[#allocation2 + $0x24] sm:$0xf] %vm2356, %v2315
        %2361 = vst.msk [vmem:[#allocation2 + $0x30] sm:$0xf] %vm2356, %v2317
        %2362 = vst.msk [vmem:[#allocation2 + $0x3c] sm:$0xf] %vm2356, %v2319
        %2363 = vst.msk [vmem:[#allocation2 + $0x48] sm:$0xf] %vm2356, %v2321
        %2364 = vst.msk [vmem:[#allocation2 + $0x54] sm:$0xf] %vm2356, %v2323
        %2365 = vst.msk [vmem:[#allocation2 + $0x60] sm:$0xf] %vm2356, %v2325
        %2366 = vst.msk [vmem:[#allocation2 + $0x6c] sm:$0xf] %vm2356, %v2327
        %2367 = vst.msk [vmem:[#allocation2 + $0x78] sm:$0xf] %vm2356, %v2329
        %2368 = vst.msk [vmem:[#allocation2 + $0x84] sm:$0xf] %vm2356, %v2331
        %2369 = vst.msk [vmem:[#allocation2 + $0x90] sm:$0xf] %vm2356, %v2333
        %2370 = vst.msk [vmem:[#allocation2 + $0x9c] sm:$0xf] %vm2356, %v2335
        %2371 = vst.msk [vmem:[#allocation2 + $0xa8] sm:$0xf] %vm2356, %v2337
        %2372 = vst.msk [vmem:[#allocation2 + $0xb4] sm:$0xf] %vm2356, %v2339
        %vm2405 = vcmask 1042432
        %vm2406 = vcmask 1046532
        %vm2407 = vmor %vm2405, %vm2406
        %v2408 = vrot.slane %v2024, 5
        %v2409 = vrot.slane %v2408, 4
        %v2410 = vrot.slane %v2025, 5
        %v2411 = vsel %vm2407, %v2409, %v2410
        %v2412 = vrot.slane %v2026, 5
        %v2413 = vrot.slane %v2412, 4
        %v2414 = vrot.slane %v2027, 5
        %v2415 = vsel %vm2407, %v2413, %v2414
        %v2416 = vrot.slane %v2028, 5
        %v2417 = vrot.slane %v2416, 4
        %v2418 = vrot.slane %v2029, 5
        %v2419 = vsel %vm2407, %v2417, %v2418
        %v2420 = vrot.slane %v2030, 5
        %v2421 = vrot.slane %v2420, 4
        %v2422 = vrot.slane %v2031, 5
        %v2423 = vsel %vm2407, %v2421, %v2422
        %v2424 = vrot.slane %v2032, 5
        %v2425 = vrot.slane %v2424, 4
        %v2426 = vrot.slane %v2033, 5
        %v2427 = vsel %vm2407, %v2425, %v2426
        %v2428 = vrot.slane %v2034, 5
        %v2429 = vrot.slane %v2428, 4
        %v2430 = vrot.slane %v2035, 5
        %v2431 = vsel %vm2407, %v2429, %v2430
        %v2432 = vrot.slane %v2036, 5
        %v2433 = vrot.slane %v2432, 4
        %v2434 = vrot.slane %v2037, 5
        %v2435 = vsel %vm2407, %v2433, %v2434
        %v2436 = vrot.slane %v2038, 5
        %v2437 = vrot.slane %v2436, 4
        %v2438 = vrot.slane %v2039, 5
        %v2439 = vsel %vm2407, %v2437, %v2438
        %v2440 = vrot.slane %v2044, 5
        %v2441 = vrot.slane %v2440, 4
        %v2442 = vrot.slane %v2045, 5
        %v2443 = vsel %vm2407, %v2441, %v2442
        %v2444 = vrot.slane %v2046, 5
        %v2445 = vrot.slane %v2444, 4
        %v2446 = vrot.slane %v2047, 5
        %v2447 = vsel %vm2407, %v2445, %v2446
        %v2448 = vrot.slane %v2048, 5
        %v2449 = vrot.slane %v2448, 4
        %v2450 = vrot.slane %v2049, 5
        %v2451 = vsel %vm2407, %v2449, %v2450
        %v2452 = vrot.slane %v2050, 5
        %v2453 = vrot.slane %v2452, 4
        %v2454 = vrot.slane %v2051, 5
        %v2455 = vsel %vm2407, %v2453, %v2454
        %v2456 = vrot.slane %v2052, 5
        %v2457 = vrot.slane %v2456, 4
        %v2458 = vrot.slane %v2053, 5
        %v2459 = vsel %vm2407, %v2457, %v2458
        %v2460 = vrot.slane %v2054, 5
        %v2461 = vrot.slane %v2460, 4
        %v2462 = vrot.slane %v2055, 5
        %v2463 = vsel %vm2407, %v2461, %v2462
        %v2464 = vrot.slane %v2056, 5
        %v2465 = vrot.slane %v2464, 4
        %v2466 = vrot.slane %v2057, 5
        %v2467 = vsel %vm2407, %v2465, %v2466
        %v2468 = vrot.slane %v2058, 5
        %v2469 = vrot.slane %v2468, 4
        %v2470 = vrot.slane %v2059, 5
        %v2471 = vsel %vm2407, %v2469, %v2470
        %2472 = vrot.lane.b32.xlu0 %v2411, 64
        %v2473 = vpop.permute.xlu0 %2472
        %2474 = vrot.lane.b32.xlu0 %v2415, 64
        %v2475 = vpop.permute.xlu0 %2474
        %2476 = vrot.lane.b32.xlu0 %v2419, 64
        %v2477 = vpop.permute.xlu0 %2476
        %2478 = vrot.lane.b32.xlu0 %v2423, 64
        %v2479 = vpop.permute.xlu0 %2478
        %2480 = vrot.lane.b32.xlu0 %v2427, 64
        %v2481 = vpop.permute.xlu0 %2480
        %2482 = vrot.lane.b32.xlu0 %v2431, 64
        %v2483 = vpop.permute.xlu0 %2482
        %2484 = vrot.lane.b32.xlu0 %v2435, 64
        %v2485 = vpop.permute.xlu0 %2484
        %2486 = vrot.lane.b32.xlu0 %v2439, 64
        %v2487 = vpop.permute.xlu0 %2486
        %2488 = vrot.lane.b32.xlu0 %v2443, 64
        %v2489 = vpop.permute.xlu0 %2488
        %2490 = vrot.lane.b32.xlu0 %v2447, 64
        %v2491 = vpop.permute.xlu0 %2490
        %2492 = vrot.lane.b32.xlu0 %v2451, 64
        %v2493 = vpop.permute.xlu0 %2492
        %2494 = vrot.lane.b32.xlu0 %v2455, 64
        %v2495 = vpop.permute.xlu0 %2494
        %2496 = vrot.lane.b32.xlu0 %v2459, 64
        %v2497 = vpop.permute.xlu0 %2496
        %2498 = vrot.lane.b32.xlu0 %v2463, 64
        %v2499 = vpop.permute.xlu0 %2498
        %2500 = vrot.lane.b32.xlu0 %v2467, 64
        %v2501 = vpop.permute.xlu0 %2500
        %2502 = vrot.lane.b32.xlu0 %v2471, 64
        %v2503 = vpop.permute.xlu0 %2502
        %vm2520 = vcmask 781824
        %2521 = vst.msk [vmem:[#allocation2] sm:$0xf] %vm2520, %v2473
        %2522 = vst.msk [vmem:[#allocation2 + $0xc] sm:$0xf] %vm2520, %v2475
        %2523 = vst.msk [vmem:[#allocation2 + $0x18] sm:$0xf] %vm2520, %v2477
        %2524 = vst.msk [vmem:[#allocation2 + $0x24] sm:$0xf] %vm2520, %v2479
        %2525 = vst.msk [vmem:[#allocation2 + $0x30] sm:$0xf] %vm2520, %v2481
        %2526 = vst.msk [vmem:[#allocation2 + $0x3c] sm:$0xf] %vm2520, %v2483
        %2527 = vst.msk [vmem:[#allocation2 + $0x48] sm:$0xf] %vm2520, %v2485
        %2528 = vst.msk [vmem:[#allocation2 + $0x54] sm:$0xf] %vm2520, %v2487
        %2529 = vst.msk [vmem:[#allocation2 + $0x60] sm:$0xf] %vm2520, %v2489
        %2530 = vst.msk [vmem:[#allocation2 + $0x6c] sm:$0xf] %vm2520, %v2491
        %2531 = vst.msk [vmem:[#allocation2 + $0x78] sm:$0xf] %vm2520, %v2493
        %2532 = vst.msk [vmem:[#allocation2 + $0x84] sm:$0xf] %vm2520, %v2495
        %2533 = vst.msk [vmem:[#allocation2 + $0x90] sm:$0xf] %vm2520, %v2497
        %2534 = vst.msk [vmem:[#allocation2 + $0x9c] sm:$0xf] %vm2520, %v2499
        %2535 = vst.msk [vmem:[#allocation2 + $0xa8] sm:$0xf] %vm2520, %v2501
        %2536 = vst.msk [vmem:[#allocation2 + $0xb4] sm:$0xf] %vm2520, %v2503
        %2539 = vrot.lane.b32.xlu0 %v2026, 96
        %v2540 = vpop.permute.xlu0 %2539
        %2541 = vrot.lane.b32.xlu0 %v2028, 96
        %v2542 = vpop.permute.xlu0 %2541
        %2543 = vrot.lane.b32.xlu0 %v2030, 96
        %v2544 = vpop.permute.xlu0 %2543
        %2545 = vrot.lane.b32.xlu0 %v2032, 96
        %v2546 = vpop.permute.xlu0 %2545
        %2547 = vrot.lane.b32.xlu0 %v2034, 96
        %v2548 = vpop.permute.xlu0 %2547
        %2549 = vrot.lane.b32.xlu0 %v2036, 96
        %v2550 = vpop.permute.xlu0 %2549
        %2551 = vrot.lane.b32.xlu0 %v2038, 96
        %v2552 = vpop.permute.xlu0 %2551
        %2553 = vrot.lane.b32.xlu0 %v2040, 96
        %v2554 = vpop.permute.xlu0 %2553
        %2555 = vrot.lane.b32.xlu0 %v2046, 96
        %v2556 = vpop.permute.xlu0 %2555
        %2557 = vrot.lane.b32.xlu0 %v2048, 96
        %v2558 = vpop.permute.xlu0 %2557
        %2559 = vrot.lane.b32.xlu0 %v2050, 96
        %v2560 = vpop.permute.xlu0 %2559
        %2561 = vrot.lane.b32.xlu0 %v2052, 96
        %v2562 = vpop.permute.xlu0 %2561
        %2563 = vrot.lane.b32.xlu0 %v2054, 96
        %v2564 = vpop.permute.xlu0 %2563
        %2565 = vrot.lane.b32.xlu0 %v2056, 96
        %v2566 = vpop.permute.xlu0 %2565
        %2567 = vrot.lane.b32.xlu0 %v2058, 96
        %v2568 = vpop.permute.xlu0 %2567
        %2569 = vrot.lane.b32.xlu0 %v2060, 96
        %v2570 = vpop.permute.xlu0 %2569
        %vm2587 = vcmask 1044224
        %2588 = vst.msk [vmem:[#allocation2] sm:$0xf] %vm2587, %v2540
        %2589 = vst.msk [vmem:[#allocation2 + $0xc] sm:$0xf] %vm2587, %v2542
        %2590 = vst.msk [vmem:[#allocation2 + $0x18] sm:$0xf] %vm2587, %v2544
        %2591 = vst.msk [vmem:[#allocation2 + $0x24] sm:$0xf] %vm2587, %v2546
        %2592 = vst.msk [vmem:[#allocation2 + $0x30] sm:$0xf] %vm2587, %v2548
        %2593 = vst.msk [vmem:[#allocation2 + $0x3c] sm:$0xf] %vm2587, %v2550
        %2594 = vst.msk [vmem:[#allocation2 + $0x48] sm:$0xf] %vm2587, %v2552
        %2595 = vst.msk [vmem:[#allocation2 + $0x54] sm:$0xf] %vm2587, %v2554
        %2596 = vst.msk [vmem:[#allocation2 + $0x60] sm:$0xf] %vm2587, %v2556
        %2597 = vst.msk [vmem:[#allocation2 + $0x6c] sm:$0xf] %vm2587, %v2558
        %2598 = vst.msk [vmem:[#allocation2 + $0x78] sm:$0xf] %vm2587, %v2560
        %2599 = vst.msk [vmem:[#allocation2 + $0x84] sm:$0xf] %vm2587, %v2562
        %2600 = vst.msk [vmem:[#allocation2 + $0x90] sm:$0xf] %vm2587, %v2564
        %2601 = vst.msk [vmem:[#allocation2 + $0x9c] sm:$0xf] %vm2587, %v2566
        %2602 = vst.msk [vmem:[#allocation2 + $0xa8] sm:$0xf] %vm2587, %v2568
        %2603 = vst.msk [vmem:[#allocation2 + $0xb4] sm:$0xf] %vm2587, %v2570
        %v2605 = vshrl.u32 %v2040, 16
        %v2607 = vrot.slane %v2605, 4
        %v2608 = vshll.u32 %v2040, 16
        %v2610 = vrot.slane %v2608, 5
        %v2611 = vor.u32 %v2607, %v2610
        %v2612 = vrot.slane %v2611, 4
        %v2614 = vshll.u32 %v2041, 16
        %v2616 = vrot.slane %v2614, 5
        %v2617 = vsel %vm2083, %v2612, %v2616
        %v2619 = vshrl.u32 %v2060, 16
        %v2621 = vrot.slane %v2619, 4
        %v2622 = vshll.u32 %v2060, 16
        %v2624 = vrot.slane %v2622, 5
        %v2625 = vor.u32 %v2621, %v2624
        %v2626 = vrot.slane %v2625, 4
        %v2628 = vshll.u32 %v2061, 16
        %v2630 = vrot.slane %v2628, 5
        %v2631 = vsel %vm2083, %v2626, %v2630
        %2648 = vst.msk [vmem:[#allocation2 + $0x4] sm:$0xf] %vm2064, %v2111
        %2649 = vst.msk [vmem:[#allocation2 + $0x10] sm:$0xf] %vm2064, %v2125
        %2650 = vst.msk [vmem:[#allocation2 + $0x1c] sm:$0xf] %vm2064, %v2139
        %2651 = vst.msk [vmem:[#allocation2 + $0x28] sm:$0xf] %vm2064, %v2153
        %2652 = vst.msk [vmem:[#allocation2 + $0x34] sm:$0xf] %vm2064, %v2167
        %2653 = vst.msk [vmem:[#allocation2 + $0x40] sm:$0xf] %vm2064, %v2181
        %2654 = vst.msk [vmem:[#allocation2 + $0x4c] sm:$0xf] %vm2064, %v2195
        %2655 = vst.msk [vmem:[#allocation2 + $0x58] sm:$0xf] %vm2064, %v2617
        %2656 = vst.msk [vmem:[#allocation2 + $0x64] sm:$0xf] %vm2064, %v2223
        %2657 = vst.msk [vmem:[#allocation2 + $0x70] sm:$0xf] %vm2064, %v2237
        %2658 = vst.msk [vmem:[#allocation2 + $0x7c] sm:$0xf] %vm2064, %v2251
        %2659 = vst.msk [vmem:[#allocation2 + $0x88] sm:$0xf] %vm2064, %v2265
        %2660 = vst.msk [vmem:[#allocation2 + $0x94] sm:$0xf] %vm2064, %v2279
        %2661 = vst.msk [vmem:[#allocation2 + $0xa0] sm:$0xf] %vm2064, %v2293
        %2662 = vst.msk [vmem:[#allocation2 + $0xac] sm:$0xf] %vm2064, %v2307
        %2663 = vst.msk [vmem:[#allocation2 + $0xb8] sm:$0xf] %vm2064, %v2631
        %v2666 = vrot.slane %v2040, 5
        %v2667 = vrot.slane %v2666, 4
        %v2668 = vrot.slane %v2041, 5
        %v2669 = vsel %vm2407, %v2667, %v2668
        %v2670 = vrot.slane %v2060, 5
        %v2671 = vrot.slane %v2670, 4
        %v2672 = vrot.slane %v2061, 5
        %v2673 = vsel %vm2407, %v2671, %v2672
        %2674 = vrot.lane.b32.xlu0 %v2415, 32
        %v2675 = vpop.permute.xlu0 %2674
        %2676 = vrot.lane.b32.xlu0 %v2419, 32
        %v2677 = vpop.permute.xlu0 %2676
        %2678 = vrot.lane.b32.xlu0 %v2423, 32
        %v2679 = vpop.permute.xlu0 %2678
        %2680 = vrot.lane.b32.xlu0 %v2427, 32
        %v2681 = vpop.permute.xlu0 %2680
        %2682 = vrot.lane.b32.xlu0 %v2431, 32
        %v2683 = vpop.permute.xlu0 %2682
        %2684 = vrot.lane.b32.xlu0 %v2435, 32
        %v2685 = vpop.permute.xlu0 %2684
        %2686 = vrot.lane.b32.xlu0 %v2439, 32
        %v2687 = vpop.permute.xlu0 %2686
        %2688 = vrot.lane.b32.xlu0 %v2669, 32
        %v2689 = vpop.permute.xlu0 %2688
        %2690 = vrot.lane.b32.xlu0 %v2447, 32
        %v2691 = vpop.permute.xlu0 %2690
        %2692 = vrot.lane.b32.xlu0 %v2451, 32
        %v2693 = vpop.permute.xlu0 %2692
        %2694 = vrot.lane.b32.xlu0 %v2455, 32
        %v2695 = vpop.permute.xlu0 %2694
        %2696 = vrot.lane.b32.xlu0 %v2459, 32
        %v2697 = vpop.permute.xlu0 %2696
        %2698 = vrot.lane.b32.xlu0 %v2463, 32
        %v2699 = vpop.permute.xlu0 %2698
        %2700 = vrot.lane.b32.xlu0 %v2467, 32
        %v2701 = vpop.permute.xlu0 %2700
        %2702 = vrot.lane.b32.xlu0 %v2471, 32
        %v2703 = vpop.permute.xlu0 %2702
        %2704 = vrot.lane.b32.xlu0 %v2673, 32
        %v2705 = vpop.permute.xlu0 %2704
        %2722 = vst.msk [vmem:[#allocation2 + $0x4] sm:$0xf] %vm2356, %v2675
        %2723 = vst.msk [vmem:[#allocation2 + $0x10] sm:$0xf] %vm2356, %v2677
        %2724 = vst.msk [vmem:[#allocation2 + $0x1c] sm:$0xf] %vm2356, %v2679
        %2725 = vst.msk [vmem:[#allocation2 + $0x28] sm:$0xf] %vm2356, %v2681
        %2726 = vst.msk [vmem:[#allocation2 + $0x34] sm:$0xf] %vm2356, %v2683
        %2727 = vst.msk [vmem:[#allocation2 + $0x40] sm:$0xf] %vm2356, %v2685
        %2728 = vst.msk [vmem:[#allocation2 + $0x4c] sm:$0xf] %vm2356, %v2687
        %2729 = vst.msk [vmem:[#allocation2 + $0x58] sm:$0xf] %vm2356, %v2689
        %2730 = vst.msk [vmem:[#allocation2 + $0x64] sm:$0xf] %vm2356, %v2691
        %2731 = vst.msk [vmem:[#allocation2 + $0x70] sm:$0xf] %vm2356, %v2693
        %2732 = vst.msk [vmem:[#allocation2 + $0x7c] sm:$0xf] %vm2356, %v2695
        %2733 = vst.msk [vmem:[#allocation2 + $0x88] sm:$0xf] %vm2356, %v2697
        %2734 = vst.msk [vmem:[#allocation2 + $0x94] sm:$0xf] %vm2356, %v2699
        %2735 = vst.msk [vmem:[#allocation2 + $0xa0] sm:$0xf] %vm2356, %v2701
        %2736 = vst.msk [vmem:[#allocation2 + $0xac] sm:$0xf] %vm2356, %v2703
        %2737 = vst.msk [vmem:[#allocation2 + $0xb8] sm:$0xf] %vm2356, %v2705
        %2740 = vrot.lane.b32.xlu0 %v2028, 64
        %v2741 = vpop.permute.xlu0 %2740
        %2742 = vrot.lane.b32.xlu0 %v2030, 64
        %v2743 = vpop.permute.xlu0 %2742
        %2744 = vrot.lane.b32.xlu0 %v2032, 64
        %v2745 = vpop.permute.xlu0 %2744
        %2746 = vrot.lane.b32.xlu0 %v2034, 64
        %v2747 = vpop.permute.xlu0 %2746
        %2748 = vrot.lane.b32.xlu0 %v2036, 64
        %v2749 = vpop.permute.xlu0 %2748
        %2750 = vrot.lane.b32.xlu0 %v2038, 64
        %v2751 = vpop.permute.xlu0 %2750
        %2752 = vrot.lane.b32.xlu0 %v2040, 64
        %v2753 = vpop.permute.xlu0 %2752
        %2754 = vrot.lane.b32.xlu0 %v2042, 64
        %v2755 = vpop.permute.xlu0 %2754
        %2756 = vrot.lane.b32.xlu0 %v2048, 64
        %v2757 = vpop.permute.xlu0 %2756
        %2758 = vrot.lane.b32.xlu0 %v2050, 64
        %v2759 = vpop.permute.xlu0 %2758
        %2760 = vrot.lane.b32.xlu0 %v2052, 64
        %v2761 = vpop.permute.xlu0 %2760
        %2762 = vrot.lane.b32.xlu0 %v2054, 64
        %v2763 = vpop.permute.xlu0 %2762
        %2764 = vrot.lane.b32.xlu0 %v2056, 64
        %v2765 = vpop.permute.xlu0 %2764
        %2766 = vrot.lane.b32.xlu0 %v2058, 64
        %v2767 = vpop.permute.xlu0 %2766
        %2768 = vrot.lane.b32.xlu0 %v2060, 64
        %v2769 = vpop.permute.xlu0 %2768
        %2770 = vrot.lane.b32.xlu0 %v2062, 64
        %v2771 = vpop.permute.xlu0 %2770
        %2788 = vst.msk [vmem:[#allocation2 + $0x4] sm:$0xf] %vm2520, %v2741
        %2789 = vst.msk [vmem:[#allocation2 + $0x10] sm:$0xf] %vm2520, %v2743
        %2790 = vst.msk [vmem:[#allocation2 + $0x1c] sm:$0xf] %vm2520, %v2745
        %2791 = vst.msk [vmem:[#allocation2 + $0x28] sm:$0xf] %vm2520, %v2747
        %2792 = vst.msk [vmem:[#allocation2 + $0x34] sm:$0xf] %vm2520, %v2749
        %2793 = vst.msk [vmem:[#allocation2 + $0x40] sm:$0xf] %vm2520, %v2751
        %2794 = vst.msk [vmem:[#allocation2 + $0x4c] sm:$0xf] %vm2520, %v2753
        %2795 = vst.msk [vmem:[#allocation2 + $0x58] sm:$0xf] %vm2520, %v2755
        %2796 = vst.msk [vmem:[#allocation2 + $0x64] sm:$0xf] %vm2520, %v2757
        %2797 = vst.msk [vmem:[#allocation2 + $0x70] sm:$0xf] %vm2520, %v2759
        %2798 = vst.msk [vmem:[#allocation2 + $0x7c] sm:$0xf] %vm2520, %v2761
        %2799 = vst.msk [vmem:[#allocation2 + $0x88] sm:$0xf] %vm2520, %v2763
        %2800 = vst.msk [vmem:[#allocation2 + $0x94] sm:$0xf] %vm2520, %v2765
        %2801 = vst.msk [vmem:[#allocation2 + $0xa0] sm:$0xf] %vm2520, %v2767
        %2802 = vst.msk [vmem:[#allocation2 + $0xac] sm:$0xf] %vm2520, %v2769
        %2803 = vst.msk [vmem:[#allocation2 + $0xb8] sm:$0xf] %vm2520, %v2771
        %v2805 = vshrl.u32 %v2042, 16
        %v2807 = vrot.slane %v2805, 4
        %v2808 = vshll.u32 %v2042, 16
        %v2810 = vrot.slane %v2808, 5
        %v2811 = vor.u32 %v2807, %v2810
        %v2812 = vrot.slane %v2811, 4
        %v2814 = vshll.u32 %v2043, 16
        %v2816 = vrot.slane %v2814, 5
        %v2817 = vsel %vm2083, %v2812, %v2816
        %v2819 = vshrl.u32 %v2062, 16
        %v2821 = vrot.slane %v2819, 4
        %v2822 = vshll.u32 %v2062, 16
        %v2824 = vrot.slane %v2822, 5
        %v2825 = vor.u32 %v2821, %v2824
        %v2826 = vrot.slane %v2825, 4
        %v2828 = vshll.u32 %v2063, 16
        %v2830 = vrot.slane %v2828, 5
        %v2831 = vsel %vm2083, %v2826, %v2830
        %2832 = vrot.lane.b32.xlu0 %v2125, 96
        %v2833 = vpop.permute.xlu0 %2832
        %2834 = vrot.lane.b32.xlu0 %v2139, 96
        %v2835 = vpop.permute.xlu0 %2834
        %2836 = vrot.lane.b32.xlu0 %v2153, 96
        %v2837 = vpop.permute.xlu0 %2836
        %2838 = vrot.lane.b32.xlu0 %v2167, 96
        %v2839 = vpop.permute.xlu0 %2838
        %2840 = vrot.lane.b32.xlu0 %v2181, 96
        %v2841 = vpop.permute.xlu0 %2840
        %2842 = vrot.lane.b32.xlu0 %v2195, 96
        %v2843 = vpop.permute.xlu0 %2842
        %2844 = vrot.lane.b32.xlu0 %v2617, 96
        %v2845 = vpop.permute.xlu0 %2844
        %2846 = vrot.lane.b32.xlu0 %v2817, 96
        %v2847 = vpop.permute.xlu0 %2846
        %2848 = vrot.lane.b32.xlu0 %v2237, 96
        %v2849 = vpop.permute.xlu0 %2848
        %2850 = vrot.lane.b32.xlu0 %v2251, 96
        %v2851 = vpop.permute.xlu0 %2850
        %2852 = vrot.lane.b32.xlu0 %v2265, 96
        %v2853 = vpop.permute.xlu0 %2852
        %2854 = vrot.lane.b32.xlu0 %v2279, 96
        %v2855 = vpop.permute.xlu0 %2854
        %2856 = vrot.lane.b32.xlu0 %v2293, 96
        %v2857 = vpop.permute.xlu0 %2856
        %2858 = vrot.lane.b32.xlu0 %v2307, 96
        %v2859 = vpop.permute.xlu0 %2858
        %2860 = vrot.lane.b32.xlu0 %v2631, 96
        %v2861 = vpop.permute.xlu0 %2860
        %2862 = vrot.lane.b32.xlu0 %v2831, 96
        %v2863 = vpop.permute.xlu0 %2862
        %2880 = vst.msk [vmem:[#allocation2 + $0x4] sm:$0xf] %vm2587, %v2833
        %2881 = vst.msk [vmem:[#allocation2 + $0x10] sm:$0xf] %vm2587, %v2835
        %2882 = vst.msk [vmem:[#allocation2 + $0x1c] sm:$0xf] %vm2587, %v2837
        %2883 = vst.msk [vmem:[#allocation2 + $0x28] sm:$0xf] %vm2587, %v2839
        %2884 = vst.msk [vmem:[#allocation2 + $0x34] sm:$0xf] %vm2587, %v2841
        %2885 = vst.msk [vmem:[#allocation2 + $0x40] sm:$0xf] %vm2587, %v2843
        %2886 = vst.msk [vmem:[#allocation2 + $0x4c] sm:$0xf] %vm2587, %v2845
        %2887 = vst.msk [vmem:[#allocation2 + $0x58] sm:$0xf] %vm2587, %v2847
        %2888 = vst.msk [vmem:[#allocation2 + $0x64] sm:$0xf] %vm2587, %v2849
        %2889 = vst.msk [vmem:[#allocation2 + $0x70] sm:$0xf] %vm2587, %v2851
        %2890 = vst.msk [vmem:[#allocation2 + $0x7c] sm:$0xf] %vm2587, %v2853
        %2891 = vst.msk [vmem:[#allocation2 + $0x88] sm:$0xf] %vm2587, %v2855
        %2892 = vst.msk [vmem:[#allocation2 + $0x94] sm:$0xf] %vm2587, %v2857
        %2893 = vst.msk [vmem:[#allocation2 + $0xa0] sm:$0xf] %vm2587, %v2859
        %2894 = vst.msk [vmem:[#allocation2 + $0xac] sm:$0xf] %vm2587, %v2861
        %2895 = vst.msk [vmem:[#allocation2 + $0xb8] sm:$0xf] %vm2587, %v2863
        %v2898 = vrot.slane %v2042, 5
        %v2899 = vrot.slane %v2898, 4
        %v2900 = vrot.slane %v2043, 5
        %v2901 = vsel %vm2407, %v2899, %v2900
        %v2902 = vrot.slane %v2062, 5
        %v2903 = vrot.slane %v2902, 4
        %v2904 = vrot.slane %v2063, 5
        %v2905 = vsel %vm2407, %v2903, %v2904
        %2922 = vst.msk [vmem:[#allocation2 + $0x8] sm:$0xf] %vm2064, %v2419
        %2923 = vst.msk [vmem:[#allocation2 + $0x14] sm:$0xf] %vm2064, %v2423
        %2924 = vst.msk [vmem:[#allocation2 + $0x20] sm:$0xf] %vm2064, %v2427
        %2925 = vst.msk [vmem:[#allocation2 + $0x2c] sm:$0xf] %vm2064, %v2431
        %2926 = vst.msk [vmem:[#allocation2 + $0x38] sm:$0xf] %vm2064, %v2435
        %2927 = vst.msk [vmem:[#allocation2 + $0x44] sm:$0xf] %vm2064, %v2439
        %2928 = vst.msk [vmem:[#allocation2 + $0x50] sm:$0xf] %vm2064, %v2669
        %2929 = vst.msk [vmem:[#allocation2 + $0x5c] sm:$0xf] %vm2064, %v2901
        %2930 = vst.msk [vmem:[#allocation2 + $0x68] sm:$0xf] %vm2064, %v2451
        %2931 = vst.msk [vmem:[#allocation2 + $0x74] sm:$0xf] %vm2064, %v2455
        %2932 = vst.msk [vmem:[#allocation2 + $0x80] sm:$0xf] %vm2064, %v2459
        %2933 = vst.msk [vmem:[#allocation2 + $0x8c] sm:$0xf] %vm2064, %v2463
        %2934 = vst.msk [vmem:[#allocation2 + $0x98] sm:$0xf] %vm2064, %v2467
        %2935 = vst.msk [vmem:[#allocation2 + $0xa4] sm:$0xf] %vm2064, %v2471
        %2936 = vst.msk [vmem:[#allocation2 + $0xb0] sm:$0xf] %vm2064, %v2673
        %2937 = vst.msk [vmem:[#allocation2 + $0xbc] sm:$0xf] %vm2064, %v2905
        %v2938 = vld [vmem:[#allocation2] sm:$0xff]
        %v2939 = vld [vmem:[#allocation2 + $0x8] sm:$0xf]
        %v2940 = vld [vmem:[#allocation2 + $0xc] sm:$0xff]
        %v2941 = vld [vmem:[#allocation2 + $0x14] sm:$0xf]
        %v2942 = vld [vmem:[#allocation2 + $0x18] sm:$0xff]
        %v2943 = vld [vmem:[#allocation2 + $0x20] sm:$0xf]
        %v2944 = vld [vmem:[#allocation2 + $0x24] sm:$0xff]
        %v2945 = vld [vmem:[#allocation2 + $0x2c] sm:$0xf]
        %v2946 = vld [vmem:[#allocation2 + $0x30] sm:$0xff]
        %v2947 = vld [vmem:[#allocation2 + $0x38] sm:$0xf]
        %v2948 = vld [vmem:[#allocation2 + $0x3c] sm:$0xff]
        %v2949 = vld [vmem:[#allocation2 + $0x44] sm:$0xf]
        %v2950 = vld [vmem:[#allocation2 + $0x48] sm:$0xff]
        %v2951 = vld [vmem:[#allocation2 + $0x50] sm:$0xf]
        %v2952 = vld [vmem:[#allocation2 + $0x54] sm:$0xff]
        %v2953 = vld [vmem:[#allocation2 + $0x5c] sm:$0xf]
        %v2954 = vld [vmem:[#allocation2 + $0x60] sm:$0xff]
        %v2955 = vld [vmem:[#allocation2 + $0x68] sm:$0xf]
        %v2956 = vld [vmem:[#allocation2 + $0x6c] sm:$0xff]
        %v2957 = vld [vmem:[#allocation2 + $0x74] sm:$0xf]
        %v2958 = vld [vmem:[#allocation2 + $0x78] sm:$0xff]
        %v2959 = vld [vmem:[#allocation2 + $0x80] sm:$0xf]
        %v2960 = vld [vmem:[#allocation2 + $0x84] sm:$0xff]
        %v2961 = vld [vmem:[#allocation2 + $0x8c] sm:$0xf]
        %v2962 = vld [vmem:[#allocation2 + $0x90] sm:$0xff]
        %v2963 = vld [vmem:[#allocation2 + $0x98] sm:$0xf]
        %v2964 = vld [vmem:[#allocation2 + $0x9c] sm:$0xff]
        %v2965 = vld [vmem:[#allocation2 + $0xa4] sm:$0xf]
        %v2966 = vld [vmem:[#allocation2 + $0xa8] sm:$0xff]
        %v2967 = vld [vmem:[#allocation2 + $0xb0] sm:$0xf]
        %v2968 = vld [vmem:[#allocation2 + $0xb4] sm:$0xff]
        %v2969 = vld [vmem:[#allocation2 + $0xbc] sm:$0xf]
        %v2970 = vld [vmem:[%s484] sm:$0xf]
        %v2971 = vld [vmem:[%s484 + $0x4] sm:$0xf]
        %v2972 = vld [vmem:[%s484 + $0x8] sm:$0xf]
        %v2973 = vld [vmem:[%s484 + $0xc] sm:$0xf]
        %v2974 = vld [vmem:[%s484 + $0x10] sm:$0xf]
        %v2975 = vld [vmem:[%s484 + $0x14] sm:$0xf]
        %v2976 = vld [vmem:[%s484 + $0x18] sm:$0xf]
        %v2977 = vld [vmem:[%s484 + $0x1c] sm:$0xf]
        %v2978 = vld [vmem:[%s484 + $0x20] sm:$0xf]
        %v2979 = vld [vmem:[%s484 + $0x24] sm:$0xf]
        %v2980 = vld [vmem:[%s484 + $0x28] sm:$0xf]
        %v2981 = vld [vmem:[%s484 + $0x2c] sm:$0xf]
        %v2982 = vld [vmem:[%s484 + $0x30] sm:$0xf]
        %v2983 = vld [vmem:[%s484 + $0x34] sm:$0xf]
        %v2984 = vld [vmem:[%s484 + $0x38] sm:$0xf]
        %v2985 = vld [vmem:[%s484 + $0x3c] sm:$0xf]
        %v2986 = vld [vmem:[%s484 + $0x40] sm:$0xf]
        %v2987 = vld [vmem:[%s484 + $0x44] sm:$0xf]
        %v2988 = vld [vmem:[%s484 + $0x48] sm:$0xf]
        %v2989 = vld [vmem:[%s484 + $0x4c] sm:$0xf]
        %v2990 = vld [vmem:[%s484 + $0x50] sm:$0xf]
        %v2991 = vld [vmem:[%s484 + $0x54] sm:$0xf]
        %v2992 = vld [vmem:[%s484 + $0x58] sm:$0xf]
        %v2993 = vld [vmem:[%s484 + $0x5c] sm:$0xf]
        %v2994 = vld [vmem:[%s484 + $0x60] sm:$0xf]
        %v2995 = vld [vmem:[%s484 + $0x64] sm:$0xf]
        %v2996 = vld [vmem:[%s484 + $0x68] sm:$0xf]
        %v2997 = vld [vmem:[%s484 + $0x6c] sm:$0xf]
        %v2998 = vld [vmem:[%s484 + $0x70] sm:$0xf]
        %v2999 = vld [vmem:[%s484 + $0x74] sm:$0xf]
        %v3000 = vld [vmem:[%s484 + $0x78] sm:$0xf]
        %v3001 = vld [vmem:[%s484 + $0x7c] sm:$0xf]
        %v3002 = vld [vmem:[%s484 + $0x80] sm:$0xf]
        %v3003 = vld [vmem:[%s484 + $0x84] sm:$0xf]
        %v3004 = vld [vmem:[%s484 + $0x88] sm:$0xf]
        %v3005 = vld [vmem:[%s484 + $0x8c] sm:$0xf]
        %v3006 = vld [vmem:[%s487] sm:$0x1]
        %v3008 = vperm.slane %v3006, 0
        %v3042 = vunpack.c.l.b16 %v2938
        %v3043 = vunpack.c.h.b16 %v2938
        %v3044 = vunpack.c.l.b16 %v2939
        %v3045 = vunpack.c.l.b16 %v2940
        %v3046 = vunpack.c.h.b16 %v2940
        %v3047 = vunpack.c.l.b16 %v2941
        %v3048 = vunpack.c.l.b16 %v2942
        %v3049 = vunpack.c.h.b16 %v2942
        %v3050 = vunpack.c.l.b16 %v2943
        %v3051 = vunpack.c.l.b16 %v2944
        %v3052 = vunpack.c.h.b16 %v2944
        %v3053 = vunpack.c.l.b16 %v2945
        %v3054 = vunpack.c.l.b16 %v2946
        %v3055 = vunpack.c.h.b16 %v2946
        %v3056 = vunpack.c.l.b16 %v2947
        %v3057 = vunpack.c.l.b16 %v2948
        %v3058 = vunpack.c.h.b16 %v2948
        %v3059 = vunpack.c.l.b16 %v2949
        %v3060 = vunpack.c.l.b16 %v2950
        %v3061 = vunpack.c.h.b16 %v2950
        %v3062 = vunpack.c.l.b16 %v2951
        %v3063 = vunpack.c.l.b16 %v2952
        %v3064 = vunpack.c.h.b16 %v2952
        %v3065 = vunpack.c.l.b16 %v2953
        %v3066 = vunpack.c.l.b16 %v2954
        %v3067 = vunpack.c.h.b16 %v2954
        %v3068 = vunpack.c.l.b16 %v2955
        %v3069 = vunpack.c.l.b16 %v2956
        %v3070 = vunpack.c.h.b16 %v2956
        %v3071 = vunpack.c.l.b16 %v2957
        %v3072 = vunpack.c.l.b16 %v2958
        %v3073 = vunpack.c.h.b16 %v2958
        %v3074 = vunpack.c.l.b16 %v2959
        %v3075 = vunpack.c.l.b16 %v2960
        %v3076 = vunpack.c.h.b16 %v2960
        %v3077 = vunpack.c.l.b16 %v2961
        %v3078 = vunpack.c.l.b16 %v2962
        %v3079 = vunpack.c.h.b16 %v2962
        %v3080 = vunpack.c.l.b16 %v2963
        %v3081 = vunpack.c.l.b16 %v2964
        %v3082 = vunpack.c.h.b16 %v2964
        %v3083 = vunpack.c.l.b16 %v2965
        %v3084 = vunpack.c.l.b16 %v2966
        %v3085 = vunpack.c.h.b16 %v2966
        %v3086 = vunpack.c.l.b16 %v2967
        %v3087 = vunpack.c.l.b16 %v2968
        %v3088 = vunpack.c.h.b16 %v2968
        %v3089 = vunpack.c.l.b16 %v2969
        %v3090 = vpack.c.b16 %v3045, %v3042
        %v3091 = vpack.c.b16 %v3046, %v3043
        %v3092 = vpack.c.b16 %v3047, %v3044
        %v3093 = vpack.c.b16 %v3051, %v3048
        %v3094 = vpack.c.b16 %v3052, %v3049
        %v3095 = vpack.c.b16 %v3053, %v3050
        %v3096 = vpack.c.b16 %v3057, %v3054
        %v3097 = vpack.c.b16 %v3058, %v3055
        %v3098 = vpack.c.b16 %v3059, %v3056
        %v3099 = vpack.c.b16 %v3063, %v3060
        %v3100 = vpack.c.b16 %v3064, %v3061
        %v3101 = vpack.c.b16 %v3065, %v3062
        %v3102 = vpack.c.b16 %v3069, %v3066
        %v3103 = vpack.c.b16 %v3070, %v3067
        %v3104 = vpack.c.b16 %v3071, %v3068
        %v3105 = vpack.c.b16 %v3075, %v3072
        %v3106 = vpack.c.b16 %v3076, %v3073
        %v3107 = vpack.c.b16 %v3077, %v3074
        %v3108 = vpack.c.b16 %v3081, %v3078
        %v3109 = vpack.c.b16 %v3082, %v3079
        %v3110 = vpack.c.b16 %v3083, %v3080
        %v3111 = vpack.c.b16 %v3087, %v3084
        %v3112 = vpack.c.b16 %v3088, %v3085
        %v3113 = vpack.c.b16 %v3089, %v3086
        %v3166 = vunpack.c.l.b16 %v2970
        %v3167 = vunpack.c.l.b16 %v2971
        %v3168 = vunpack.c.l.b16 %v2972
        %v3169 = vunpack.c.l.b16 %v2973
        %v3170 = vunpack.c.l.b16 %v2974
        %v3171 = vunpack.c.l.b16 %v2975
        %v3172 = vunpack.c.l.b16 %v2976
        %v3173 = vunpack.c.l.b16 %v2977
        %v3174 = vunpack.c.l.b16 %v2978
        %v3175 = vunpack.c.l.b16 %v2979
        %v3176 = vunpack.c.l.b16 %v2980
        %v3177 = vunpack.c.l.b16 %v2981
        %v3178 = vunpack.c.l.b16 %v2982
        %v3179 = vunpack.c.l.b16 %v2983
        %v3180 = vunpack.c.l.b16 %v2984
        %v3181 = vunpack.c.l.b16 %v2985
        %v3182 = vunpack.c.l.b16 %v2986
        %v3183 = vunpack.c.l.b16 %v2987
        %v3184 = vunpack.c.l.b16 %v2988
        %v3185 = vunpack.c.l.b16 %v2989
        %v3186 = vunpack.c.l.b16 %v2990
        %v3187 = vunpack.c.l.b16 %v2991
        %v3188 = vunpack.c.l.b16 %v2992
        %v3189 = vunpack.c.l.b16 %v2993
        %v3190 = vunpack.c.l.b16 %v2994
        %v3191 = vunpack.c.l.b16 %v2995
        %v3192 = vunpack.c.l.b16 %v2996
        %v3193 = vunpack.c.l.b16 %v2997
        %v3194 = vunpack.c.l.b16 %v2998
        %v3195 = vunpack.c.l.b16 %v2999
        %v3196 = vunpack.c.l.b16 %v3000
        %v3197 = vunpack.c.l.b16 %v3001
        %v3198 = vunpack.c.l.b16 %v3002
        %v3199 = vunpack.c.l.b16 %v3003
        %v3200 = vunpack.c.l.b16 %v3004
        %v3201 = vunpack.c.l.b16 %v3005
        %v3202 = vpack.c.b16 %v3167, %v3166
        %v3203 = vpack.c.b16 %v3169, %v3168
        %v3204 = vpack.c.b16 %v3171, %v3170
        %v3205 = vpack.c.b16 %v3173, %v3172
        %v3206 = vpack.c.b16 %v3175, %v3174
        %v3207 = vpack.c.b16 %v3177, %v3176
        %v3208 = vpack.c.b16 %v3179, %v3178
        %v3209 = vpack.c.b16 %v3181, %v3180
        %v3210 = vpack.c.b16 %v3183, %v3182
        %v3211 = vpack.c.b16 %v3185, %v3184
        %v3212 = vpack.c.b16 %v3187, %v3186
        %v3213 = vpack.c.b16 %v3189, %v3188
        %v3214 = vpack.c.b16 %v3191, %v3190
        %v3215 = vpack.c.b16 %v3193, %v3192
        %v3216 = vpack.c.b16 %v3195, %v3194
        %v3217 = vpack.c.b16 %v3197, %v3196
        %v3218 = vpack.c.b16 %v3199, %v3198
        %v3219 = vpack.c.b16 %v3201, %v3200
        %vm3238 = vcmask 261120
        %v3240 = vsel %vm3238, %v3092, 0
        %v3243 = vsel %vm3238, %v3095, 0
        %v3246 = vsel %vm3238, %v3098, 0
        %v3249 = vsel %vm3238, %v3101, 0
        %v3252 = vsel %vm3238, %v3104, 0
        %v3255 = vsel %vm3238, %v3107, 0
        %v3258 = vsel %vm3238, %v3110, 0
        %v3261 = vsel %vm3238, %v3113, 0
        %3263 = vmatpush.bf16.msra.mxu0 %v3209
        %3264 = vmatpush.bf16.msra.mxu0 %v3208
        %3265 = vmatpush.bf16.msra.mxu0 %v3207
        %3266 = vmatpush.bf16.msra.mxu0 %v3206
        %3267 = vmatpush.bf16.msra.mxu0 %v3205
        %3268 = vmatpush.bf16.msra.mxu0 %v3204
        %3269 = vmatpush.bf16.msra.mxu0 %v3203
        %3270 = vmatpush.bf16.msra.mxu0 %v3202
        %3271 = vmatmul.bf16.gmra.mxu0 %v3090
        %v3272 = vpop.f32.mrf.mxu0
        %v3273 = vadd.f32 %v3008, %v3272
        %v3274 = vpop.f32.mrf.mxu0
        %v3275 = vadd.f32 %v3008, %v3274
        %3276 = vmatmul.bf16.gmra.mxu0 %v3093
        %v3277 = vpop.f32.mrf.mxu0
        %v3278 = vadd.f32 %v3008, %v3277
        %v3279 = vpop.f32.mrf.mxu0
        %v3280 = vadd.f32 %v3008, %v3279
        %3281 = vmatmul.bf16.gmra.mxu0 %v3096
        %v3282 = vpop.f32.mrf.mxu0
        %v3283 = vadd.f32 %v3008, %v3282
        %v3284 = vpop.f32.mrf.mxu0
        %v3285 = vadd.f32 %v3008, %v3284
        %3286 = vmatmul.bf16.gmra.mxu0 %v3099
        %v3287 = vpop.f32.mrf.mxu0
        %v3288 = vadd.f32 %v3008, %v3287
        %v3289 = vpop.f32.mrf.mxu0
        %v3290 = vadd.f32 %v3008, %v3289
        %3291 = vmatmul.bf16.gmra.mxu0 %v3102
        %v3292 = vpop.f32.mrf.mxu0
        %v3293 = vadd.f32 %v3008, %v3292
        %v3294 = vpop.f32.mrf.mxu0
        %v3295 = vadd.f32 %v3008, %v3294
        %3296 = vmatmul.bf16.gmra.mxu0 %v3105
        %v3297 = vpop.f32.mrf.mxu0
        %v3298 = vadd.f32 %v3008, %v3297
        %v3299 = vpop.f32.mrf.mxu0
        %v3300 = vadd.f32 %v3008, %v3299
        %3301 = vmatmul.bf16.gmra.mxu0 %v3108
        %v3302 = vpop.f32.mrf.mxu0
        %v3303 = vadd.f32 %v3008, %v3302
        %v3304 = vpop.f32.mrf.mxu0
        %v3305 = vadd.f32 %v3008, %v3304
        %3306 = vmatmul.bf16.gmra.mxu0 %v3111
        %v3307 = vpop.f32.mrf.mxu0
        %v3308 = vadd.f32 %v3008, %v3307
        %v3309 = vpop.f32.mrf.mxu0
        %v3310 = vadd.f32 %v3008, %v3309
        %3311 = vdwg.mxu0
        %3312 = vmatpush.bf16.msra.mxu0 %v3217
        %3313 = vmatpush.bf16.msra.mxu0 %v3216
        %3314 = vmatpush.bf16.msra.mxu0 %v3215
        %3315 = vmatpush.bf16.msra.mxu0 %v3214
        %3316 = vmatpush.bf16.msra.mxu0 %v3213
        %3317 = vmatpush.bf16.msra.mxu0 %v3212
        %3318 = vmatpush.bf16.msra.mxu0 %v3211
        %3319 = vmatpush.bf16.msra.mxu0 %v3210
        %3320 = vmatmul.bf16.gmra.mxu0 %v3091
        %v3321 = vpop.f32.mrf.mxu0
        %v3322 = vadd.f32 %v3273, %v3321
        %v3323 = vpop.f32.mrf.mxu0
        %v3324 = vadd.f32 %v3275, %v3323
        %3325 = vmatmul.bf16.gmra.mxu0 %v3094
        %v3326 = vpop.f32.mrf.mxu0
        %v3327 = vadd.f32 %v3278, %v3326
        %v3328 = vpop.f32.mrf.mxu0
        %v3329 = vadd.f32 %v3280, %v3328
        %3330 = vmatmul.bf16.gmra.mxu0 %v3097
        %v3331 = vpop.f32.mrf.mxu0
        %v3332 = vadd.f32 %v3283, %v3331
        %v3333 = vpop.f32.mrf.mxu0
        %v3334 = vadd.f32 %v3285, %v3333
        %3335 = vmatmul.bf16.gmra.mxu0 %v3100
        %v3336 = vpop.f32.mrf.mxu0
        %v3337 = vadd.f32 %v3288, %v3336
        %v3338 = vpop.f32.mrf.mxu0
        %v3339 = vadd.f32 %v3290, %v3338
        %3340 = vmatmul.bf16.gmra.mxu0 %v3103
        %v3341 = vpop.f32.mrf.mxu0
        %v3342 = vadd.f32 %v3293, %v3341
        %v3343 = vpop.f32.mrf.mxu0
        %v3344 = vadd.f32 %v3295, %v3343
        %3345 = vmatmul.bf16.gmra.mxu0 %v3106
        %v3346 = vpop.f32.mrf.mxu0
        %v3347 = vadd.f32 %v3298, %v3346
        %v3348 = vpop.f32.mrf.mxu0
        %v3349 = vadd.f32 %v3300, %v3348
        %3350 = vmatmul.bf16.gmra.mxu0 %v3109
        %v3351 = vpop.f32.mrf.mxu0
        %v3352 = vadd.f32 %v3303, %v3351
        %v3353 = vpop.f32.mrf.mxu0
        %v3354 = vadd.f32 %v3305, %v3353
        %3355 = vmatmul.bf16.gmra.mxu0 %v3112
        %v3356 = vpop.f32.mrf.mxu0
        %v3357 = vadd.f32 %v3308, %v3356
        %v3358 = vpop.f32.mrf.mxu0
        %v3359 = vadd.f32 %v3310, %v3358
        %3360 = vdwg.mxu0
        %3361 = vmatpush.bf16.msra.mxu0 0
        %3362 = vmatpush.bf16.msra.mxu0 0
        %3363 = vmatpush.bf16.msra.mxu0 0
        %3364 = vmatpush.bf16.msra.mxu0 0
        %3365 = vmatpush.bf16.msra.mxu0 0
        %3366 = vmatpush.bf16.msra.mxu0 0
        %3367 = vmatpush.bf16.msra.mxu0 %v3219
        %3368 = vmatpush.bf16.msra.mxu0 %v3218
        %3369 = vmatmul.bf16.gmra.mxu0 %v3240
        %v3370 = vpop.f32.mrf.mxu0
        %v3371 = vadd.f32 %v3322, %v3370
        %v3372 = vpop.f32.mrf.mxu0
        %v3373 = vadd.f32 %v3324, %v3372
        %3374 = vmatmul.bf16.gmra.mxu0 %v3243
        %v3375 = vpop.f32.mrf.mxu0
        %v3376 = vadd.f32 %v3327, %v3375
        %v3377 = vpop.f32.mrf.mxu0
        %v3378 = vadd.f32 %v3329, %v3377
        %3379 = vmatmul.bf16.gmra.mxu0 %v3246
        %v3380 = vpop.f32.mrf.mxu0
        %v3381 = vadd.f32 %v3332, %v3380
        %v3382 = vpop.f32.mrf.mxu0
        %v3383 = vadd.f32 %v3334, %v3382
        %3384 = vmatmul.bf16.gmra.mxu0 %v3249
        %v3385 = vpop.f32.mrf.mxu0
        %v3386 = vadd.f32 %v3337, %v3385
        %v3387 = vpop.f32.mrf.mxu0
        %v3388 = vadd.f32 %v3339, %v3387
        %3389 = vmatmul.bf16.gmra.mxu0 %v3252
        %v3390 = vpop.f32.mrf.mxu0
        %v3391 = vadd.f32 %v3342, %v3390
        %v3392 = vpop.f32.mrf.mxu0
        %v3393 = vadd.f32 %v3344, %v3392
        %3394 = vmatmul.bf16.gmra.mxu0 %v3255
        %v3395 = vpop.f32.mrf.mxu0
        %v3396 = vadd.f32 %v3347, %v3395
        %v3397 = vpop.f32.mrf.mxu0
        %v3398 = vadd.f32 %v3349, %v3397
        %3399 = vmatmul.bf16.gmra.mxu0 %v3258
        %v3400 = vpop.f32.mrf.mxu0
        %v3401 = vadd.f32 %v3352, %v3400
        %v3402 = vpop.f32.mrf.mxu0
        %v3403 = vadd.f32 %v3354, %v3402
        %3404 = vmatmul.bf16.gmra.mxu0 %v3261
        %v3405 = vpop.f32.mrf.mxu0
        %v3406 = vadd.f32 %v3357, %v3405
        %v3407 = vpop.f32.mrf.mxu0
        %v3408 = vadd.f32 %v3359, %v3407
        %3409 = vdwg.mxu0
        %v3410 = vmax.f32 %v3371, 0.0
        %v3411 = vmax.f32 %v3373, 0.0
        %v3412 = vmax.f32 %v3376, 0.0
        %v3413 = vmax.f32 %v3378, 0.0
        %v3414 = vmax.f32 %v3381, 0.0
        %v3415 = vmax.f32 %v3383, 0.0
        %v3416 = vmax.f32 %v3386, 0.0
        %v3417 = vmax.f32 %v3388, 0.0
        %v3418 = vmax.f32 %v3391, 0.0
        %v3419 = vmax.f32 %v3393, 0.0
        %v3420 = vmax.f32 %v3396, 0.0
        %v3421 = vmax.f32 %v3398, 0.0
        %v3422 = vmax.f32 %v3401, 0.0
        %v3423 = vmax.f32 %v3403, 0.0
        %v3424 = vmax.f32 %v3406, 0.0
        %v3425 = vmax.f32 %v3408, 0.0
        %v3426 = vsel %vm3238, %v3410, 0.0
        %v3427 = vsel %vm3238, %v3411, 0.0
        %v3428 = vadd.f32 %v3426, %v3427
        %v3429 = vsel %vm3238, %v3412, 0.0
        %v3430 = vadd.f32 %v3428, %v3429
        %v3431 = vsel %vm3238, %v3413, 0.0
        %v3432 = vadd.f32 %v3430, %v3431
        %v3433 = vsel %vm3238, %v3414, 0.0
        %v3434 = vadd.f32 %v3432, %v3433
        %v3435 = vsel %vm3238, %v3415, 0.0
        %v3436 = vadd.f32 %v3434, %v3435
        %v3437 = vsel %vm3238, %v3416, 0.0
        %v3438 = vadd.f32 %v3436, %v3437
        %v3439 = vsel %vm3238, %v3417, 0.0
        %v3440 = vadd.f32 %v3438, %v3439
        %v3441 = vrot.slane %v3440, 4
        %v3442 = vadd.f32 %v3440, %v3441
        %v3443 = vrot.slane %v3442, 2
        %v3444 = vadd.f32 %v3442, %v3443
        %v3445 = vrot.slane %v3444, 1
        %v3446 = vadd.f32 %v3444, %v3445
        %v3447 = vsel %vm3238, %v3418, 0.0
        %v3448 = vsel %vm3238, %v3419, 0.0
        %v3449 = vadd.f32 %v3447, %v3448
        %v3450 = vsel %vm3238, %v3420, 0.0
        %v3451 = vadd.f32 %v3449, %v3450
        %v3452 = vsel %vm3238, %v3421, 0.0
        %v3453 = vadd.f32 %v3451, %v3452
        %v3454 = vsel %vm3238, %v3422, 0.0
        %v3455 = vadd.f32 %v3453, %v3454
        %v3456 = vsel %vm3238, %v3423, 0.0
        %v3457 = vadd.f32 %v3455, %v3456
        %v3458 = vsel %vm3238, %v3424, 0.0
        %v3459 = vadd.f32 %v3457, %v3458
        %v3460 = vsel %vm3238, %v3425, 0.0
        %v3461 = vadd.f32 %v3459, %v3460
        %v3462 = vrot.slane %v3461, 4
        %v3463 = vadd.f32 %v3461, %v3462
        %v3464 = vrot.slane %v3463, 2
        %v3465 = vadd.f32 %v3463, %v3464
        %v3466 = vrot.slane %v3465, 1
        %v3467 = vadd.f32 %v3465, %v3466
        %v3468 = vrcp.pop 64.0
        %v3469 = vmul.f32 64.0, %v3468
        %v3470 = vsub.f32 1.0, %v3469
        %v3471 = vmul.f32 %v3468, %v3470
        %v3472 = vadd.f32 %v3468, %v3471
        %vm3473 = vweird.f32 %v3468
        %v3474 = vsel %vm3473, %v3468, %v3472
        %v3475 = vmul.f32 %v3446, %v3474
        %v3476 = vmul.f32 %v3467, %v3474
        %vm3479 = vcmask 1041409
        %v3480 = vsel %vm3479, %v3476, %v3475
        %vm3482 = vcmask 254976
        %3483 = vst.msk [vmem:[%s467] sm:$0x3] %vm3482, %v3480
        %vm3484 = vcmask 1041664
        %3485 = vst.msk [vmem:[%s467] sm:$0x3] %vm3484, 0.0
        %v3486 = vld [vmem:[%s492] sm:$0xff]
        %v3487 = vld [vmem:[%s492 + $0x8] sm:$0xff]
        %v3488 = vld [vmem:[%s492 + $0x10] sm:$0xff]
        %v3489 = vld [vmem:[%s492 + $0x18] sm:$0xff]
        %v3490 = vsel %vm3238, %v3480, 0
        %3492 = vmatpush.msra.mxu0 0.0
        %3493 = vmatpush.msra.mxu0 0.0
        %3494 = vmatpush.msra.mxu0 0.0
        %3495 = vmatpush.msra.mxu0 0.0
        %3496 = vmatpush.msra.mxu0 0.0
        %3497 = vmatpush.msra.mxu0 0.0
        %3498 = vmatpush.msra.mxu0 0.0
        %3499 = vmatpush.msra.mxu0 0.0
        %3500 = vmatpush.msra.mxu0 0.0
        %3501 = vmatpush.msra.mxu0 0.0
        %3502 = vmatpush.msra.mxu0 0.0
        %3503 = vmatpush.msra.mxu0 0.0
        %3504 = vmatpush.msra.mxu0 %v3489
        %3505 = vmatpush.msra.mxu0 %v3488
        %3506 = vmatpush.msra.mxu0 %v3487
        %3507 = vmatpush.msra.mxu0 %v3486
        %3508 = vmatmul.f32.gmra.mxu0 %v3490
        %v3509 = vpop.f32.mrf.mxu0
        %v3510 = vadd.f32 0.0, %v3509
        %3511 = vdwg.mxu0
        %p3512 = scmp.eq.s32.totalorder %s29, 0
        // Predicated region
        $region65: #{tpu_custom_call.1} parent=59 // pred_check
          %p3513 = pneg %p3512
        $region66: #{tpu_custom_call.1} parent=59 // pred_check_branch
          %3515 = sbr.rel (%p3513) target = $region68
        $region67: #{tpu_custom_call.1} parent=59 // pred_region
          %v3516 = vld [vmem:[%s7] sm:$0x1]
          %v3518 = vperm.slane %v3516, 0
          %v3520 = vadd.f32 %v3510, %v3518
          %3521 = vst [vmem:[#allocation7] sm:$0x3] %v3520
        $region68: #{tpu_custom_call.1} parent=59 // pred_fallthru
          _
        %p3522 = scmp.ne.s32.totalorder %s29, 0
        // Predicated region
        $region69: #{tpu_custom_call.1} parent=59 // pred_check
          %p3523 = pneg %p3522
        $region70: #{tpu_custom_call.1} parent=59 // pred_check_branch
          %3525 = sbr.rel (%p3523) target = $region72
        $region71: #{tpu_custom_call.1} parent=59 // pred_region
          %v3526 = vld [vmem:[#allocation7] sm:$0x3]
          %v3527 = vadd.f32 %v3526, %v3510
          %3528 = vst [vmem:[#allocation7] sm:$0x3] %v3527
        $region72: #{tpu_custom_call.1} parent=59 // pred_fallthru
          _
        %v3529 = vld [vmem:[%s8] sm:$0xff]
        %v3530 = vld [vmem:[%s8 + $0x8] sm:$0xff]
        %v3531 = vld [vmem:[%s8 + $0x10] sm:$0xff]
        %v3532 = vld [vmem:[%s8 + $0x18] sm:$0xff]
        %v3533 = vld [vmem:[%s9] sm:$0x1]
        %v3535 = vperm.slane %v3533, 0
        %3537 = vmatpush.msra.mxu0 0.0
        %3538 = vmatpush.msra.mxu0 0.0
        %3539 = vmatpush.msra.mxu0 0.0
        %3540 = vmatpush.msra.mxu0 0.0
        %3541 = vmatpush.msra.mxu0 0.0
        %3542 = vmatpush.msra.mxu0 0.0
        %3543 = vmatpush.msra.mxu0 0.0
        %3544 = vmatpush.msra.mxu0 0.0
        %3545 = vmatpush.msra.mxu0 0.0
        %3546 = vmatpush.msra.mxu0 0.0
        %3547 = vmatpush.msra.mxu0 0.0
        %3548 = vmatpush.msra.mxu0 0.0
        %3549 = vmatpush.msra.mxu0 %v3532
        %3550 = vmatpush.msra.mxu0 %v3531
        %3551 = vmatpush.msra.mxu0 %v3530
        %3552 = vmatpush.msra.mxu0 %v3529
        %3553 = vmatmul.f32.gmra.mxu0 %v3490
        %v3554 = vpop.f32.mrf.mxu0
        %v3555 = vadd.f32 %v3535, %v3554
        %3556 = vdwg.mxu0
        %3557 = vst [vmem:[#allocation9] sm:$0x3] %v3555
        %s3558 = sand.u32 %s272, 1
        %s3559 = scalar_lea.sflag [#allocation5], %s3558
        %s3560 = sand.u32 %s272, 1
        %s3561 = smul.addr %s3560, 2
        %s3562 = scalar_lea.vmem [#allocation6], %s3561
        // Predicated region
        $region73: #{tpu_custom_call.1} parent=59 // pred_check
          %p3563 = pneg %p282
        $region74: #{tpu_custom_call.1} parent=59 // pred_check_branch
          %3565 = sbr.rel (%p3563) target = $region76
        $region75: #{tpu_custom_call.1} parent=59 // pred_region
          %3567 = vsyncadd %s3559, 0
          %s3568 = smul.addr %s29, 2
          %s3569 = scalar_lea.hbm %s10, %s3568
          %s3571 = sshll.u32 %s3562, 4
          %s3572 = int_to_ptr.vmem [resolvable:$true] %s3571
          %s3573 = sshll.u32 %s3569, 4
          %s3574 = int_to_ptr.hbm [resolvable:$true] %s3573
          %3576 = dma.vmem_to_hbm [thread:$0]  %s3572, 32, %s3574, %s3559
        $region76: #{tpu_custom_call.1} parent=59 // pred_fallthru
          _
        // Predicated region
        $region77: #{tpu_custom_call.1} parent=59 // pred_check
          %p3577 = pneg %p303
        $region78: #{tpu_custom_call.1} parent=59 // pred_check_branch
          %3579 = sbr.rel (%p3577) target = $region80
        $region79: #{tpu_custom_call.1} parent=59 // pred_region
          %3581 = vsyncadd [#allocation8], 0
          %s3583 = sshll.u32 [#allocation7], 4
          %s3584 = int_to_ptr.vmem [resolvable:$true] %s3583
          %s3585 = sshll.u32 %s11, 4
          %s3586 = int_to_ptr.hbm [resolvable:$true] %s3585
          %3588 = dma.vmem_to_hbm [thread:$0]  %s3584, 32, %s3586, [#allocation8]
        $region80: #{tpu_custom_call.1} parent=59 // pred_fallthru
          _
        // Predicated region
        $region81: #{tpu_custom_call.1} parent=59 // pred_check
          %p3589 = pneg %p324
        $region82: #{tpu_custom_call.1} parent=59 // pred_check_branch
          %3591 = sbr.rel (%p3589) target = $region84
        $region83: #{tpu_custom_call.1} parent=59 // pred_region
          %3593 = vsyncadd [#allocation8], 0
          %s3595 = sshll.u32 [#allocation9], 4
          %s3596 = int_to_ptr.vmem [resolvable:$true] %s3595
          %s3597 = sshll.u32 %s12, 4
          %s3598 = int_to_ptr.hbm [resolvable:$true] %s3597
          %3600 = dma.vmem_to_hbm [thread:$0]  %s3596, 32, %s3598, [#allocation8]
        $region84: #{tpu_custom_call.1} parent=59 // pred_fallthru
          _
        // Predicated region
        $region85: #{tpu_custom_call.1} parent=59 // pred_check
          %p3601 = pneg %p303
        $region86: #{tpu_custom_call.1} parent=59 // pred_check_branch
          %3603 = sbr.rel (%p3601) target = $region88
        $region87: #{tpu_custom_call.1} parent=59 // pred_region
          %3605 = dma.done [#allocation8], 32
        $region88: #{tpu_custom_call.1} parent=59 // pred_fallthru
          _
        // Predicated region
        $region89: #{tpu_custom_call.1} parent=59 // pred_check
          %p3606 = pneg %p324
        $region90: #{tpu_custom_call.1} parent=59 // pred_check_branch
          %3608 = sbr.rel (%p3606) target = $region92
        $region91: #{tpu_custom_call.1} parent=59 // pred_region
          %3610 = dma.done [#allocation8], 32
        $region92: #{tpu_custom_call.1} parent=59 // pred_fallthru
          _
      $region60: #{tpu_custom_call.1} parent=5 // pred_fallthru
        _
      %p3611 = scmp.le.s32.totalorder 2, %s24
      // Predicated region
      $region93: #{tpu_custom_call.1} parent=5 // pred_check
        %p3612 = pneg %p3611
      $region94: #{tpu_custom_call.1} parent=5 // pred_check_branch
        %3614 = sbr.rel (%p3612) target = $region96
      $region95: #{tpu_custom_call.1} parent=5 // pred_region
        %s3615 = ssub.s32 %s24, 2
        // Predicated region
        $region97: #{tpu_custom_call.1} parent=95 // pred_check
          %p3616 = pneg %p288
        $region98: #{tpu_custom_call.1} parent=95 // pred_check_branch
          %3618 = sbr.rel (%p3616) target = $region100
        $region99: #{tpu_custom_call.1} parent=95 // pred_region
          %s3619 = sand.u32 %s273, 1
          %s3620 = scalar_lea.sflag [#allocation5], %s3619
          %s3621 = sand.u32 %s273, 1
          %s3622 = smul.addr %s3621, 2
          %s3623 = scalar_lea.vmem [#allocation6], %s3622
          %3625 = dma.done %s3620, 32
        $region100: #{tpu_custom_call.1} parent=95 // pred_fallthru
          _
      $region96: #{tpu_custom_call.1} parent=5 // pred_fallthru
        _
    $region6: #{tpu_custom_call.1} parent=1 // loop_footer
      %s28 = sadd.s32 1, %s24
    $region7: #{tpu_custom_call.1} parent=1 // loop_footer_branch
      %23 = sbr.rel target = $region3
    $region8: #{tpu_custom_call.1} parent=1 // loop_exit
      _
    %3626 = vsyncpa [#allocation4], 1
    %s3627 = scalar_lea.sflag [#allocation4], 1
    %3628 = vsyncpa %s3627, 1
    %3629 = vsyncpa [#allocation5], 1
    %s3630 = scalar_lea.sflag [#allocation5], 1
    %3631 = vsyncpa %s3630, 1
    %3632 = vsyncpa [#allocation8], 1

</llo_original>
